<compile_context>
chip_gen: v7x
topology: tpu7x:2x2x1
jax: 0.10.0
libtpu: 0.0.40
codegen_flags: <defaults>
</compile_context>

<pallas_src>
import math
import jax
import jax.numpy as jnp
from jax import lax
from jax.experimental import pallas as pl
from jax.experimental.pallas import tpu as pltpu

# ----- model hyper-parameters (small, consistent with the module) -----
OBS_DIM = 16
N_BLOCK = 2
N_EMBD = 32
N_HEAD = 4
N_AGENT = 8          # sequence length L
HEAD_DIM = N_EMBD // N_HEAD
LN_EPS = 1e-5
BATCH = 2

assert N_EMBD % N_HEAD == 0

# --- layout of the packed (NVEC, N_EMBD) vector slab ---
IDX_B_OBS = 0
IDX_LN_G = 1
IDX_LN_B = 2
BLK_BASE = 3
BLK_STRIDE = 7                      # per block: bp, bm1, bm2, ln1_g, ln1_b, ln2_g, ln2_b
TAIL = BLK_BASE + BLK_STRIDE * N_BLOCK  # then: bh1, lnh_g, lnh_b, wh2(row), bh2(row)
NVEC = TAIL + 5


# ------------------------- math helpers (pure jnp, used in-kernel) -------------------------
def _layer_norm(x, g, b):
    mu = jnp.mean(x, axis=-1, keepdims=True)
    var = jnp.mean(jnp.square(x - mu), axis=-1, keepdims=True)
    return (x - mu) * lax.rsqrt(var + LN_EPS) * g + b


def _gelu(x):
    # exact (erf-based) GELU, matching torch.nn.GELU() default
    return 0.5 * x * (1.0 + lax.erf(x * (1.0 / math.sqrt(2.0))))


# ------------------------------------ Pallas kernel ------------------------------------
def encoder_kernel(obs_ref, obs_ln_ref, w_obs_ref, wqkv_ref, bqkv_ref,
                   wsq_ref, vecs_ref, v_out_ref, rep_out_ref):
    TB, L, O = obs_ref.shape
    D = N_EMBD
    rows = TB * L

    def vp(i):                       # (1, D) parameter row (broadcasts against (rows, D))
        return vecs_ref[i:i + 1]

    # merged (TB*L, feat) rows — leading-dim merge is layout-free
    x = obs_ref[...].reshape(rows, O)

    # ---- obs encoder: LayerNorm(O) -> Linear(O, D) -> GELU ----
    h = _layer_norm(x, obs_ln_ref[0:1], obs_ln_ref[1:2])
    h = _gelu(jnp.dot(h, w_obs_ref[...], preferred_element_type=jnp.float32)
              + vp(IDX_B_OBS))

    # ---- encoder LayerNorm(D) ----
    h = _layer_norm(h, vp(IDX_LN_G), vp(IDX_LN_B))

    # ---- EncodeBlocks (unrolled) ----
    for blk in range(N_BLOCK):
        base = BLK_BASE + blk * BLK_STRIDE

        # fused QKV projection: (rows, D) @ (D, 3D) + bias, single MXU push.
        # The 1/sqrt(head_dim) scale is already folded into the query columns.
        qkv = (jnp.dot(h, wqkv_ref[blk], preferred_element_type=jnp.float32)
               + bqkv_ref[blk:blk + 1])

        # gather per-head slices into one (N_HEAD*TB, L, HEAD_DIM) batch
        def head_stack(col0):
            return jnp.concatenate(
                [qkv[:, col0 + hh * HEAD_DIM: col0 + (hh + 1) * HEAD_DIM]
                 .reshape(TB, L, HEAD_DIM) for hh in range(N_HEAD)], axis=0)

        k_s = head_stack(0 * D)
        q_s = head_stack(1 * D)
        v_s = head_stack(2 * D)

        # all heads & batch rows in one batched contraction: (NH*TB, Lq, Lk)
        att = jnp.einsum("bqd,bkd->bqk", q_s, k_s,
                         preferred_element_type=jnp.float32)
        # softmax over the QUERY axis (reproduces the PyTorch F.softmax(dim=2) quirk)
        att = att - jnp.max(att, axis=1, keepdims=True)
        e = jnp.exp(att)
        att = e * pl.reciprocal(jnp.sum(e, axis=1, keepdims=True), approx=True)
        y_s = jnp.einsum("bqk,bkd->bqd", att, v_s,
                         preferred_element_type=jnp.float32)

        # fold the head concat into the output projection (per-head accumulate)
        wp = wsq_ref[3 * blk + 0]                      # (D, D)
        a = jnp.zeros((rows, D), jnp.float32)
        for hh in range(N_HEAD):
            y_h = y_s[hh * TB:(hh + 1) * TB].reshape(rows, HEAD_DIM)
            a = a + jnp.dot(y_h, wp[hh * HEAD_DIM:(hh + 1) * HEAD_DIM, :],
                            preferred_element_type=jnp.float32)
        a = a + vp(base + 0)                           # + bp

        h = _layer_norm(h + a, vp(base + 3), vp(base + 4))          # ln1
        m = _gelu(jnp.dot(h, wsq_ref[3 * blk + 1],
                          preferred_element_type=jnp.float32) + vp(base + 1))
        m = jnp.dot(m, wsq_ref[3 * blk + 2],
                    preferred_element_type=jnp.float32) + vp(base + 2)
        h = _layer_norm(h + m, vp(base + 5), vp(base + 6))          # ln2

    rep_out_ref[...] = h.reshape(TB, L, D)

    # ---- head: Linear(D,D) -> GELU -> LayerNorm(D) -> Linear(D,1) ----
    hv = _gelu(jnp.dot(h, wsq_ref[3 * N_BLOCK],
                       preferred_element_type=jnp.float32) + vp(TAIL + 0))
    hv = _layer_norm(hv, vp(TAIL + 1), vp(TAIL + 2))
    # final Linear(D, 1) done as a lane reduction so the store is (TB, L) lane-dense
    wh2_row = vp(TAIL + 3)                             # (1, D)
    bh2 = vecs_ref[TAIL + 4:TAIL + 5, 0:1]             # (1, 1)
    v_mat = jnp.sum(hv.reshape(TB, L, D) * wh2_row, axis=-1) + bh2
    v_out_ref[0] = v_mat


# ------------------------------------ parameter packing ------------------------------------
def pack_params(p):
    D = N_EMBD
    scale = 1.0 / math.sqrt(HEAD_DIM)
    rows = [p["b_obs"], p["ln_g"], p["ln_b"]]
    for blk in range(N_BLOCK):
        rows += [p["bp"][blk], p["bm1"][blk], p["bm2"][blk],
                 p["ln1_g"][blk], p["ln1_b"][blk], p["ln2_g"][blk], p["ln2_b"][blk]]
    rows += [p["bh1"], p["lnh_g"], p["lnh_b"],
             p["wh2"][:, 0], jnp.broadcast_to(p["bh2"], (D,))]
    vecs = jnp.stack(rows, axis=0).astype(jnp.float32)
    assert vecs.shape == (NVEC, D)

    obs_ln = jnp.stack([p["obs_ln_g"], p["obs_ln_b"]], axis=0)          # (2, O)
    # fold the 1/sqrt(head_dim) attention scale into the query projection
    wqkv = jnp.concatenate([p["wk"], p["wq"] * scale, p["wv"]], axis=-1)  # (NB, D, 3D)
    bqkv = jnp.concatenate([p["bk"], p["bq"] * scale, p["bv"]], axis=-1)  # (NB, 3D)
    wsq = jnp.concatenate(
        [jnp.stack([p["wp"][blk], p["wm1"][blk], p["wm2"][blk]], axis=0)
         for blk in range(N_BLOCK)] + [p["wh1"][None]], axis=0)         # (3*NB+1, D, D)
    return obs_ln, p["w_obs"], wqkv, bqkv, wsq, vecs


def _choose_batch_tile(B, L):
    # target ~512 rows per tile (sublane-dense matmuls).  Only split into >=2
    # grid steps (v7x megacore) when each tile still has enough rows to
    # amortize the ~0.35us per-step overhead — tiny batches stay in one step.
    target_rows = 512
    best = 1
    for cand in range(1, B + 1):
        if B % cand == 0 and cand * L <= target_rows:
            best = cand
    if best == B and B % 2 == 0 and (B // 2) * L >= 128:
        best = B // 2
    return best


# ------------------------------------ wrapper ------------------------------------
def encoder_forward(obs, params, batch_tile=None):
    B, L, O = obs.shape
    assert L == N_AGENT and O == OBS_DIM
    obs_ln, w_obs, wqkv, bqkv, wsq, vecs = pack_params(params)

    TB = batch_tile if batch_tile is not None else _choose_batch_tile(B, L)
    assert B % TB == 0
    ntiles = B // TB

    def full_spec(a):
        n = a.ndim
        return pl.BlockSpec(a.shape, lambda b: (0,) * n)

    in_specs = [pl.BlockSpec((TB, L, O), lambda b: (b, 0, 0)),
                full_spec(obs_ln), full_spec(w_obs), full_spec(wqkv),
                full_spec(bqkv), full_spec(wsq), full_spec(vecs)]
    out_specs = (pl.BlockSpec((1, TB, L), lambda b: (b, 0, 0)),
                 pl.BlockSpec((TB, L, N_EMBD), lambda b: (b, 0, 0)))
    out_shape = (jax.ShapeDtypeStruct((ntiles, TB, L), jnp.float32),
                 jax.ShapeDtypeStruct((B, L, N_EMBD), jnp.float32))

    v_tiles, rep = pl.pallas_call(
        encoder_kernel,
        out_shape=out_shape,
        grid=(ntiles,),
        in_specs=in_specs,
        out_specs=out_specs,
        compiler_params=pltpu.CompilerParams(
            dimension_semantics=("parallel",)),
    )(obs, obs_ln, w_obs, wqkv, bqkv, wsq, vecs)

    v_loc = v_tiles.reshape(B, L)[..., None]   # restore the module's (B, L, 1) shape
    return v_loc, rep


# ---------------------------- pure-JAX reference (for verification) ----------------------------
def _attention_ref(x, p, blk):
    k = x @ p["wk"][blk] + p["bk"][blk]
    q = x @ p["wq"][blk] + p["bq"][blk]
    v = x @ p["wv"][blk] + p["bv"][blk]
    scale = 1.0 / math.sqrt(HEAD_DIM)
    outs = []
    for h in range(N_HEAD):
        sl = slice(h * HEAD_DIM, (h + 1) * HEAD_DIM)
        att = (q[:, sl] @ k[:, sl].T) * scale
        att = att - jnp.max(att, axis=0, keepdims=True)   # softmax over QUERY axis (dim=2)
        e = jnp.exp(att)
        att = e / jnp.sum(e, axis=0, keepdims=True)
        outs.append(att @ v[:, sl])
    y = jnp.concatenate(outs, axis=-1)
    return y @ p["wp"][blk] + p["bp"][blk]


def _forward_single(x, p):
    h = _layer_norm(x, p["obs_ln_g"], p["obs_ln_b"])
    h = _gelu(h @ p["w_obs"] + p["b_obs"])
    h = _layer_norm(h, p["ln_g"], p["ln_b"])
    for blk in range(N_BLOCK):
        a = _attention_ref(h, p, blk)
        h = _layer_norm(h + a, p["ln1_g"][blk], p["ln1_b"][blk])
        m = _gelu(h @ p["wm1"][blk] + p["bm1"][blk])
        m = m @ p["wm2"][blk] + p["bm2"][blk]
        h = _layer_norm(h + m, p["ln2_g"][blk], p["ln2_b"][blk])
    rep = h
    v = _gelu(h @ p["wh1"] + p["bh1"])
    v = _layer_norm(v, p["lnh_g"], p["lnh_b"])
    v = v @ p["wh2"] + p["bh2"]
    return v, rep


def encoder_ref(obs, params):
    return jax.vmap(lambda x: _forward_single(x, params))(obs)


# ---------------------------- deterministic synthetic parameters ----------------------------
def init_params(key):
    keys = iter(jax.random.split(key, 64))

    def w(shape, scale=0.1):
        return jax.random.normal(next(keys), shape, jnp.float32) * scale

    D, O, NB = N_EMBD, OBS_DIM, N_BLOCK
    return {
        # obs_encoder: LayerNorm(obs_dim) + Linear(obs_dim, n_embd)
        "obs_ln_g": 1.0 + w((O,), 0.05), "obs_ln_b": w((O,), 0.05),
        "w_obs": w((O, D)), "b_obs": w((D,), 0.05),
        # encoder LayerNorm(n_embd)
        "ln_g": 1.0 + w((D,), 0.05), "ln_b": w((D,), 0.05),
        # per-block LayerNorms
        "ln1_g": 1.0 + w((NB, D), 0.05), "ln1_b": w((NB, D), 0.05),
        "ln2_g": 1.0 + w((NB, D), 0.05), "ln2_b": w((NB, D), 0.05),
        # per-block attention projections
        "wk": w((NB, D, D)), "bk": w((NB, D), 0.05),
        "wq": w((NB, D, D)), "bq": w((NB, D), 0.05),
        "wv": w((NB, D, D)), "bv": w((NB, D), 0.05),
        "wp": w((NB, D, D)), "bp": w((NB, D), 0.05),
        # per-block MLP: Linear(D, D) -> GELU -> Linear(D, D)
        "wm1": w((NB, D, D)), "bm1": w((NB, D), 0.05),
        "wm2": w((NB, D, D)), "bm2": w((NB, D), 0.05),
        # head: Linear(D, D) -> GELU -> LayerNorm(D) -> Linear(D, 1)
        "wh1": w((D, D)), "bh1": w((D,), 0.05),
        "lnh_g": 1.0 + w((D,), 0.05), "lnh_b": w((D,), 0.05),
        "wh2": w((D, 1)), "bh2": w((1,), 0.05),
    }


if __name__ == "__main__":
    key = jax.random.PRNGKey(0)
    kp, kx = jax.random.split(key)
    params = init_params(kp)
    obs = jax.random.normal(kx, (BATCH, N_AGENT, OBS_DIM), jnp.float32)

    v_loc, rep = encoder_forward(obs, params)
    jax.block_until_ready((v_loc, rep))

    v_ref, rep_ref = encoder_ref(obs, params)
    assert v_loc.shape == (BATCH, N_AGENT, 1) and rep.shape == (BATCH, N_AGENT, N_EMBD)
    assert jnp.allclose(v_loc, v_ref, atol=1e-2, rtol=1e-2)
    assert jnp.allclose(rep, rep_ref, atol=1e-2, rtol=1e-2)

    print("KERNEL_OK")
</pallas_src>

<mosaic_0001>
module attributes {stable_mosaic.version = 11 : i64} {
  func.func @encoder_kernel(%arg0: i32, %arg1: memref<2x8x16xf32, #tpu.memory_space<vmem>>, %arg2: memref<2x16xf32, #tpu.memory_space<vmem>>, %arg3: memref<16x32xf32, #tpu.memory_space<vmem>>, %arg4: memref<2x32x96xf32, #tpu.memory_space<vmem>>, %arg5: memref<2x96xf32, #tpu.memory_space<vmem>>, %arg6: memref<7x32x32xf32, #tpu.memory_space<vmem>>, %arg7: memref<22x32xf32, #tpu.memory_space<vmem>>, %arg8: memref<1x2x8xf32, #tpu.memory_space<vmem>>, %arg9: memref<2x8x32xf32, #tpu.memory_space<vmem>>) attributes {dimension_semantics = [#tpu.dimension_semantics<parallel>], iteration_bounds = array<i64: 1>, scalar_prefetch = 0 : i64, scratch_operands = 0 : i64, tpu.core_type = #tpu.core_type<tc>, window_params = [{transform_indices = @transform_0, window_bounds = array<i64: 2, 8, 16>}, {pipeline_mode = #tpu.pipeline_mode<synchronous>, transform_indices = @transform_1, window_bounds = array<i64: 2, 16>}, {pipeline_mode = #tpu.pipeline_mode<synchronous>, transform_indices = @transform_2, window_bounds = array<i64: 16, 32>}, {pipeline_mode = #tpu.pipeline_mode<synchronous>, transform_indices = @transform_3, window_bounds = array<i64: 2, 32, 96>}, {pipeline_mode = #tpu.pipeline_mode<synchronous>, transform_indices = @transform_4, window_bounds = array<i64: 2, 96>}, {pipeline_mode = #tpu.pipeline_mode<synchronous>, transform_indices = @transform_5, window_bounds = array<i64: 7, 32, 32>}, {pipeline_mode = #tpu.pipeline_mode<synchronous>, transform_indices = @transform_6, window_bounds = array<i64: 22, 32>}, {transform_indices = @transform_7, window_bounds = array<i64: 1, 2, 8>}, {transform_indices = @transform_8, window_bounds = array<i64: 2, 8, 32>}]} {
    %c0 = arith.constant 0 : index
    %c0_0 = arith.constant 0 : index
    %c0_1 = arith.constant 0 : index
    %0 = vector.load %arg1[%c0, %c0_0, %c0_1] : memref<2x8x16xf32, #tpu.memory_space<vmem>>, vector<2x8x16xf32>
    %1 = vector.shape_cast %0 : vector<2x8x16xf32> to vector<16x16xf32>
    %c0_2 = arith.constant 0 : index
    %c0_3 = arith.constant 0 : index
    %2 = vector.load %arg2[%c0_2, %c0_3] : memref<2x16xf32, #tpu.memory_space<vmem>>, vector<1x16xf32>
    %c1 = arith.constant 1 : index
    %c0_4 = arith.constant 0 : index
    %3 = vector.load %arg2[%c1, %c0_4] : memref<2x16xf32, #tpu.memory_space<vmem>>, vector<1x16xf32>
    %cst = arith.constant dense<0.000000e+00> : vector<16xf32>
    %4 = vector.multi_reduction <add>, %1, %cst [1] : vector<16x16xf32> to vector<16xf32>
    %5 = vector.shape_cast %4 : vector<16xf32> to vector<16x1xf32>
    %cst_5 = arith.constant 1.600000e+01 : f32
    %6 = vector.broadcast %cst_5 : f32 to vector<16x1xf32>
    %7 = arith.divf %5, %6 : vector<16x1xf32>
    %8 = vector.broadcast %7 : vector<16x1xf32> to vector<16x16xf32>
    %9 = arith.subf %1, %8 : vector<16x16xf32>
    %10 = arith.mulf %9, %9 : vector<16x16xf32>
    %cst_6 = arith.constant dense<0.000000e+00> : vector<16xf32>
    %11 = vector.multi_reduction <add>, %10, %cst_6 [1] : vector<16x16xf32> to vector<16xf32>
    %12 = vector.shape_cast %11 : vector<16xf32> to vector<16x1xf32>
    %cst_7 = arith.constant 1.600000e+01 : f32
    %13 = vector.broadcast %cst_7 : f32 to vector<16x1xf32>
    %14 = arith.divf %12, %13 : vector<16x1xf32>
    %15 = vector.broadcast %7 : vector<16x1xf32> to vector<16x16xf32>
    %16 = arith.subf %1, %15 : vector<16x16xf32>
    %cst_8 = arith.constant 9.99999974E-6 : f32
    %17 = vector.broadcast %cst_8 : f32 to vector<16x1xf32>
    %18 = arith.addf %14, %17 : vector<16x1xf32>
    %19 = math.rsqrt %18 : vector<16x1xf32>
    %20 = vector.broadcast %19 : vector<16x1xf32> to vector<16x16xf32>
    %21 = arith.mulf %16, %20 : vector<16x16xf32>
    %22 = vector.broadcast %2 : vector<1x16xf32> to vector<16x16xf32>
    %23 = arith.mulf %21, %22 : vector<16x16xf32>
    %24 = vector.broadcast %3 : vector<1x16xf32> to vector<16x16xf32>
    %25 = arith.addf %23, %24 : vector<16x16xf32>
    %c0_9 = arith.constant 0 : index
    %c0_10 = arith.constant 0 : index
    %26 = vector.load %arg3[%c0_9, %c0_10] : memref<16x32xf32, #tpu.memory_space<vmem>>, vector<16x32xf32>
    %cst_11 = arith.constant dense<0.000000e+00> : vector<16x32xf32>
    %27 = tpu.matmul %25, %26, %cst_11 {dimension_numbers = #tpu.dot_dimension_numbers<[1], [0], [0], [1], [0, 0, 1, 1], [], []>} : vector<16x16xf32>, vector<16x32xf32>, vector<16x32xf32> -> vector<16x32xf32>
    %c0_12 = arith.constant 0 : index
    %c0_13 = arith.constant 0 : index
    %28 = vector.load %arg7[%c0_12, %c0_13] : memref<22x32xf32, #tpu.memory_space<vmem>>, vector<1x32xf32>
    %29 = vector.broadcast %28 : vector<1x32xf32> to vector<16x32xf32>
    %30 = arith.addf %27, %29 : vector<16x32xf32>
    %cst_14 = arith.constant 5.000000e-01 : f32
    %31 = vector.broadcast %cst_14 : f32 to vector<16x32xf32>
    %32 = arith.mulf %31, %30 : vector<16x32xf32>
    %cst_15 = arith.constant 0.707106769 : f32
    %33 = vector.broadcast %cst_15 : f32 to vector<16x32xf32>
    %34 = arith.mulf %30, %33 : vector<16x32xf32>
    %35 = math.erf %34 : vector<16x32xf32>
    %cst_16 = arith.constant 1.000000e+00 : f32
    %36 = vector.broadcast %cst_16 : f32 to vector<16x32xf32>
    %37 = arith.addf %36, %35 : vector<16x32xf32>
    %38 = arith.mulf %32, %37 : vector<16x32xf32>
    %c1_17 = arith.constant 1 : index
    %c0_18 = arith.constant 0 : index
    %39 = vector.load %arg7[%c1_17, %c0_18] : memref<22x32xf32, #tpu.memory_space<vmem>>, vector<1x32xf32>
    %c2 = arith.constant 2 : index
    %c0_19 = arith.constant 0 : index
    %40 = vector.load %arg7[%c2, %c0_19] : memref<22x32xf32, #tpu.memory_space<vmem>>, vector<1x32xf32>
    %cst_20 = arith.constant dense<0.000000e+00> : vector<16xf32>
    %41 = vector.multi_reduction <add>, %38, %cst_20 [1] : vector<16x32xf32> to vector<16xf32>
    %42 = vector.shape_cast %41 : vector<16xf32> to vector<16x1xf32>
    %cst_21 = arith.constant 3.200000e+01 : f32
    %43 = vector.broadcast %cst_21 : f32 to vector<16x1xf32>
    %44 = arith.divf %42, %43 : vector<16x1xf32>
    %45 = vector.broadcast %44 : vector<16x1xf32> to vector<16x32xf32>
    %46 = arith.subf %38, %45 : vector<16x32xf32>
    %47 = arith.mulf %46, %46 : vector<16x32xf32>
    %cst_22 = arith.constant dense<0.000000e+00> : vector<16xf32>
    %48 = vector.multi_reduction <add>, %47, %cst_22 [1] : vector<16x32xf32> to vector<16xf32>
    %49 = vector.shape_cast %48 : vector<16xf32> to vector<16x1xf32>
    %cst_23 = arith.constant 3.200000e+01 : f32
    %50 = vector.broadcast %cst_23 : f32 to vector<16x1xf32>
    %51 = arith.divf %49, %50 : vector<16x1xf32>
    %52 = vector.broadcast %44 : vector<16x1xf32> to vector<16x32xf32>
    %53 = arith.subf %38, %52 : vector<16x32xf32>
    %cst_24 = arith.constant 9.99999974E-6 : f32
    %54 = vector.broadcast %cst_24 : f32 to vector<16x1xf32>
    %55 = arith.addf %51, %54 : vector<16x1xf32>
    %56 = math.rsqrt %55 : vector<16x1xf32>
    %57 = vector.broadcast %56 : vector<16x1xf32> to vector<16x32xf32>
    %58 = arith.mulf %53, %57 : vector<16x32xf32>
    %59 = vector.broadcast %39 : vector<1x32xf32> to vector<16x32xf32>
    %60 = arith.mulf %58, %59 : vector<16x32xf32>
    %61 = vector.broadcast %40 : vector<1x32xf32> to vector<16x32xf32>
    %62 = arith.addf %60, %61 : vector<16x32xf32>
    %c0_25 = arith.constant 0 : index
    %c0_26 = arith.constant 0 : index
    %c0_27 = arith.constant 0 : index
    %63 = vector.load %arg4[%c0_25, %c0_26, %c0_27] : memref<2x32x96xf32, #tpu.memory_space<vmem>>, vector<1x32x96xf32>
    %64 = vector.shape_cast %63 : vector<1x32x96xf32> to vector<32x96xf32>
    %cst_28 = arith.constant dense<0.000000e+00> : vector<16x96xf32>
    %65 = tpu.matmul %62, %64, %cst_28 {dimension_numbers = #tpu.dot_dimension_numbers<[1], [0], [0], [1], [0, 0, 1, 1], [], []>} : vector<16x32xf32>, vector<32x96xf32>, vector<16x96xf32> -> vector<16x96xf32>
    %c0_29 = arith.constant 0 : index
    %c0_30 = arith.constant 0 : index
    %66 = vector.load %arg5[%c0_29, %c0_30] : memref<2x96xf32, #tpu.memory_space<vmem>>, vector<1x96xf32>
    %67 = vector.broadcast %66 : vector<1x96xf32> to vector<16x96xf32>
    %68 = arith.addf %65, %67 : vector<16x96xf32>
    %69 = vector.extract_strided_slice %68 {offsets = [0, 0], sizes = [16, 8], strides = [1, 1]} : vector<16x96xf32> to vector<16x8xf32>
    %70 = vector.shape_cast %69 : vector<16x8xf32> to vector<2x8x8xf32>
    %71 = vector.extract_strided_slice %68 {offsets = [0, 8], sizes = [16, 8], strides = [1, 1]} : vector<16x96xf32> to vector<16x8xf32>
    %72 = vector.shape_cast %71 : vector<16x8xf32> to vector<2x8x8xf32>
    %73 = vector.extract_strided_slice %68 {offsets = [0, 16], sizes = [16, 8], strides = [1, 1]} : vector<16x96xf32> to vector<16x8xf32>
    %74 = vector.shape_cast %73 : vector<16x8xf32> to vector<2x8x8xf32>
    %75 = vector.extract_strided_slice %68 {offsets = [0, 24], sizes = [16, 8], strides = [1, 1]} : vector<16x96xf32> to vector<16x8xf32>
    %76 = vector.shape_cast %75 : vector<16x8xf32> to vector<2x8x8xf32>
    %77 = tpu.concatenate %70, %72, %74, %76 in 0 : vector<2x8x8xf32>, vector<2x8x8xf32>, vector<2x8x8xf32>, vector<2x8x8xf32> -> vector<8x8x8xf32>
    %78 = vector.extract_strided_slice %68 {offsets = [0, 32], sizes = [16, 8], strides = [1, 1]} : vector<16x96xf32> to vector<16x8xf32>
    %79 = vector.shape_cast %78 : vector<16x8xf32> to vector<2x8x8xf32>
    %80 = vector.extract_strided_slice %68 {offsets = [0, 40], sizes = [16, 8], strides = [1, 1]} : vector<16x96xf32> to vector<16x8xf32>
    %81 = vector.shape_cast %80 : vector<16x8xf32> to vector<2x8x8xf32>
    %82 = vector.extract_strided_slice %68 {offsets = [0, 48], sizes = [16, 8], strides = [1, 1]} : vector<16x96xf32> to vector<16x8xf32>
    %83 = vector.shape_cast %82 : vector<16x8xf32> to vector<2x8x8xf32>
    %84 = vector.extract_strided_slice %68 {offsets = [0, 56], sizes = [16, 8], strides = [1, 1]} : vector<16x96xf32> to vector<16x8xf32>
    %85 = vector.shape_cast %84 : vector<16x8xf32> to vector<2x8x8xf32>
    %86 = tpu.concatenate %79, %81, %83, %85 in 0 : vector<2x8x8xf32>, vector<2x8x8xf32>, vector<2x8x8xf32>, vector<2x8x8xf32> -> vector<8x8x8xf32>
    %87 = vector.extract_strided_slice %68 {offsets = [0, 64], sizes = [16, 8], strides = [1, 1]} : vector<16x96xf32> to vector<16x8xf32>
    %88 = vector.shape_cast %87 : vector<16x8xf32> to vector<2x8x8xf32>
    %89 = vector.extract_strided_slice %68 {offsets = [0, 72], sizes = [16, 8], strides = [1, 1]} : vector<16x96xf32> to vector<16x8xf32>
    %90 = vector.shape_cast %89 : vector<16x8xf32> to vector<2x8x8xf32>
    %91 = vector.extract_strided_slice %68 {offsets = [0, 80], sizes = [16, 8], strides = [1, 1]} : vector<16x96xf32> to vector<16x8xf32>
    %92 = vector.shape_cast %91 : vector<16x8xf32> to vector<2x8x8xf32>
    %93 = vector.extract_strided_slice %68 {offsets = [0, 88], sizes = [16, 8], strides = [1, 1]} : vector<16x96xf32> to vector<16x8xf32>
    %94 = vector.shape_cast %93 : vector<16x8xf32> to vector<2x8x8xf32>
    %95 = tpu.concatenate %88, %90, %92, %94 in 0 : vector<2x8x8xf32>, vector<2x8x8xf32>, vector<2x8x8xf32>, vector<2x8x8xf32> -> vector<8x8x8xf32>
    "tpu.trace_start"() <{level = 10 : i32, message = "bqd,bkd->bqk"}> : () -> ()
    %cst_31 = arith.constant dense<0.000000e+00> : vector<8x8x8xf32>
    %96 = tpu.matmul %86, %77, %cst_31 {dimension_numbers = #tpu.dot_dimension_numbers<[2], [2], [1], [1], [0, 0, 0, 1, 1, 1], [0], [0]>} : vector<8x8x8xf32>, vector<8x8x8xf32>, vector<8x8x8xf32> -> vector<8x8x8xf32>
    "tpu.trace_stop"() : () -> ()
    %cst_32 = arith.constant dense<0xFF800000> : vector<8x8xf32>
    %97 = vector.multi_reduction <maximumf>, %96, %cst_32 [1] : vector<8x8x8xf32> to vector<8x8xf32>
    %98 = vector.shape_cast %97 : vector<8x8xf32> to vector<8x1x8xf32>
    %99 = vector.broadcast %98 : vector<8x1x8xf32> to vector<8x8x8xf32>
    %100 = arith.subf %96, %99 : vector<8x8x8xf32>
    %101 = math.exp %100 : vector<8x8x8xf32>
    %cst_33 = arith.constant dense<0.000000e+00> : vector<8x8xf32>
    %102 = vector.multi_reduction <add>, %101, %cst_33 [1] : vector<8x8x8xf32> to vector<8x8xf32>
    %103 = vector.shape_cast %102 : vector<8x8xf32> to vector<8x1x8xf32>
    %104 = tpu.reciprocal %103 {approx = true} : vector<8x1x8xf32> -> vector<8x1x8xf32>
    %105 = vector.broadcast %104 : vector<8x1x8xf32> to vector<8x8x8xf32>
    %106 = arith.mulf %101, %105 : vector<8x8x8xf32>
    "tpu.trace_start"() <{level = 10 : i32, message = "bqk,bkd->bqd"}> : () -> ()
    %cst_34 = arith.constant dense<0.000000e+00> : vector<8x8x8xf32>
    %107 = tpu.matmul %106, %95, %cst_34 {dimension_numbers = #tpu.dot_dimension_numbers<[2], [1], [1], [2], [0, 0, 0, 1, 1, 2], [0], [0]>} : vector<8x8x8xf32>, vector<8x8x8xf32>, vector<8x8x8xf32> -> vector<8x8x8xf32>
    "tpu.trace_stop"() : () -> ()
    %c0_35 = arith.constant 0 : index
    %c0_36 = arith.constant 0 : index
    %c0_37 = arith.constant 0 : index
    %108 = vector.load %arg6[%c0_35, %c0_36, %c0_37] : memref<7x32x32xf32, #tpu.memory_space<vmem>>, vector<1x32x32xf32>
    %109 = vector.shape_cast %108 : vector<1x32x32xf32> to vector<32x32xf32>
    %cst_38 = arith.constant 0.000000e+00 : f32
    %110 = vector.broadcast %cst_38 : f32 to vector<16x32xf32>
    %111 = vector.extract_strided_slice %107 {offsets = [0, 0, 0], sizes = [2, 8, 8], strides = [1, 1, 1]} : vector<8x8x8xf32> to vector<2x8x8xf32>
    %112 = vector.shape_cast %111 : vector<2x8x8xf32> to vector<16x8xf32>
    %113 = vector.extract_strided_slice %109 {offsets = [0, 0], sizes = [8, 32], strides = [1, 1]} : vector<32x32xf32> to vector<8x32xf32>
    %cst_39 = arith.constant dense<0.000000e+00> : vector<16x32xf32>
    %114 = tpu.matmul %112, %113, %cst_39 {dimension_numbers = #tpu.dot_dimension_numbers<[1], [0], [0], [1], [0, 0, 1, 1], [], []>} : vector<16x8xf32>, vector<8x32xf32>, vector<16x32xf32> -> vector<16x32xf32>
    %115 = arith.addf %110, %114 : vector<16x32xf32>
    %116 = vector.extract_strided_slice %107 {offsets = [2, 0, 0], sizes = [2, 8, 8], strides = [1, 1, 1]} : vector<8x8x8xf32> to vector<2x8x8xf32>
    %117 = vector.shape_cast %116 : vector<2x8x8xf32> to vector<16x8xf32>
    %118 = vector.extract_strided_slice %109 {offsets = [8, 0], sizes = [8, 32], strides = [1, 1]} : vector<32x32xf32> to vector<8x32xf32>
    %cst_40 = arith.constant dense<0.000000e+00> : vector<16x32xf32>
    %119 = tpu.matmul %117, %118, %cst_40 {dimension_numbers = #tpu.dot_dimension_numbers<[1], [0], [0], [1], [0, 0, 1, 1], [], []>} : vector<16x8xf32>, vector<8x32xf32>, vector<16x32xf32> -> vector<16x32xf32>
    %120 = arith.addf %115, %119 : vector<16x32xf32>
    %121 = vector.extract_strided_slice %107 {offsets = [4, 0, 0], sizes = [2, 8, 8], strides = [1, 1, 1]} : vector<8x8x8xf32> to vector<2x8x8xf32>
    %122 = vector.shape_cast %121 : vector<2x8x8xf32> to vector<16x8xf32>
    %123 = vector.extract_strided_slice %109 {offsets = [16, 0], sizes = [8, 32], strides = [1, 1]} : vector<32x32xf32> to vector<8x32xf32>
    %cst_41 = arith.constant dense<0.000000e+00> : vector<16x32xf32>
    %124 = tpu.matmul %122, %123, %cst_41 {dimension_numbers = #tpu.dot_dimension_numbers<[1], [0], [0], [1], [0, 0, 1, 1], [], []>} : vector<16x8xf32>, vector<8x32xf32>, vector<16x32xf32> -> vector<16x32xf32>
    %125 = arith.addf %120, %124 : vector<16x32xf32>
    %126 = vector.extract_strided_slice %107 {offsets = [6, 0, 0], sizes = [2, 8, 8], strides = [1, 1, 1]} : vector<8x8x8xf32> to vector<2x8x8xf32>
    %127 = vector.shape_cast %126 : vector<2x8x8xf32> to vector<16x8xf32>
    %128 = vector.extract_strided_slice %109 {offsets = [24, 0], sizes = [8, 32], strides = [1, 1]} : vector<32x32xf32> to vector<8x32xf32>
    %cst_42 = arith.constant dense<0.000000e+00> : vector<16x32xf32>
    %129 = tpu.matmul %127, %128, %cst_42 {dimension_numbers = #tpu.dot_dimension_numbers<[1], [0], [0], [1], [0, 0, 1, 1], [], []>} : vector<16x8xf32>, vector<8x32xf32>, vector<16x32xf32> -> vector<16x32xf32>
    %130 = arith.addf %125, %129 : vector<16x32xf32>
    %c3 = arith.constant 3 : index
    %c0_43 = arith.constant 0 : index
    %131 = vector.load %arg7[%c3, %c0_43] : memref<22x32xf32, #tpu.memory_space<vmem>>, vector<1x32xf32>
    %132 = vector.broadcast %131 : vector<1x32xf32> to vector<16x32xf32>
    %133 = arith.addf %130, %132 : vector<16x32xf32>
    %134 = arith.addf %62, %133 : vector<16x32xf32>
    %c6 = arith.constant 6 : index
    %c0_44 = arith.constant 0 : index
    %135 = vector.load %arg7[%c6, %c0_44] : memref<22x32xf32, #tpu.memory_space<vmem>>, vector<1x32xf32>
    %c7 = arith.constant 7 : index
    %c0_45 = arith.constant 0 : index
    %136 = vector.load %arg7[%c7, %c0_45] : memref<22x32xf32, #tpu.memory_space<vmem>>, vector<1x32xf32>
    %cst_46 = arith.constant dense<0.000000e+00> : vector<16xf32>
    %137 = vector.multi_reduction <add>, %134, %cst_46 [1] : vector<16x32xf32> to vector<16xf32>
    %138 = vector.shape_cast %137 : vector<16xf32> to vector<16x1xf32>
    %cst_47 = arith.constant 3.200000e+01 : f32
    %139 = vector.broadcast %cst_47 : f32 to vector<16x1xf32>
    %140 = arith.divf %138, %139 : vector<16x1xf32>
    %141 = vector.broadcast %140 : vector<16x1xf32> to vector<16x32xf32>
    %142 = arith.subf %134, %141 : vector<16x32xf32>
    %143 = arith.mulf %142, %142 : vector<16x32xf32>
    %cst_48 = arith.constant dense<0.000000e+00> : vector<16xf32>
    %144 = vector.multi_reduction <add>, %143, %cst_48 [1] : vector<16x32xf32> to vector<16xf32>
    %145 = vector.shape_cast %144 : vector<16xf32> to vector<16x1xf32>
    %cst_49 = arith.constant 3.200000e+01 : f32
    %146 = vector.broadcast %cst_49 : f32 to vector<16x1xf32>
    %147 = arith.divf %145, %146 : vector<16x1xf32>
    %148 = vector.broadcast %140 : vector<16x1xf32> to vector<16x32xf32>
    %149 = arith.subf %134, %148 : vector<16x32xf32>
    %cst_50 = arith.constant 9.99999974E-6 : f32
    %150 = vector.broadcast %cst_50 : f32 to vector<16x1xf32>
    %151 = arith.addf %147, %150 : vector<16x1xf32>
    %152 = math.rsqrt %151 : vector<16x1xf32>
    %153 = vector.broadcast %152 : vector<16x1xf32> to vector<16x32xf32>
    %154 = arith.mulf %149, %153 : vector<16x32xf32>
    %155 = vector.broadcast %135 : vector<1x32xf32> to vector<16x32xf32>
    %156 = arith.mulf %154, %155 : vector<16x32xf32>
    %157 = vector.broadcast %136 : vector<1x32xf32> to vector<16x32xf32>
    %158 = arith.addf %156, %157 : vector<16x32xf32>
    %c1_51 = arith.constant 1 : index
    %c0_52 = arith.constant 0 : index
    %c0_53 = arith.constant 0 : index
    %159 = vector.load %arg6[%c1_51, %c0_52, %c0_53] : memref<7x32x32xf32, #tpu.memory_space<vmem>>, vector<1x32x32xf32>
    %160 = vector.shape_cast %159 : vector<1x32x32xf32> to vector<32x32xf32>
    %cst_54 = arith.constant dense<0.000000e+00> : vector<16x32xf32>
    %161 = tpu.matmul %158, %160, %cst_54 {dimension_numbers = #tpu.dot_dimension_numbers<[1], [0], [0], [1], [0, 0, 1, 1], [], []>} : vector<16x32xf32>, vector<32x32xf32>, vector<16x32xf32> -> vector<16x32xf32>
    %c4 = arith.constant 4 : index
    %c0_55 = arith.constant 0 : index
    %162 = vector.load %arg7[%c4, %c0_55] : memref<22x32xf32, #tpu.memory_space<vmem>>, vector<1x32xf32>
    %163 = vector.broadcast %162 : vector<1x32xf32> to vector<16x32xf32>
    %164 = arith.addf %161, %163 : vector<16x32xf32>
    %cst_56 = arith.constant 5.000000e-01 : f32
    %165 = vector.broadcast %cst_56 : f32 to vector<16x32xf32>
    %166 = arith.mulf %165, %164 : vector<16x32xf32>
    %cst_57 = arith.constant 0.707106769 : f32
    %167 = vector.broadcast %cst_57 : f32 to vector<16x32xf32>
    %168 = arith.mulf %164, %167 : vector<16x32xf32>
    %169 = math.erf %168 : vector<16x32xf32>
    %cst_58 = arith.constant 1.000000e+00 : f32
    %170 = vector.broadcast %cst_58 : f32 to vector<16x32xf32>
    %171 = arith.addf %170, %169 : vector<16x32xf32>
    %172 = arith.mulf %166, %171 : vector<16x32xf32>
    %c2_59 = arith.constant 2 : index
    %c0_60 = arith.constant 0 : index
    %c0_61 = arith.constant 0 : index
    %173 = vector.load %arg6[%c2_59, %c0_60, %c0_61] : memref<7x32x32xf32, #tpu.memory_space<vmem>>, vector<1x32x32xf32>
    %174 = vector.shape_cast %173 : vector<1x32x32xf32> to vector<32x32xf32>
    %cst_62 = arith.constant dense<0.000000e+00> : vector<16x32xf32>
    %175 = tpu.matmul %172, %174, %cst_62 {dimension_numbers = #tpu.dot_dimension_numbers<[1], [0], [0], [1], [0, 0, 1, 1], [], []>} : vector<16x32xf32>, vector<32x32xf32>, vector<16x32xf32> -> vector<16x32xf32>
    %c5 = arith.constant 5 : index
    %c0_63 = arith.constant 0 : index
    %176 = vector.load %arg7[%c5, %c0_63] : memref<22x32xf32, #tpu.memory_space<vmem>>, vector<1x32xf32>
    %177 = vector.broadcast %176 : vector<1x32xf32> to vector<16x32xf32>
    %178 = arith.addf %175, %177 : vector<16x32xf32>
    %179 = arith.addf %158, %178 : vector<16x32xf32>
    %c8 = arith.constant 8 : index
    %c0_64 = arith.constant 0 : index
    %180 = vector.load %arg7[%c8, %c0_64] : memref<22x32xf32, #tpu.memory_space<vmem>>, vector<1x32xf32>
    %c9 = arith.constant 9 : index
    %c0_65 = arith.constant 0 : index
    %181 = vector.load %arg7[%c9, %c0_65] : memref<22x32xf32, #tpu.memory_space<vmem>>, vector<1x32xf32>
    %cst_66 = arith.constant dense<0.000000e+00> : vector<16xf32>
    %182 = vector.multi_reduction <add>, %179, %cst_66 [1] : vector<16x32xf32> to vector<16xf32>
    %183 = vector.shape_cast %182 : vector<16xf32> to vector<16x1xf32>
    %cst_67 = arith.constant 3.200000e+01 : f32
    %184 = vector.broadcast %cst_67 : f32 to vector<16x1xf32>
    %185 = arith.divf %183, %184 : vector<16x1xf32>
    %186 = vector.broadcast %185 : vector<16x1xf32> to vector<16x32xf32>
    %187 = arith.subf %179, %186 : vector<16x32xf32>
    %188 = arith.mulf %187, %187 : vector<16x32xf32>
    %cst_68 = arith.constant dense<0.000000e+00> : vector<16xf32>
    %189 = vector.multi_reduction <add>, %188, %cst_68 [1] : vector<16x32xf32> to vector<16xf32>
    %190 = vector.shape_cast %189 : vector<16xf32> to vector<16x1xf32>
    %cst_69 = arith.constant 3.200000e+01 : f32
    %191 = vector.broadcast %cst_69 : f32 to vector<16x1xf32>
    %192 = arith.divf %190, %191 : vector<16x1xf32>
    %193 = vector.broadcast %185 : vector<16x1xf32> to vector<16x32xf32>
    %194 = arith.subf %179, %193 : vector<16x32xf32>
    %cst_70 = arith.constant 9.99999974E-6 : f32
    %195 = vector.broadcast %cst_70 : f32 to vector<16x1xf32>
    %196 = arith.addf %192, %195 : vector<16x1xf32>
    %197 = math.rsqrt %196 : vector<16x1xf32>
    %198 = vector.broadcast %197 : vector<16x1xf32> to vector<16x32xf32>
    %199 = arith.mulf %194, %198 : vector<16x32xf32>
    %200 = vector.broadcast %180 : vector<1x32xf32> to vector<16x32xf32>
    %201 = arith.mulf %199, %200 : vector<16x32xf32>
    %202 = vector.broadcast %181 : vector<1x32xf32> to vector<16x32xf32>
    %203 = arith.addf %201, %202 : vector<16x32xf32>
    %c1_71 = arith.constant 1 : index
    %c0_72 = arith.constant 0 : index
    %c0_73 = arith.constant 0 : index
    %204 = vector.load %arg4[%c1_71, %c0_72, %c0_73] : memref<2x32x96xf32, #tpu.memory_space<vmem>>, vector<1x32x96xf32>
    %205 = vector.shape_cast %204 : vector<1x32x96xf32> to vector<32x96xf32>
    %cst_74 = arith.constant dense<0.000000e+00> : vector<16x96xf32>
    %206 = tpu.matmul %203, %205, %cst_74 {dimension_numbers = #tpu.dot_dimension_numbers<[1], [0], [0], [1], [0, 0, 1, 1], [], []>} : vector<16x32xf32>, vector<32x96xf32>, vector<16x96xf32> -> vector<16x96xf32>
    %c1_75 = arith.constant 1 : index
    %c0_76 = arith.constant 0 : index
    %207 = vector.load %arg5[%c1_75, %c0_76] : memref<2x96xf32, #tpu.memory_space<vmem>>, vector<1x96xf32>
    %208 = vector.broadcast %207 : vector<1x96xf32> to vector<16x96xf32>
    %209 = arith.addf %206, %208 : vector<16x96xf32>
    %210 = vector.extract_strided_slice %209 {offsets = [0, 0], sizes = [16, 8], strides = [1, 1]} : vector<16x96xf32> to vector<16x8xf32>
    %211 = vector.shape_cast %210 : vector<16x8xf32> to vector<2x8x8xf32>
    %212 = vector.extract_strided_slice %209 {offsets = [0, 8], sizes = [16, 8], strides = [1, 1]} : vector<16x96xf32> to vector<16x8xf32>
    %213 = vector.shape_cast %212 : vector<16x8xf32> to vector<2x8x8xf32>
    %214 = vector.extract_strided_slice %209 {offsets = [0, 16], sizes = [16, 8], strides = [1, 1]} : vector<16x96xf32> to vector<16x8xf32>
    %215 = vector.shape_cast %214 : vector<16x8xf32> to vector<2x8x8xf32>
    %216 = vector.extract_strided_slice %209 {offsets = [0, 24], sizes = [16, 8], strides = [1, 1]} : vector<16x96xf32> to vector<16x8xf32>
    %217 = vector.shape_cast %216 : vector<16x8xf32> to vector<2x8x8xf32>
    %218 = tpu.concatenate %211, %213, %215, %217 in 0 : vector<2x8x8xf32>, vector<2x8x8xf32>, vector<2x8x8xf32>, vector<2x8x8xf32> -> vector<8x8x8xf32>
    %219 = vector.extract_strided_slice %209 {offsets = [0, 32], sizes = [16, 8], strides = [1, 1]} : vector<16x96xf32> to vector<16x8xf32>
    %220 = vector.shape_cast %219 : vector<16x8xf32> to vector<2x8x8xf32>
    %221 = vector.extract_strided_slice %209 {offsets = [0, 40], sizes = [16, 8], strides = [1, 1]} : vector<16x96xf32> to vector<16x8xf32>
    %222 = vector.shape_cast %221 : vector<16x8xf32> to vector<2x8x8xf32>
    %223 = vector.extract_strided_slice %209 {offsets = [0, 48], sizes = [16, 8], strides = [1, 1]} : vector<16x96xf32> to vector<16x8xf32>
    %224 = vector.shape_cast %223 : vector<16x8xf32> to vector<2x8x8xf32>
    %225 = vector.extract_strided_slice %209 {offsets = [0, 56], sizes = [16, 8], strides = [1, 1]} : vector<16x96xf32> to vector<16x8xf32>
    %226 = vector.shape_cast %225 : vector<16x8xf32> to vector<2x8x8xf32>
    %227 = tpu.concatenate %220, %222, %224, %226 in 0 : vector<2x8x8xf32>, vector<2x8x8xf32>, vector<2x8x8xf32>, vector<2x8x8xf32> -> vector<8x8x8xf32>
    %228 = vector.extract_strided_slice %209 {offsets = [0, 64], sizes = [16, 8], strides = [1, 1]} : vector<16x96xf32> to vector<16x8xf32>
    %229 = vector.shape_cast %228 : vector<16x8xf32> to vector<2x8x8xf32>
    %230 = vector.extract_strided_slice %209 {offsets = [0, 72], sizes = [16, 8], strides = [1, 1]} : vector<16x96xf32> to vector<16x8xf32>
    %231 = vector.shape_cast %230 : vector<16x8xf32> to vector<2x8x8xf32>
    %232 = vector.extract_strided_slice %209 {offsets = [0, 80], sizes = [16, 8], strides = [1, 1]} : vector<16x96xf32> to vector<16x8xf32>
    %233 = vector.shape_cast %232 : vector<16x8xf32> to vector<2x8x8xf32>
    %234 = vector.extract_strided_slice %209 {offsets = [0, 88], sizes = [16, 8], strides = [1, 1]} : vector<16x96xf32> to vector<16x8xf32>
    %235 = vector.shape_cast %234 : vector<16x8xf32> to vector<2x8x8xf32>
    %236 = tpu.concatenate %229, %231, %233, %235 in 0 : vector<2x8x8xf32>, vector<2x8x8xf32>, vector<2x8x8xf32>, vector<2x8x8xf32> -> vector<8x8x8xf32>
    "tpu.trace_start"() <{level = 10 : i32, message = "bqd,bkd->bqk"}> : () -> ()
    %cst_77 = arith.constant dense<0.000000e+00> : vector<8x8x8xf32>
    %237 = tpu.matmul %227, %218, %cst_77 {dimension_numbers = #tpu.dot_dimension_numbers<[2], [2], [1], [1], [0, 0, 0, 1, 1, 1], [0], [0]>} : vector<8x8x8xf32>, vector<8x8x8xf32>, vector<8x8x8xf32> -> vector<8x8x8xf32>
    "tpu.trace_stop"() : () -> ()
    %cst_78 = arith.constant dense<0xFF800000> : vector<8x8xf32>
    %238 = vector.multi_reduction <maximumf>, %237, %cst_78 [1] : vector<8x8x8xf32> to vector<8x8xf32>
    %239 = vector.shape_cast %238 : vector<8x8xf32> to vector<8x1x8xf32>
    %240 = vector.broadcast %239 : vector<8x1x8xf32> to vector<8x8x8xf32>
    %241 = arith.subf %237, %240 : vector<8x8x8xf32>
    %242 = math.exp %241 : vector<8x8x8xf32>
    %cst_79 = arith.constant dense<0.000000e+00> : vector<8x8xf32>
    %243 = vector.multi_reduction <add>, %242, %cst_79 [1] : vector<8x8x8xf32> to vector<8x8xf32>
    %244 = vector.shape_cast %243 : vector<8x8xf32> to vector<8x1x8xf32>
    %245 = tpu.reciprocal %244 {approx = true} : vector<8x1x8xf32> -> vector<8x1x8xf32>
    %246 = vector.broadcast %245 : vector<8x1x8xf32> to vector<8x8x8xf32>
    %247 = arith.mulf %242, %246 : vector<8x8x8xf32>
    "tpu.trace_start"() <{level = 10 : i32, message = "bqk,bkd->bqd"}> : () -> ()
    %cst_80 = arith.constant dense<0.000000e+00> : vector<8x8x8xf32>
    %248 = tpu.matmul %247, %236, %cst_80 {dimension_numbers = #tpu.dot_dimension_numbers<[2], [1], [1], [2], [0, 0, 0, 1, 1, 2], [0], [0]>} : vector<8x8x8xf32>, vector<8x8x8xf32>, vector<8x8x8xf32> -> vector<8x8x8xf32>
    "tpu.trace_stop"() : () -> ()
    %c3_81 = arith.constant 3 : index
    %c0_82 = arith.constant 0 : index
    %c0_83 = arith.constant 0 : index
    %249 = vector.load %arg6[%c3_81, %c0_82, %c0_83] : memref<7x32x32xf32, #tpu.memory_space<vmem>>, vector<1x32x32xf32>
    %250 = vector.shape_cast %249 : vector<1x32x32xf32> to vector<32x32xf32>
    %cst_84 = arith.constant 0.000000e+00 : f32
    %251 = vector.broadcast %cst_84 : f32 to vector<16x32xf32>
    %252 = vector.extract_strided_slice %248 {offsets = [0, 0, 0], sizes = [2, 8, 8], strides = [1, 1, 1]} : vector<8x8x8xf32> to vector<2x8x8xf32>
    %253 = vector.shape_cast %252 : vector<2x8x8xf32> to vector<16x8xf32>
    %254 = vector.extract_strided_slice %250 {offsets = [0, 0], sizes = [8, 32], strides = [1, 1]} : vector<32x32xf32> to vector<8x32xf32>
    %cst_85 = arith.constant dense<0.000000e+00> : vector<16x32xf32>
    %255 = tpu.matmul %253, %254, %cst_85 {dimension_numbers = #tpu.dot_dimension_numbers<[1], [0], [0], [1], [0, 0, 1, 1], [], []>} : vector<16x8xf32>, vector<8x32xf32>, vector<16x32xf32> -> vector<16x32xf32>
    %256 = arith.addf %251, %255 : vector<16x32xf32>
    %257 = vector.extract_strided_slice %248 {offsets = [2, 0, 0], sizes = [2, 8, 8], strides = [1, 1, 1]} : vector<8x8x8xf32> to vector<2x8x8xf32>
    %258 = vector.shape_cast %257 : vector<2x8x8xf32> to vector<16x8xf32>
    %259 = vector.extract_strided_slice %250 {offsets = [8, 0], sizes = [8, 32], strides = [1, 1]} : vector<32x32xf32> to vector<8x32xf32>
    %cst_86 = arith.constant dense<0.000000e+00> : vector<16x32xf32>
    %260 = tpu.matmul %258, %259, %cst_86 {dimension_numbers = #tpu.dot_dimension_numbers<[1], [0], [0], [1], [0, 0, 1, 1], [], []>} : vector<16x8xf32>, vector<8x32xf32>, vector<16x32xf32> -> vector<16x32xf32>
    %261 = arith.addf %256, %260 : vector<16x32xf32>
    %262 = vector.extract_strided_slice %248 {offsets = [4, 0, 0], sizes = [2, 8, 8], strides = [1, 1, 1]} : vector<8x8x8xf32> to vector<2x8x8xf32>
    %263 = vector.shape_cast %262 : vector<2x8x8xf32> to vector<16x8xf32>
    %264 = vector.extract_strided_slice %250 {offsets = [16, 0], sizes = [8, 32], strides = [1, 1]} : vector<32x32xf32> to vector<8x32xf32>
    %cst_87 = arith.constant dense<0.000000e+00> : vector<16x32xf32>
    %265 = tpu.matmul %263, %264, %cst_87 {dimension_numbers = #tpu.dot_dimension_numbers<[1], [0], [0], [1], [0, 0, 1, 1], [], []>} : vector<16x8xf32>, vector<8x32xf32>, vector<16x32xf32> -> vector<16x32xf32>
    %266 = arith.addf %261, %265 : vector<16x32xf32>
    %267 = vector.extract_strided_slice %248 {offsets = [6, 0, 0], sizes = [2, 8, 8], strides = [1, 1, 1]} : vector<8x8x8xf32> to vector<2x8x8xf32>
    %268 = vector.shape_cast %267 : vector<2x8x8xf32> to vector<16x8xf32>
    %269 = vector.extract_strided_slice %250 {offsets = [24, 0], sizes = [8, 32], strides = [1, 1]} : vector<32x32xf32> to vector<8x32xf32>
    %cst_88 = arith.constant dense<0.000000e+00> : vector<16x32xf32>
    %270 = tpu.matmul %268, %269, %cst_88 {dimension_numbers = #tpu.dot_dimension_numbers<[1], [0], [0], [1], [0, 0, 1, 1], [], []>} : vector<16x8xf32>, vector<8x32xf32>, vector<16x32xf32> -> vector<16x32xf32>
    %271 = arith.addf %266, %270 : vector<16x32xf32>
    %c10 = arith.constant 10 : index
    %c0_89 = arith.constant 0 : index
    %272 = vector.load %arg7[%c10, %c0_89] : memref<22x32xf32, #tpu.memory_space<vmem>>, vector<1x32xf32>
    %273 = vector.broadcast %272 : vector<1x32xf32> to vector<16x32xf32>
    %274 = arith.addf %271, %273 : vector<16x32xf32>
    %275 = arith.addf %203, %274 : vector<16x32xf32>
    %c13 = arith.constant 13 : index
    %c0_90 = arith.constant 0 : index
    %276 = vector.load %arg7[%c13, %c0_90] : memref<22x32xf32, #tpu.memory_space<vmem>>, vector<1x32xf32>
    %c14 = arith.constant 14 : index
    %c0_91 = arith.constant 0 : index
    %277 = vector.load %arg7[%c14, %c0_91] : memref<22x32xf32, #tpu.memory_space<vmem>>, vector<1x32xf32>
    %cst_92 = arith.constant dense<0.000000e+00> : vector<16xf32>
    %278 = vector.multi_reduction <add>, %275, %cst_92 [1] : vector<16x32xf32> to vector<16xf32>
    %279 = vector.shape_cast %278 : vector<16xf32> to vector<16x1xf32>
    %cst_93 = arith.constant 3.200000e+01 : f32
    %280 = vector.broadcast %cst_93 : f32 to vector<16x1xf32>
    %281 = arith.divf %279, %280 : vector<16x1xf32>
    %282 = vector.broadcast %281 : vector<16x1xf32> to vector<16x32xf32>
    %283 = arith.subf %275, %282 : vector<16x32xf32>
    %284 = arith.mulf %283, %283 : vector<16x32xf32>
    %cst_94 = arith.constant dense<0.000000e+00> : vector<16xf32>
    %285 = vector.multi_reduction <add>, %284, %cst_94 [1] : vector<16x32xf32> to vector<16xf32>
    %286 = vector.shape_cast %285 : vector<16xf32> to vector<16x1xf32>
    %cst_95 = arith.constant 3.200000e+01 : f32
    %287 = vector.broadcast %cst_95 : f32 to vector<16x1xf32>
    %288 = arith.divf %286, %287 : vector<16x1xf32>
    %289 = vector.broadcast %281 : vector<16x1xf32> to vector<16x32xf32>
    %290 = arith.subf %275, %289 : vector<16x32xf32>
    %cst_96 = arith.constant 9.99999974E-6 : f32
    %291 = vector.broadcast %cst_96 : f32 to vector<16x1xf32>
    %292 = arith.addf %288, %291 : vector<16x1xf32>
    %293 = math.rsqrt %292 : vector<16x1xf32>
    %294 = vector.broadcast %293 : vector<16x1xf32> to vector<16x32xf32>
    %295 = arith.mulf %290, %294 : vector<16x32xf32>
    %296 = vector.broadcast %276 : vector<1x32xf32> to vector<16x32xf32>
    %297 = arith.mulf %295, %296 : vector<16x32xf32>
    %298 = vector.broadcast %277 : vector<1x32xf32> to vector<16x32xf32>
    %299 = arith.addf %297, %298 : vector<16x32xf32>
    %c4_97 = arith.constant 4 : index
    %c0_98 = arith.constant 0 : index
    %c0_99 = arith.constant 0 : index
    %300 = vector.load %arg6[%c4_97, %c0_98, %c0_99] : memref<7x32x32xf32, #tpu.memory_space<vmem>>, vector<1x32x32xf32>
    %301 = vector.shape_cast %300 : vector<1x32x32xf32> to vector<32x32xf32>
    %cst_100 = arith.constant dense<0.000000e+00> : vector<16x32xf32>
    %302 = tpu.matmul %299, %301, %cst_100 {dimension_numbers = #tpu.dot_dimension_numbers<[1], [0], [0], [1], [0, 0, 1, 1], [], []>} : vector<16x32xf32>, vector<32x32xf32>, vector<16x32xf32> -> vector<16x32xf32>
    %c11 = arith.constant 11 : index
    %c0_101 = arith.constant 0 : index
    %303 = vector.load %arg7[%c11, %c0_101] : memref<22x32xf32, #tpu.memory_space<vmem>>, vector<1x32xf32>
    %304 = vector.broadcast %303 : vector<1x32xf32> to vector<16x32xf32>
    %305 = arith.addf %302, %304 : vector<16x32xf32>
    %cst_102 = arith.constant 5.000000e-01 : f32
    %306 = vector.broadcast %cst_102 : f32 to vector<16x32xf32>
    %307 = arith.mulf %306, %305 : vector<16x32xf32>
    %cst_103 = arith.constant 0.707106769 : f32
    %308 = vector.broadcast %cst_103 : f32 to vector<16x32xf32>
    %309 = arith.mulf %305, %308 : vector<16x32xf32>
    %310 = math.erf %309 : vector<16x32xf32>
    %cst_104 = arith.constant 1.000000e+00 : f32
    %311 = vector.broadcast %cst_104 : f32 to vector<16x32xf32>
    %312 = arith.addf %311, %310 : vector<16x32xf32>
    %313 = arith.mulf %307, %312 : vector<16x32xf32>
    %c5_105 = arith.constant 5 : index
    %c0_106 = arith.constant 0 : index
    %c0_107 = arith.constant 0 : index
    %314 = vector.load %arg6[%c5_105, %c0_106, %c0_107] : memref<7x32x32xf32, #tpu.memory_space<vmem>>, vector<1x32x32xf32>
    %315 = vector.shape_cast %314 : vector<1x32x32xf32> to vector<32x32xf32>
    %cst_108 = arith.constant dense<0.000000e+00> : vector<16x32xf32>
    %316 = tpu.matmul %313, %315, %cst_108 {dimension_numbers = #tpu.dot_dimension_numbers<[1], [0], [0], [1], [0, 0, 1, 1], [], []>} : vector<16x32xf32>, vector<32x32xf32>, vector<16x32xf32> -> vector<16x32xf32>
    %c12 = arith.constant 12 : index
    %c0_109 = arith.constant 0 : index
    %317 = vector.load %arg7[%c12, %c0_109] : memref<22x32xf32, #tpu.memory_space<vmem>>, vector<1x32xf32>
    %318 = vector.broadcast %317 : vector<1x32xf32> to vector<16x32xf32>
    %319 = arith.addf %316, %318 : vector<16x32xf32>
    %320 = arith.addf %299, %319 : vector<16x32xf32>
    %c15 = arith.constant 15 : index
    %c0_110 = arith.constant 0 : index
    %321 = vector.load %arg7[%c15, %c0_110] : memref<22x32xf32, #tpu.memory_space<vmem>>, vector<1x32xf32>
    %c16 = arith.constant 16 : index
    %c0_111 = arith.constant 0 : index
    %322 = vector.load %arg7[%c16, %c0_111] : memref<22x32xf32, #tpu.memory_space<vmem>>, vector<1x32xf32>
    %cst_112 = arith.constant dense<0.000000e+00> : vector<16xf32>
    %323 = vector.multi_reduction <add>, %320, %cst_112 [1] : vector<16x32xf32> to vector<16xf32>
    %324 = vector.shape_cast %323 : vector<16xf32> to vector<16x1xf32>
    %cst_113 = arith.constant 3.200000e+01 : f32
    %325 = vector.broadcast %cst_113 : f32 to vector<16x1xf32>
    %326 = arith.divf %324, %325 : vector<16x1xf32>
    %327 = vector.broadcast %326 : vector<16x1xf32> to vector<16x32xf32>
    %328 = arith.subf %320, %327 : vector<16x32xf32>
    %329 = arith.mulf %328, %328 : vector<16x32xf32>
    %cst_114 = arith.constant dense<0.000000e+00> : vector<16xf32>
    %330 = vector.multi_reduction <add>, %329, %cst_114 [1] : vector<16x32xf32> to vector<16xf32>
    %331 = vector.shape_cast %330 : vector<16xf32> to vector<16x1xf32>
    %cst_115 = arith.constant 3.200000e+01 : f32
    %332 = vector.broadcast %cst_115 : f32 to vector<16x1xf32>
    %333 = arith.divf %331, %332 : vector<16x1xf32>
    %334 = vector.broadcast %326 : vector<16x1xf32> to vector<16x32xf32>
    %335 = arith.subf %320, %334 : vector<16x32xf32>
    %cst_116 = arith.constant 9.99999974E-6 : f32
    %336 = vector.broadcast %cst_116 : f32 to vector<16x1xf32>
    %337 = arith.addf %333, %336 : vector<16x1xf32>
    %338 = math.rsqrt %337 : vector<16x1xf32>
    %339 = vector.broadcast %338 : vector<16x1xf32> to vector<16x32xf32>
    %340 = arith.mulf %335, %339 : vector<16x32xf32>
    %341 = vector.broadcast %321 : vector<1x32xf32> to vector<16x32xf32>
    %342 = arith.mulf %340, %341 : vector<16x32xf32>
    %343 = vector.broadcast %322 : vector<1x32xf32> to vector<16x32xf32>
    %344 = arith.addf %342, %343 : vector<16x32xf32>
    %345 = vector.shape_cast %344 : vector<16x32xf32> to vector<2x8x32xf32>
    %c0_117 = arith.constant 0 : index
    %c0_118 = arith.constant 0 : index
    %c0_119 = arith.constant 0 : index
    %346 = vector.load %arg9[%c0_117, %c0_118, %c0_119] : memref<2x8x32xf32, #tpu.memory_space<vmem>>, vector<2x8x32xf32>
    tpu.vector_store %arg9[%c0_117, %c0_118, %c0_119], %345 {strides = array<i32>} : memref<2x8x32xf32, #tpu.memory_space<vmem>>, vector<2x8x32xf32>,
    %c6_120 = arith.constant 6 : index
    %c0_121 = arith.constant 0 : index
    %c0_122 = arith.constant 0 : index
    %347 = vector.load %arg6[%c6_120, %c0_121, %c0_122] : memref<7x32x32xf32, #tpu.memory_space<vmem>>, vector<1x32x32xf32>
    %348 = vector.shape_cast %347 : vector<1x32x32xf32> to vector<32x32xf32>
    %cst_123 = arith.constant dense<0.000000e+00> : vector<16x32xf32>
    %349 = tpu.matmul %344, %348, %cst_123 {dimension_numbers = #tpu.dot_dimension_numbers<[1], [0], [0], [1], [0, 0, 1, 1], [], []>} : vector<16x32xf32>, vector<32x32xf32>, vector<16x32xf32> -> vector<16x32xf32>
    %c17 = arith.constant 17 : index
    %c0_124 = arith.constant 0 : index
    %350 = vector.load %arg7[%c17, %c0_124] : memref<22x32xf32, #tpu.memory_space<vmem>>, vector<1x32xf32>
    %351 = vector.broadcast %350 : vector<1x32xf32> to vector<16x32xf32>
    %352 = arith.addf %349, %351 : vector<16x32xf32>
    %cst_125 = arith.constant 5.000000e-01 : f32
    %353 = vector.broadcast %cst_125 : f32 to vector<16x32xf32>
    %354 = arith.mulf %353, %352 : vector<16x32xf32>
    %cst_126 = arith.constant 0.707106769 : f32
    %355 = vector.broadcast %cst_126 : f32 to vector<16x32xf32>
    %356 = arith.mulf %352, %355 : vector<16x32xf32>
    %357 = math.erf %356 : vector<16x32xf32>
    %cst_127 = arith.constant 1.000000e+00 : f32
    %358 = vector.broadcast %cst_127 : f32 to vector<16x32xf32>
    %359 = arith.addf %358, %357 : vector<16x32xf32>
    %360 = arith.mulf %354, %359 : vector<16x32xf32>
    %c18 = arith.constant 18 : index
    %c0_128 = arith.constant 0 : index
    %361 = vector.load %arg7[%c18, %c0_128] : memref<22x32xf32, #tpu.memory_space<vmem>>, vector<1x32xf32>
    %c19 = arith.constant 19 : index
    %c0_129 = arith.constant 0 : index
    %362 = vector.load %arg7[%c19, %c0_129] : memref<22x32xf32, #tpu.memory_space<vmem>>, vector<1x32xf32>
    %cst_130 = arith.constant dense<0.000000e+00> : vector<16xf32>
    %363 = vector.multi_reduction <add>, %360, %cst_130 [1] : vector<16x32xf32> to vector<16xf32>
    %364 = vector.shape_cast %363 : vector<16xf32> to vector<16x1xf32>
    %cst_131 = arith.constant 3.200000e+01 : f32
    %365 = vector.broadcast %cst_131 : f32 to vector<16x1xf32>
    %366 = arith.divf %364, %365 : vector<16x1xf32>
    %367 = vector.broadcast %366 : vector<16x1xf32> to vector<16x32xf32>
    %368 = arith.subf %360, %367 : vector<16x32xf32>
    %369 = arith.mulf %368, %368 : vector<16x32xf32>
    %cst_132 = arith.constant dense<0.000000e+00> : vector<16xf32>
    %370 = vector.multi_reduction <add>, %369, %cst_132 [1] : vector<16x32xf32> to vector<16xf32>
    %371 = vector.shape_cast %370 : vector<16xf32> to vector<16x1xf32>
    %cst_133 = arith.constant 3.200000e+01 : f32
    %372 = vector.broadcast %cst_133 : f32 to vector<16x1xf32>
    %373 = arith.divf %371, %372 : vector<16x1xf32>
    %374 = vector.broadcast %366 : vector<16x1xf32> to vector<16x32xf32>
    %375 = arith.subf %360, %374 : vector<16x32xf32>
    %cst_134 = arith.constant 9.99999974E-6 : f32
    %376 = vector.broadcast %cst_134 : f32 to vector<16x1xf32>
    %377 = arith.addf %373, %376 : vector<16x1xf32>
    %378 = math.rsqrt %377 : vector<16x1xf32>
    %379 = vector.broadcast %378 : vector<16x1xf32> to vector<16x32xf32>
    %380 = arith.mulf %375, %379 : vector<16x32xf32>
    %381 = vector.broadcast %361 : vector<1x32xf32> to vector<16x32xf32>
    %382 = arith.mulf %380, %381 : vector<16x32xf32>
    %383 = vector.broadcast %362 : vector<1x32xf32> to vector<16x32xf32>
    %384 = arith.addf %382, %383 : vector<16x32xf32>
    %c20 = arith.constant 20 : index
    %c0_135 = arith.constant 0 : index
    %385 = vector.load %arg7[%c20, %c0_135] : memref<22x32xf32, #tpu.memory_space<vmem>>, vector<1x32xf32>
    %c21 = arith.constant 21 : index
    %c0_136 = arith.constant 0 : index
    %386 = vector.load %arg7[%c21, %c0_136] : memref<22x32xf32, #tpu.memory_space<vmem>>, vector<1x1xf32>
    %387 = vector.shape_cast %384 : vector<16x32xf32> to vector<2x8x32xf32>
    %388 = vector.shape_cast %385 : vector<1x32xf32> to vector<1x1x32xf32>
    %389 = vector.broadcast %388 : vector<1x1x32xf32> to vector<2x8x32xf32>
    %390 = arith.mulf %387, %389 : vector<2x8x32xf32>
    %cst_137 = arith.constant dense<0.000000e+00> : vector<2x8xf32>
    %391 = vector.multi_reduction <add>, %390, %cst_137 [2] : vector<2x8x32xf32> to vector<2x8xf32>
    %392 = vector.broadcast %386 : vector<1x1xf32> to vector<2x8xf32>
    %393 = arith.addf %391, %392 : vector<2x8xf32>
    %c0_138 = arith.constant 0 : index
    %c0_139 = arith.constant 0 : index
    %c0_140 = arith.constant 0 : index
    %394 = vector.load %arg8[%c0_138, %c0_139, %c0_140] : memref<1x2x8xf32, #tpu.memory_space<vmem>>, vector<1x2x8xf32>
    %395 = vector.shape_cast %394 : vector<1x2x8xf32> to vector<2x8xf32>
    %396 = vector.shape_cast %393 : vector<2x8xf32> to vector<1x2x8xf32>
    tpu.vector_store %arg8[%c0_138, %c0_139, %c0_140], %396 {strides = array<i32>} : memref<1x2x8xf32, #tpu.memory_space<vmem>>, vector<1x2x8xf32>,
    return
  }
  func.func @transform_0(%arg0: i32) -> (i32, i32, i32) {
    %c0_i32 = arith.constant 0 : i32
    %c0_i32_0 = arith.constant 0 : i32
    %c0_i32_1 = arith.constant 0 : i32
    return %arg0, %c0_i32, %c0_i32_0 : i32, i32, i32
  }
  func.func @transform_1(%arg0: i32) -> (i32, i32) {
    %c0_i32 = arith.constant 0 : i32
    %c0_i32_0 = arith.constant 0 : i32
    %c0_i32_1 = arith.constant 0 : i32
    return %c0_i32, %c0_i32_0 : i32, i32
  }
  func.func @transform_2(%arg0: i32) -> (i32, i32) {
    %c0_i32 = arith.constant 0 : i32
    %c0_i32_0 = arith.constant 0 : i32
    %c0_i32_1 = arith.constant 0 : i32
    return %c0_i32, %c0_i32_0 : i32, i32
  }
  func.func @transform_3(%arg0: i32) -> (i32, i32, i32) {
    %c0_i32 = arith.constant 0 : i32
    %c0_i32_0 = arith.constant 0 : i32
    %c0_i32_1 = arith.constant 0 : i32
    %c0_i32_2 = arith.constant 0 : i32
    return %c0_i32, %c0_i32_0, %c0_i32_1 : i32, i32, i32
  }
  func.func @transform_4(%arg0: i32) -> (i32, i32) {
    %c0_i32 = arith.constant 0 : i32
    %c0_i32_0 = arith.constant 0 : i32
    %c0_i32_1 = arith.constant 0 : i32
    return %c0_i32, %c0_i32_0 : i32, i32
  }
  func.func @transform_5(%arg0: i32) -> (i32, i32, i32) {
    %c0_i32 = arith.constant 0 : i32
    %c0_i32_0 = arith.constant 0 : i32
    %c0_i32_1 = arith.constant 0 : i32
    %c0_i32_2 = arith.constant 0 : i32
    return %c0_i32, %c0_i32_0, %c0_i32_1 : i32, i32, i32
  }
  func.func @transform_6(%arg0: i32) -> (i32, i32) {
    %c0_i32 = arith.constant 0 : i32
    %c0_i32_0 = arith.constant 0 : i32
    %c0_i32_1 = arith.constant 0 : i32
    return %c0_i32, %c0_i32_0 : i32, i32
  }
  func.func @transform_7(%arg0: i32) -> (i32, i32, i32) {
    %c0_i32 = arith.constant 0 : i32
    %c0_i32_0 = arith.constant 0 : i32
    %c0_i32_1 = arith.constant 0 : i32
    return %arg0, %c0_i32, %c0_i32_0 : i32, i32, i32
  }
  func.func @transform_8(%arg0: i32) -> (i32, i32, i32) {
    %c0_i32 = arith.constant 0 : i32
    %c0_i32_0 = arith.constant 0 : i32
    %c0_i32_1 = arith.constant 0 : i32
    return %arg0, %c0_i32, %c0_i32_0 : i32, i32, i32
  }
}

</mosaic_0001>

<llo_original>
// kernel: tpu_custom_call.1
$region0: #{tpu_custom_call.1}
  #allocation0 [shape = 'u32[]', space=smem, size = 0x4, offset = 0x4, fixed_abs, tag = 'smem constant byte address 0x4 - core index']
  #allocation1 [shape = 'u32[144,128]{1,0:T(1,128)}', space=vmem, size = 0x12000, scoped, tag = 'internal scratch']
  %s0 = inlined_call_operand.hbm [shape: f32[2,8,16], index: 0, kind: input, shape index: {}]
  %s1 = inlined_call_operand.vmem [shape: f32[2,16], index: 1, kind: input, shape index: {}]
  %s2 = inlined_call_operand.hbm [shape: f32[16,32], index: 2, kind: input, shape index: {}]
  %s3 = inlined_call_operand.hbm [shape: f32[2,32,96], index: 3, kind: input, shape index: {}]
  %s4 = inlined_call_operand.vmem [shape: f32[2,96], index: 4, kind: input, shape index: {}]
  %s5 = inlined_call_operand.hbm [shape: f32[7,32,32], index: 5, kind: input, shape index: {}]
  %s6 = inlined_call_operand.hbm [shape: f32[22,32], index: 6, kind: input, shape index: {}]
  %s7 = inlined_call_operand.hbm [shape: f32[1,2,8], index: 7, kind: output, shape index: {0}]
  %s8 = inlined_call_operand.hbm [shape: f32[2,8,32], index: 8, kind: output, shape index: {1}]
  %9 = xla_tuple %s7, %s8
  %s10 = sld [smem:[#allocation0]]
  $region66: #{tpu_custom_call.1} parent=0
    _
  %s12 = ssub.s32 1, %s10
  %s13 = scalar_select 0, %s12, %s10
  $region1: #{tpu_custom_call.1} parent=0
    #allocation2 [shape = 'u8[8192]{0}', space=vmem, size = 0x2000, scoped, tag = 'input window, operand 0, single buffered']
    #allocation3 [shape = 's32[1]{0}', space=sflag, size = 0x4, scoped, tag = 'scoped memory for tpu_custom_call.1']
    #allocation4 [shape = 's32[1]{0}', space=sflag, size = 0x4, scoped, tag = 'scoped memory for tpu_custom_call.1']
    #allocation5 [shape = 'u8[8192]{0}', space=vmem, size = 0x2000, scoped, tag = 'input window, operand 2, single buffered']
    #allocation6 [shape = 's32[1]{0}', space=sflag, size = 0x4, scoped, tag = 'scoped memory for tpu_custom_call.1']
    #allocation7 [shape = 'u8[32768]{0}', space=vmem, size = 0x8000, scoped, tag = 'input window, operand 3, single buffered']
    #allocation8 [shape = 'u8[114688]{0}', space=vmem, size = 0x1c000, scoped, tag = 'input window, operand 5, single buffered']
    #allocation9 [shape = 's32[1]{0}', space=sflag, size = 0x4, scoped, tag = 'scoped memory for tpu_custom_call.1']
    #allocation10 [shape = 'u8[12288]{0}', space=vmem, size = 0x3000, scoped, tag = 'input window, operand 6, single buffered']
    #allocation11 [shape = 'u8[1024]{0}', space=vmem, size = 0x400, scoped, tag = 'output window, operand 0, single buffered']
    #allocation12 [shape = 'u8[8192]{0}', space=vmem, size = 0x2000, scoped, tag = 'output window, operand 1, single buffered']
    #allocation13 [shape = 's32[1]{0}', space=sflag, size = 0x4, scoped, tag = 'scoped memory for tpu_custom_call.1']
    %14 = vsyncpa [#allocation3], 0
    %15 = vsyncpa [#allocation6], 0
    %16 = vsyncpa [#allocation9], 0
    %17 = vsyncpa [#allocation4], 0
    %18 = vsyncpa [#allocation13], 0
    // Predicated region
    $region2: #{tpu_custom_call.1} parent=1 // pred_check
      _
    $region3: #{tpu_custom_call.1} parent=1 // pred_check_branch
      %20 = sbr.rel (0) target = $region5
    $region4: #{tpu_custom_call.1} parent=1 // pred_region
      %s22 = ssub.s32 256, 256
      %23 = vsyncadd [#allocation3], %s22
      %s24 = sshll.u32 [#allocation2], 4
      %s25 = int_to_ptr.vmem [resolvable:$true] %s24
      %30 = dma.hbm_to_vmem [thread:$0]  %s0, 256, %s25, [#allocation3], 128, 128, 8
    $region5: #{tpu_custom_call.1} parent=1 // pred_fallthru
      _
    // Predicated region
    $region6: #{tpu_custom_call.1} parent=1 // pred_check
      _
    $region7: #{tpu_custom_call.1} parent=1 // pred_check_branch
      %32 = sbr.rel (0) target = $region9
    $region8: #{tpu_custom_call.1} parent=1 // pred_region
      _
    $region9: #{tpu_custom_call.1} parent=1 // pred_fallthru
      _
    // Predicated region
    $region10: #{tpu_custom_call.1} parent=1 // pred_check
      _
    $region11: #{tpu_custom_call.1} parent=1 // pred_check_branch
      %34 = sbr.rel (0) target = $region13
    $region12: #{tpu_custom_call.1} parent=1 // pred_region
      %s36 = ssub.s32 256, 256
      %37 = vsyncadd [#allocation6], %s36
      %s38 = sshll.u32 [#allocation5], 4
      %s39 = int_to_ptr.vmem [resolvable:$true] %s38
      %44 = dma.hbm_to_vmem [thread:$0]  %s2, 256, %s39, [#allocation6], 128, 128, 8
    $region13: #{tpu_custom_call.1} parent=1 // pred_fallthru
      _
    // Predicated region
    $region14: #{tpu_custom_call.1} parent=1 // pred_check
      _
    $region15: #{tpu_custom_call.1} parent=1 // pred_check_branch
      %46 = sbr.rel (0) target = $region17
    $region16: #{tpu_custom_call.1} parent=1 // pred_region
      %s48 = ssub.s32 1024, 1024
      %49 = vsyncadd [#allocation6], %s48
      %s50 = sshll.u32 [#allocation7], 4
      %s51 = int_to_ptr.vmem [resolvable:$true] %s50
      %56 = dma.hbm_to_vmem [thread:$0]  %s3, 1024, %s51, [#allocation6], 128, 128, 8
    $region17: #{tpu_custom_call.1} parent=1 // pred_fallthru
      _
    // Predicated region
    $region18: #{tpu_custom_call.1} parent=1 // pred_check
      _
    $region19: #{tpu_custom_call.1} parent=1 // pred_check_branch
      %58 = sbr.rel (0) target = $region21
    $region20: #{tpu_custom_call.1} parent=1 // pred_region
      _
    $region21: #{tpu_custom_call.1} parent=1 // pred_fallthru
      _
    // Predicated region
    $region22: #{tpu_custom_call.1} parent=1 // pred_check
      _
    $region23: #{tpu_custom_call.1} parent=1 // pred_check_branch
      %60 = sbr.rel (0) target = $region25
    $region24: #{tpu_custom_call.1} parent=1 // pred_region
      %s62 = ssub.s32 3584, 3584
      %63 = vsyncadd [#allocation9], %s62
      %s64 = sshll.u32 [#allocation8], 4
      %s65 = int_to_ptr.vmem [resolvable:$true] %s64
      %70 = dma.hbm_to_vmem [thread:$0]  %s5, 3584, %s65, [#allocation9], 128, 128, 8
    $region25: #{tpu_custom_call.1} parent=1 // pred_fallthru
      _
    // Predicated region
    $region26: #{tpu_custom_call.1} parent=1 // pred_check
      _
    $region27: #{tpu_custom_call.1} parent=1 // pred_check_branch
      %72 = sbr.rel (0) target = $region29
    $region28: #{tpu_custom_call.1} parent=1 // pred_region
      %s74 = ssub.s32 384, 384
      %75 = vsyncadd [#allocation9], %s74
      %s76 = sshll.u32 [#allocation10], 4
      %s77 = int_to_ptr.vmem [resolvable:$true] %s76
      %82 = dma.hbm_to_vmem [thread:$0]  %s6, 384, %s77, [#allocation9], 128, 128, 8
    $region29: #{tpu_custom_call.1} parent=1 // pred_fallthru
      _
    // Predicated region
    $region30: #{tpu_custom_call.1} parent=1 // pred_check
      _
    $region31: #{tpu_custom_call.1} parent=1 // pred_check_branch
      %84 = sbr.rel (0) target = $region33
    $region32: #{tpu_custom_call.1} parent=1 // pred_region
      %85 = dma.done [#allocation3], 256
    $region33: #{tpu_custom_call.1} parent=1 // pred_fallthru
      _
    // Predicated region
    $region34: #{tpu_custom_call.1} parent=1 // pred_check
      _
    $region35: #{tpu_custom_call.1} parent=1 // pred_check_branch
      %87 = sbr.rel (0) target = $region37
    $region36: #{tpu_custom_call.1} parent=1 // pred_region
      %88 = dma.done [#allocation6], 256
    $region37: #{tpu_custom_call.1} parent=1 // pred_fallthru
      _
    // Predicated region
    $region38: #{tpu_custom_call.1} parent=1 // pred_check
      _
    $region39: #{tpu_custom_call.1} parent=1 // pred_check_branch
      %90 = sbr.rel (0) target = $region41
    $region40: #{tpu_custom_call.1} parent=1 // pred_region
      %91 = dma.done [#allocation6], 1024
    $region41: #{tpu_custom_call.1} parent=1 // pred_fallthru
      _
    // Predicated region
    $region42: #{tpu_custom_call.1} parent=1 // pred_check
      _
    $region43: #{tpu_custom_call.1} parent=1 // pred_check_branch
      %93 = sbr.rel (0) target = $region45
    $region44: #{tpu_custom_call.1} parent=1 // pred_region
      %94 = dma.done [#allocation9], 3584
    $region45: #{tpu_custom_call.1} parent=1 // pred_fallthru
      _
    // Predicated region
    $region46: #{tpu_custom_call.1} parent=1 // pred_check
      _
    $region47: #{tpu_custom_call.1} parent=1 // pred_check_branch
      %96 = sbr.rel (0) target = $region49
    $region48: #{tpu_custom_call.1} parent=1 // pred_region
      %97 = dma.done [#allocation9], 384
    $region49: #{tpu_custom_call.1} parent=1 // pred_fallthru
      _
    %v98 = vld [vmem:[#allocation2] sm:$0xff]
    %v99 = vld [vmem:[#allocation2 + $0x8] sm:$0xff]
    %v100 = vld [vmem:[%s1] sm:$0x1]
    %v101 = vld [vmem:[%s1 + $0x1] sm:$0x1]
    %vm102 = vcmask 130048
    %v103 = vsel %vm102, %v98, 0.0
    %104 = vadd.xlane.f32.xlu0 %v103
    %v105 = vpop.xlane.xlu0 %104
    %v106 = vsel %vm102, %v99, 0.0
    %107 = vadd.xlane.f32.xlu0 %v106
    %v108 = vpop.xlane.xlu0 %107
    %v109 = vrcp.pop 16.0
    %v110 = vmul.f32 %v105, %v109
    %v111 = vmul.f32 %v108, %v109
    %v112 = vsub.f32 %v98, %v110
    %v113 = vsub.f32 %v99, %v111
    %v114 = vmul.f32 %v112, %v112
    %v115 = vmul.f32 %v113, %v113
    %v116 = vsel %vm102, %v114, 0.0
    %117 = vadd.xlane.f32.xlu0 %v116
    %v118 = vpop.xlane.xlu0 %117
    %v119 = vsel %vm102, %v115, 0.0
    %120 = vadd.xlane.f32.xlu0 %v119
    %v121 = vpop.xlane.xlu0 %120
    %v122 = vmul.f32 %v118, %v109
    %v123 = vmul.f32 %v121, %v109
    %v124 = vadd.f32 %v122, 1e-05
    %v125 = vadd.f32 %v123, 1e-05
    %v126 = vrsqrt.pop %v124
    %v127 = vrsqrt.pop %v125
    %v128 = vmul.f32 %v112, %v126
    %v129 = vmul.f32 %v113, %v127
    %v130 = vlaneseq
    %v131 = vshrl.u32 %v130, 7
    %v132 = vsub.s32 0, %v131
    %v133 = vrot.slane %v100, %v132
    %v134 = vmul.f32 %v128, %v133
    %v135 = vmul.f32 %v129, %v133
    %v136 = vlaneseq
    %v137 = vshrl.u32 %v136, 7
    %v138 = vsub.s32 0, %v137
    %v139 = vrot.slane %v101, %v138
    %v140 = vadd.f32 %v134, %v139
    %v141 = vadd.f32 %v135, %v139
    %v142 = vld [vmem:[#allocation5] sm:$0xff]
    %v143 = vld [vmem:[#allocation5 + $0x8] sm:$0xff]
    %v144 = vld [vmem:[#allocation10] sm:$0x1]
    %v145 = vlaneseq
    %v146 = vshrl.u32 %v145, 7
    %v147 = vsub.s32 0, %v146
    %v148 = vrot.slane %v144, %v147
    %v150 = vsel %vm102, %v140, 0
    %v153 = vsel %vm102, %v141, 0
    %155 = vmatprep.subr.mxu0 0.0
    %156 = vmatpush1.msra.mxu0 %v142
    %157 = vmatprep.subr.mxu0 0.0
    %158 = vmatpush1.msra.mxu0 %v143
    %159 = vmatprep.subr.mxu0 0.0
    %160 = vmatpush1.msra.mxu0 0.0
    %161 = vmatprep.subr.mxu0 0.0
    %162 = vmatpush1.msra.mxu0 0.0
    %163 = vmatprep.subr.mxu0 0.0
    %164 = vmatpush1.msra.mxu0 0.0
    %165 = vmatprep.subr.mxu0 0.0
    %166 = vmatpush1.msra.mxu0 0.0
    %167 = vmatprep.subr.mxu0 0.0
    %168 = vmatpush1.msra.mxu0 0.0
    %169 = vmatprep.subr.mxu0 0.0
    %170 = vmatpush1.msra.mxu0 0.0
    %171 = vmatprep.subr.mxu0 0.0
    %172 = vmatpush1.msra.mxu0 0.0
    %173 = vmatprep.subr.mxu0 0.0
    %174 = vmatpush1.msra.mxu0 0.0
    %175 = vmatprep.subr.mxu0 0.0
    %176 = vmatpush1.msra.mxu0 0.0
    %177 = vmatprep.subr.mxu0 0.0
    %178 = vmatpush1.msra.mxu0 0.0
    %179 = vmatprep.subr.mxu0 0.0
    %180 = vmatpush1.msra.mxu0 0.0
    %181 = vmatprep.subr.mxu0 0.0
    %182 = vmatpush1.msra.mxu0 0.0
    %183 = vmatprep.subr.mxu0 0.0
    %184 = vmatpush1.msra.mxu0 0.0
    %185 = vmatprep.subr.mxu0 0.0
    %186 = vmatpush1.msra.mxu0 0.0
    %187 = vmatprep.subr.mxu0 0.0
    %188 = vmatpush1.msra.mxu0 0.0
    %189 = vmatprep.subr.mxu0 0.0
    %190 = vmatpush1.msra.mxu0 0.0
    %191 = vmatprep.subr.mxu0 0.0
    %192 = vmatpush1.msra.mxu0 0.0
    %193 = vmatprep.subr.mxu0 0.0
    %194 = vmatpush1.msra.mxu0 0.0
    %195 = vmatprep.subr.mxu0 0.0
    %196 = vmatpush1.msra.mxu0 0.0
    %197 = vmatprep.subr.mxu0 0.0
    %198 = vmatpush1.msra.mxu0 0.0
    %199 = vmatprep.subr.mxu0 0.0
    %200 = vmatpush1.msra.mxu0 0.0
    %201 = vmatprep.subr.mxu0 0.0
    %202 = vmatpush1.msra.mxu0 0.0
    %203 = vmatprep.subr.mxu0 0.0
    %204 = vmatpush1.msra.mxu0 0.0
    %205 = vmatprep.subr.mxu0 0.0
    %206 = vmatpush1.msra.mxu0 0.0
    %207 = vmatprep.subr.mxu0 0.0
    %208 = vmatpush1.msra.mxu0 0.0
    %209 = vmatprep.subr.mxu0 0.0
    %210 = vmatpush1.msra.mxu0 0.0
    %211 = vmatprep.subr.mxu0 0.0
    %212 = vmatpush1.msra.mxu0 0.0
    %213 = vmatprep.subr.mxu0 0.0
    %214 = vmatpush1.msra.mxu0 0.0
    %215 = vmatprep.subr.mxu0 0.0
    %216 = vmatpush1.msra.mxu0 0.0
    %217 = vmatprep.subr.mxu0 0.0
    %218 = vmatpush1.msra.mxu0 0.0
    %219 = vmatprep.mubr.f32.mxu0 0.0
    %220 = vmatmul.mubr.f32.gmra.mrb[0].mxu0 %v150
    %v221 = vpop.f32.mrb[0].mxu0
    %v222 = vadd.f32 %v148, %v221
    %v223 = vpop.f32.mrb[0].mxu0
    %224 = vmatprep.mubr.f32.mxu0 0.0
    %225 = vmatmul.mubr.f32.gmra.mrb[0].mxu0 %v153
    %v226 = vpop.f32.mrb[0].mxu0
    %v227 = vadd.f32 %v148, %v226
    %v228 = vpop.f32.mrb[0].mxu0
    %229 = vdwg.mxu0
    %v230 = vmul.f32 %v222, 0.5
    %v231 = vmul.f32 %v227, 0.5
    %v232 = vmul.f32 %v222, 0.70710677
    %v233 = vmul.f32 %v227, 0.70710677
    %v234 = verf.f32.pop %v232
    %v235 = verf.f32.pop %v233
    %v236 = vadd.f32 %v234, 1.0
    %v237 = vadd.f32 %v235, 1.0
    %v238 = vmul.f32 %v230, %v236
    %v239 = vmul.f32 %v231, %v237
    %v240 = vld [vmem:[#allocation10 + $0x1] sm:$0x1]
    %v241 = vld [vmem:[#allocation10 + $0x2] sm:$0x1]
    %vm242 = vcmask 261120
    %v243 = vsel %vm242, %v238, 0.0
    %244 = vadd.xlane.f32.xlu0 %v243
    %v245 = vpop.xlane.xlu0 %244
    %v246 = vsel %vm242, %v239, 0.0
    %247 = vadd.xlane.f32.xlu0 %v246
    %v248 = vpop.xlane.xlu0 %247
    %v249 = vrcp.pop 32.0
    %v250 = vmul.f32 %v245, %v249
    %v251 = vmul.f32 %v248, %v249
    %v252 = vsub.f32 %v238, %v250
    %v253 = vsub.f32 %v239, %v251
    %v254 = vmul.f32 %v252, %v252
    %v255 = vmul.f32 %v253, %v253
    %v256 = vsel %vm242, %v254, 0.0
    %257 = vadd.xlane.f32.xlu0 %v256
    %v258 = vpop.xlane.xlu0 %257
    %v259 = vsel %vm242, %v255, 0.0
    %260 = vadd.xlane.f32.xlu0 %v259
    %v261 = vpop.xlane.xlu0 %260
    %v262 = vmul.f32 %v258, %v249
    %v263 = vmul.f32 %v261, %v249
    %v264 = vadd.f32 %v262, 1e-05
    %v265 = vadd.f32 %v263, 1e-05
    %v266 = vrsqrt.pop %v264
    %v267 = vrsqrt.pop %v265
    %v268 = vmul.f32 %v252, %v266
    %v269 = vmul.f32 %v253, %v267
    %v270 = vlaneseq
    %v271 = vshrl.u32 %v270, 7
    %v272 = vsub.s32 0, %v271
    %v273 = vrot.slane %v240, %v272
    %v274 = vmul.f32 %v268, %v273
    %v275 = vmul.f32 %v269, %v273
    %v276 = vlaneseq
    %v277 = vshrl.u32 %v276, 7
    %v278 = vsub.s32 0, %v277
    %v279 = vrot.slane %v241, %v278
    %v280 = vadd.f32 %v274, %v279
    %v281 = vadd.f32 %v275, %v279
    %v282 = vld [vmem:[#allocation7] sm:$0xff]
    %v283 = vld [vmem:[#allocation7 + $0x8] sm:$0xff]
    %v284 = vld [vmem:[#allocation7 + $0x10] sm:$0xff]
    %v285 = vld [vmem:[#allocation7 + $0x18] sm:$0xff]
    %v286 = vld [vmem:[%s4] sm:$0x1]
    %v287 = vlaneseq
    %v288 = vshrl.u32 %v287, 7
    %v289 = vsub.s32 0, %v288
    %v290 = vrot.slane %v286, %v289
    %v292 = vsel %vm242, %v280, 0
    %v295 = vsel %vm242, %v281, 0
    %297 = vmatprep.subr.mxu0 0.0
    %298 = vmatpush1.msra.mxu0 %v282
    %299 = vmatprep.subr.mxu0 0.0
    %300 = vmatpush1.msra.mxu0 %v283
    %301 = vmatprep.subr.mxu0 0.0
    %302 = vmatpush1.msra.mxu0 %v284
    %303 = vmatprep.subr.mxu0 0.0
    %304 = vmatpush1.msra.mxu0 %v285
    %305 = vmatprep.subr.mxu0 0.0
    %306 = vmatpush1.msra.mxu0 0.0
    %307 = vmatprep.subr.mxu0 0.0
    %308 = vmatpush1.msra.mxu0 0.0
    %309 = vmatprep.subr.mxu0 0.0
    %310 = vmatpush1.msra.mxu0 0.0
    %311 = vmatprep.subr.mxu0 0.0
    %312 = vmatpush1.msra.mxu0 0.0
    %313 = vmatprep.subr.mxu0 0.0
    %314 = vmatpush1.msra.mxu0 0.0
    %315 = vmatprep.subr.mxu0 0.0
    %316 = vmatpush1.msra.mxu0 0.0
    %317 = vmatprep.subr.mxu0 0.0
    %318 = vmatpush1.msra.mxu0 0.0
    %319 = vmatprep.subr.mxu0 0.0
    %320 = vmatpush1.msra.mxu0 0.0
    %321 = vmatprep.subr.mxu0 0.0
    %322 = vmatpush1.msra.mxu0 0.0
    %323 = vmatprep.subr.mxu0 0.0
    %324 = vmatpush1.msra.mxu0 0.0
    %325 = vmatprep.subr.mxu0 0.0
    %326 = vmatpush1.msra.mxu0 0.0
    %327 = vmatprep.subr.mxu0 0.0
    %328 = vmatpush1.msra.mxu0 0.0
    %329 = vmatprep.subr.mxu0 0.0
    %330 = vmatpush1.msra.mxu0 0.0
    %331 = vmatprep.subr.mxu0 0.0
    %332 = vmatpush1.msra.mxu0 0.0
    %333 = vmatprep.subr.mxu0 0.0
    %334 = vmatpush1.msra.mxu0 0.0
    %335 = vmatprep.subr.mxu0 0.0
    %336 = vmatpush1.msra.mxu0 0.0
    %337 = vmatprep.subr.mxu0 0.0
    %338 = vmatpush1.msra.mxu0 0.0
    %339 = vmatprep.subr.mxu0 0.0
    %340 = vmatpush1.msra.mxu0 0.0
    %341 = vmatprep.subr.mxu0 0.0
    %342 = vmatpush1.msra.mxu0 0.0
    %343 = vmatprep.subr.mxu0 0.0
    %344 = vmatpush1.msra.mxu0 0.0
    %345 = vmatprep.subr.mxu0 0.0
    %346 = vmatpush1.msra.mxu0 0.0
    %347 = vmatprep.subr.mxu0 0.0
    %348 = vmatpush1.msra.mxu0 0.0
    %349 = vmatprep.subr.mxu0 0.0
    %350 = vmatpush1.msra.mxu0 0.0
    %351 = vmatprep.subr.mxu0 0.0
    %352 = vmatpush1.msra.mxu0 0.0
    %353 = vmatprep.subr.mxu0 0.0
    %354 = vmatpush1.msra.mxu0 0.0
    %355 = vmatprep.subr.mxu0 0.0
    %356 = vmatpush1.msra.mxu0 0.0
    %357 = vmatprep.subr.mxu0 0.0
    %358 = vmatpush1.msra.mxu0 0.0
    %359 = vmatprep.subr.mxu0 0.0
    %360 = vmatpush1.msra.mxu0 0.0
    %361 = vmatprep.mubr.f32.mxu0 0.0
    %362 = vmatmul.mubr.f32.gmra.mrb[0].mxu0 %v292
    %v363 = vpop.f32.mrb[0].mxu0
    %v364 = vadd.f32 %v290, %v363
    %v365 = vpop.f32.mrb[0].mxu0
    %366 = vmatprep.mubr.f32.mxu0 0.0
    %367 = vmatmul.mubr.f32.gmra.mrb[0].mxu0 %v295
    %v368 = vpop.f32.mrb[0].mxu0
    %v369 = vadd.f32 %v290, %v368
    %v370 = vpop.f32.mrb[0].mxu0
    %371 = vdwg.mxu0
    %374 = vrot.lane.b32.xlu0 %v364, 120
    %v375 = vpop.permute.xlu0 %374
    %376 = vrot.lane.b32.xlu0 %v369, 120
    %v377 = vpop.permute.xlu0 %376
    %378 = vrot.lane.b32.xlu0 %v364, 112
    %v379 = vpop.permute.xlu0 %378
    %380 = vrot.lane.b32.xlu0 %v369, 112
    %v381 = vpop.permute.xlu0 %380
    %382 = vrot.lane.b32.xlu0 %v364, 104
    %v383 = vpop.permute.xlu0 %382
    %384 = vrot.lane.b32.xlu0 %v369, 104
    %v385 = vpop.permute.xlu0 %384
    %386 = vrot.lane.b32.xlu0 %v364, 96
    %v387 = vpop.permute.xlu0 %386
    %vm388 = vcmask 64512
    %v389 = vsel %vm388, %v387, 0
    %v391 = vsel %vm388, %v364, 0
    %393 = vmatprep.subr.mxu0 0.0
    %394 = vmatpush1.xpose.msra.mxu0 %v391
    %395 = vmatprep.subr.mxu0 0.0
    %396 = vmatpush1.xpose.msra.mxu0 0.0
    %397 = vmatprep.subr.mxu0 0.0
    %398 = vmatpush1.xpose.msra.mxu0 0.0
    %399 = vmatprep.subr.mxu0 0.0
    %400 = vmatpush1.xpose.msra.mxu0 0.0
    %401 = vmatprep.subr.mxu0 0.0
    %402 = vmatpush1.xpose.msra.mxu0 0.0
    %403 = vmatprep.subr.mxu0 0.0
    %404 = vmatpush1.xpose.msra.mxu0 0.0
    %405 = vmatprep.subr.mxu0 0.0
    %406 = vmatpush1.xpose.msra.mxu0 0.0
    %407 = vmatprep.subr.mxu0 0.0
    %408 = vmatpush1.xpose.msra.mxu0 0.0
    %409 = vmatprep.subr.mxu0 0.0
    %410 = vmatpush1.xpose.msra.mxu0 0.0
    %411 = vmatprep.subr.mxu0 0.0
    %412 = vmatpush1.xpose.msra.mxu0 0.0
    %413 = vmatprep.subr.mxu0 0.0
    %414 = vmatpush1.xpose.msra.mxu0 0.0
    %415 = vmatprep.subr.mxu0 0.0
    %416 = vmatpush1.xpose.msra.mxu0 0.0
    %417 = vmatprep.subr.mxu0 0.0
    %418 = vmatpush1.xpose.msra.mxu0 0.0
    %419 = vmatprep.subr.mxu0 0.0
    %420 = vmatpush1.xpose.msra.mxu0 0.0
    %421 = vmatprep.subr.mxu0 0.0
    %422 = vmatpush1.xpose.msra.mxu0 0.0
    %423 = vmatprep.subr.mxu0 0.0
    %424 = vmatpush1.xpose.msra.mxu0 0.0
    %425 = vmatprep.subr.mxu0 0.0
    %426 = vmatpush1.xpose.msra.mxu0 0.0
    %427 = vmatprep.subr.mxu0 0.0
    %428 = vmatpush1.xpose.msra.mxu0 0.0
    %429 = vmatprep.subr.mxu0 0.0
    %430 = vmatpush1.xpose.msra.mxu0 0.0
    %431 = vmatprep.subr.mxu0 0.0
    %432 = vmatpush1.xpose.msra.mxu0 0.0
    %433 = vmatprep.subr.mxu0 0.0
    %434 = vmatpush1.xpose.msra.mxu0 0.0
    %435 = vmatprep.subr.mxu0 0.0
    %436 = vmatpush1.xpose.msra.mxu0 0.0
    %437 = vmatprep.subr.mxu0 0.0
    %438 = vmatpush1.xpose.msra.mxu0 0.0
    %439 = vmatprep.subr.mxu0 0.0
    %440 = vmatpush1.xpose.msra.mxu0 0.0
    %441 = vmatprep.subr.mxu0 0.0
    %442 = vmatpush1.xpose.msra.mxu0 0.0
    %443 = vmatprep.subr.mxu0 0.0
    %444 = vmatpush1.xpose.msra.mxu0 0.0
    %445 = vmatprep.subr.mxu0 0.0
    %446 = vmatpush1.xpose.msra.mxu0 0.0
    %447 = vmatprep.subr.mxu0 0.0
    %448 = vmatpush1.xpose.msra.mxu0 0.0
    %449 = vmatprep.subr.mxu0 0.0
    %450 = vmatpush1.xpose.msra.mxu0 0.0
    %451 = vmatprep.subr.mxu0 0.0
    %452 = vmatpush1.xpose.msra.mxu0 0.0
    %453 = vmatprep.subr.mxu0 0.0
    %454 = vmatpush1.xpose.msra.mxu0 0.0
    %455 = vmatprep.subr.mxu0 0.0
    %456 = vmatpush1.xpose.msra.mxu0 0.0
    %457 = vmatprep.mubr.f32.mxu0 0.0
    %458 = vmatmul.mubr.f32.gmra.mrb[0].mxu0 %v389
    %v459 = vpop.f32.mrb[0].mxu0
    %v460 = vadd.f32 0.0, %v459
    %v461 = vpop.f32.mrb[0].mxu0
    %462 = vdwg.mxu0
    %463 = vrot.lane.b32.xlu0 %v369, 96
    %v464 = vpop.permute.xlu0 %463
    %v465 = vsel %vm388, %v464, 0
    %v467 = vsel %vm388, %v369, 0
    %469 = vmatprep.subr.mxu0 0.0
    %470 = vmatpush1.xpose.msra.mxu0 %v467
    %471 = vmatprep.subr.mxu0 0.0
    %472 = vmatpush1.xpose.msra.mxu0 0.0
    %473 = vmatprep.subr.mxu0 0.0
    %474 = vmatpush1.xpose.msra.mxu0 0.0
    %475 = vmatprep.subr.mxu0 0.0
    %476 = vmatpush1.xpose.msra.mxu0 0.0
    %477 = vmatprep.subr.mxu0 0.0
    %478 = vmatpush1.xpose.msra.mxu0 0.0
    %479 = vmatprep.subr.mxu0 0.0
    %480 = vmatpush1.xpose.msra.mxu0 0.0
    %481 = vmatprep.subr.mxu0 0.0
    %482 = vmatpush1.xpose.msra.mxu0 0.0
    %483 = vmatprep.subr.mxu0 0.0
    %484 = vmatpush1.xpose.msra.mxu0 0.0
    %485 = vmatprep.subr.mxu0 0.0
    %486 = vmatpush1.xpose.msra.mxu0 0.0
    %487 = vmatprep.subr.mxu0 0.0
    %488 = vmatpush1.xpose.msra.mxu0 0.0
    %489 = vmatprep.subr.mxu0 0.0
    %490 = vmatpush1.xpose.msra.mxu0 0.0
    %491 = vmatprep.subr.mxu0 0.0
    %492 = vmatpush1.xpose.msra.mxu0 0.0
    %493 = vmatprep.subr.mxu0 0.0
    %494 = vmatpush1.xpose.msra.mxu0 0.0
    %495 = vmatprep.subr.mxu0 0.0
    %496 = vmatpush1.xpose.msra.mxu0 0.0
    %497 = vmatprep.subr.mxu0 0.0
    %498 = vmatpush1.xpose.msra.mxu0 0.0
    %499 = vmatprep.subr.mxu0 0.0
    %500 = vmatpush1.xpose.msra.mxu0 0.0
    %501 = vmatprep.subr.mxu0 0.0
    %502 = vmatpush1.xpose.msra.mxu0 0.0
    %503 = vmatprep.subr.mxu0 0.0
    %504 = vmatpush1.xpose.msra.mxu0 0.0
    %505 = vmatprep.subr.mxu0 0.0
    %506 = vmatpush1.xpose.msra.mxu0 0.0
    %507 = vmatprep.subr.mxu0 0.0
    %508 = vmatpush1.xpose.msra.mxu0 0.0
    %509 = vmatprep.subr.mxu0 0.0
    %510 = vmatpush1.xpose.msra.mxu0 0.0
    %511 = vmatprep.subr.mxu0 0.0
    %512 = vmatpush1.xpose.msra.mxu0 0.0
    %513 = vmatprep.subr.mxu0 0.0
    %514 = vmatpush1.xpose.msra.mxu0 0.0
    %515 = vmatprep.subr.mxu0 0.0
    %516 = vmatpush1.xpose.msra.mxu0 0.0
    %517 = vmatprep.subr.mxu0 0.0
    %518 = vmatpush1.xpose.msra.mxu0 0.0
    %519 = vmatprep.subr.mxu0 0.0
    %520 = vmatpush1.xpose.msra.mxu0 0.0
    %521 = vmatprep.subr.mxu0 0.0
    %522 = vmatpush1.xpose.msra.mxu0 0.0
    %523 = vmatprep.subr.mxu0 0.0
    %524 = vmatpush1.xpose.msra.mxu0 0.0
    %525 = vmatprep.subr.mxu0 0.0
    %526 = vmatpush1.xpose.msra.mxu0 0.0
    %527 = vmatprep.subr.mxu0 0.0
    %528 = vmatpush1.xpose.msra.mxu0 0.0
    %529 = vmatprep.subr.mxu0 0.0
    %530 = vmatpush1.xpose.msra.mxu0 0.0
    %531 = vmatprep.subr.mxu0 0.0
    %532 = vmatpush1.xpose.msra.mxu0 0.0
    %533 = vmatprep.mubr.f32.mxu0 0.0
    %534 = vmatmul.mubr.f32.gmra.mrb[0].mxu0 %v465
    %v535 = vpop.f32.mrb[0].mxu0
    %v536 = vadd.f32 0.0, %v535
    %v537 = vpop.f32.mrb[0].mxu0
    %538 = vdwg.mxu0
    %539 = vrot.lane.b32.xlu0 %v375, 96
    %v540 = vpop.permute.xlu0 %539
    %v541 = vsel %vm388, %v540, 0
    %v543 = vsel %vm388, %v375, 0
    %545 = vmatprep.subr.mxu0 0.0
    %546 = vmatpush1.xpose.msra.mxu0 %v543
    %547 = vmatprep.subr.mxu0 0.0
    %548 = vmatpush1.xpose.msra.mxu0 0.0
    %549 = vmatprep.subr.mxu0 0.0
    %550 = vmatpush1.xpose.msra.mxu0 0.0
    %551 = vmatprep.subr.mxu0 0.0
    %552 = vmatpush1.xpose.msra.mxu0 0.0
    %553 = vmatprep.subr.mxu0 0.0
    %554 = vmatpush1.xpose.msra.mxu0 0.0
    %555 = vmatprep.subr.mxu0 0.0
    %556 = vmatpush1.xpose.msra.mxu0 0.0
    %557 = vmatprep.subr.mxu0 0.0
    %558 = vmatpush1.xpose.msra.mxu0 0.0
    %559 = vmatprep.subr.mxu0 0.0
    %560 = vmatpush1.xpose.msra.mxu0 0.0
    %561 = vmatprep.subr.mxu0 0.0
    %562 = vmatpush1.xpose.msra.mxu0 0.0
    %563 = vmatprep.subr.mxu0 0.0
    %564 = vmatpush1.xpose.msra.mxu0 0.0
    %565 = vmatprep.subr.mxu0 0.0
    %566 = vmatpush1.xpose.msra.mxu0 0.0
    %567 = vmatprep.subr.mxu0 0.0
    %568 = vmatpush1.xpose.msra.mxu0 0.0
    %569 = vmatprep.subr.mxu0 0.0
    %570 = vmatpush1.xpose.msra.mxu0 0.0
    %571 = vmatprep.subr.mxu0 0.0
    %572 = vmatpush1.xpose.msra.mxu0 0.0
    %573 = vmatprep.subr.mxu0 0.0
    %574 = vmatpush1.xpose.msra.mxu0 0.0
    %575 = vmatprep.subr.mxu0 0.0
    %576 = vmatpush1.xpose.msra.mxu0 0.0
    %577 = vmatprep.subr.mxu0 0.0
    %578 = vmatpush1.xpose.msra.mxu0 0.0
    %579 = vmatprep.subr.mxu0 0.0
    %580 = vmatpush1.xpose.msra.mxu0 0.0
    %581 = vmatprep.subr.mxu0 0.0
    %582 = vmatpush1.xpose.msra.mxu0 0.0
    %583 = vmatprep.subr.mxu0 0.0
    %584 = vmatpush1.xpose.msra.mxu0 0.0
    %585 = vmatprep.subr.mxu0 0.0
    %586 = vmatpush1.xpose.msra.mxu0 0.0
    %587 = vmatprep.subr.mxu0 0.0
    %588 = vmatpush1.xpose.msra.mxu0 0.0
    %589 = vmatprep.subr.mxu0 0.0
    %590 = vmatpush1.xpose.msra.mxu0 0.0
    %591 = vmatprep.subr.mxu0 0.0
    %592 = vmatpush1.xpose.msra.mxu0 0.0
    %593 = vmatprep.subr.mxu0 0.0
    %594 = vmatpush1.xpose.msra.mxu0 0.0
    %595 = vmatprep.subr.mxu0 0.0
    %596 = vmatpush1.xpose.msra.mxu0 0.0
    %597 = vmatprep.subr.mxu0 0.0
    %598 = vmatpush1.xpose.msra.mxu0 0.0
    %599 = vmatprep.subr.mxu0 0.0
    %600 = vmatpush1.xpose.msra.mxu0 0.0
    %601 = vmatprep.subr.mxu0 0.0
    %602 = vmatpush1.xpose.msra.mxu0 0.0
    %603 = vmatprep.subr.mxu0 0.0
    %604 = vmatpush1.xpose.msra.mxu0 0.0
    %605 = vmatprep.subr.mxu0 0.0
    %606 = vmatpush1.xpose.msra.mxu0 0.0
    %607 = vmatprep.subr.mxu0 0.0
    %608 = vmatpush1.xpose.msra.mxu0 0.0
    %609 = vmatprep.mubr.f32.mxu0 0.0
    %610 = vmatmul.mubr.f32.gmra.mrb[0].mxu0 %v541
    %v611 = vpop.f32.mrb[0].mxu0
    %v612 = vadd.f32 0.0, %v611
    %v613 = vpop.f32.mrb[0].mxu0
    %614 = vdwg.mxu0
    %615 = vrot.lane.b32.xlu0 %v377, 96
    %v616 = vpop.permute.xlu0 %615
    %v617 = vsel %vm388, %v616, 0
    %v619 = vsel %vm388, %v377, 0
    %621 = vmatprep.subr.mxu0 0.0
    %622 = vmatpush1.xpose.msra.mxu0 %v619
    %623 = vmatprep.subr.mxu0 0.0
    %624 = vmatpush1.xpose.msra.mxu0 0.0
    %625 = vmatprep.subr.mxu0 0.0
    %626 = vmatpush1.xpose.msra.mxu0 0.0
    %627 = vmatprep.subr.mxu0 0.0
    %628 = vmatpush1.xpose.msra.mxu0 0.0
    %629 = vmatprep.subr.mxu0 0.0
    %630 = vmatpush1.xpose.msra.mxu0 0.0
    %631 = vmatprep.subr.mxu0 0.0
    %632 = vmatpush1.xpose.msra.mxu0 0.0
    %633 = vmatprep.subr.mxu0 0.0
    %634 = vmatpush1.xpose.msra.mxu0 0.0
    %635 = vmatprep.subr.mxu0 0.0
    %636 = vmatpush1.xpose.msra.mxu0 0.0
    %637 = vmatprep.subr.mxu0 0.0
    %638 = vmatpush1.xpose.msra.mxu0 0.0
    %639 = vmatprep.subr.mxu0 0.0
    %640 = vmatpush1.xpose.msra.mxu0 0.0
    %641 = vmatprep.subr.mxu0 0.0
    %642 = vmatpush1.xpose.msra.mxu0 0.0
    %643 = vmatprep.subr.mxu0 0.0
    %644 = vmatpush1.xpose.msra.mxu0 0.0
    %645 = vmatprep.subr.mxu0 0.0
    %646 = vmatpush1.xpose.msra.mxu0 0.0
    %647 = vmatprep.subr.mxu0 0.0
    %648 = vmatpush1.xpose.msra.mxu0 0.0
    %649 = vmatprep.subr.mxu0 0.0
    %650 = vmatpush1.xpose.msra.mxu0 0.0
    %651 = vmatprep.subr.mxu0 0.0
    %652 = vmatpush1.xpose.msra.mxu0 0.0
    %653 = vmatprep.subr.mxu0 0.0
    %654 = vmatpush1.xpose.msra.mxu0 0.0
    %655 = vmatprep.subr.mxu0 0.0
    %656 = vmatpush1.xpose.msra.mxu0 0.0
    %657 = vmatprep.subr.mxu0 0.0
    %658 = vmatpush1.xpose.msra.mxu0 0.0
    %659 = vmatprep.subr.mxu0 0.0
    %660 = vmatpush1.xpose.msra.mxu0 0.0
    %661 = vmatprep.subr.mxu0 0.0
    %662 = vmatpush1.xpose.msra.mxu0 0.0
    %663 = vmatprep.subr.mxu0 0.0
    %664 = vmatpush1.xpose.msra.mxu0 0.0
    %665 = vmatprep.subr.mxu0 0.0
    %666 = vmatpush1.xpose.msra.mxu0 0.0
    %667 = vmatprep.subr.mxu0 0.0
    %668 = vmatpush1.xpose.msra.mxu0 0.0
    %669 = vmatprep.subr.mxu0 0.0
    %670 = vmatpush1.xpose.msra.mxu0 0.0
    %671 = vmatprep.subr.mxu0 0.0
    %672 = vmatpush1.xpose.msra.mxu0 0.0
    %673 = vmatprep.subr.mxu0 0.0
    %674 = vmatpush1.xpose.msra.mxu0 0.0
    %675 = vmatprep.subr.mxu0 0.0
    %676 = vmatpush1.xpose.msra.mxu0 0.0
    %677 = vmatprep.subr.mxu0 0.0
    %678 = vmatpush1.xpose.msra.mxu0 0.0
    %679 = vmatprep.subr.mxu0 0.0
    %680 = vmatpush1.xpose.msra.mxu0 0.0
    %681 = vmatprep.subr.mxu0 0.0
    %682 = vmatpush1.xpose.msra.mxu0 0.0
    %683 = vmatprep.subr.mxu0 0.0
    %684 = vmatpush1.xpose.msra.mxu0 0.0
    %685 = vmatprep.mubr.f32.mxu0 0.0
    %686 = vmatmul.mubr.f32.gmra.mrb[0].mxu0 %v617
    %v687 = vpop.f32.mrb[0].mxu0
    %v688 = vadd.f32 0.0, %v687
    %v689 = vpop.f32.mrb[0].mxu0
    %690 = vdwg.mxu0
    %691 = vrot.lane.b32.xlu0 %v379, 96
    %v692 = vpop.permute.xlu0 %691
    %v693 = vsel %vm388, %v692, 0
    %v695 = vsel %vm388, %v379, 0
    %697 = vmatprep.subr.mxu0 0.0
    %698 = vmatpush1.xpose.msra.mxu0 %v695
    %699 = vmatprep.subr.mxu0 0.0
    %700 = vmatpush1.xpose.msra.mxu0 0.0
    %701 = vmatprep.subr.mxu0 0.0
    %702 = vmatpush1.xpose.msra.mxu0 0.0
    %703 = vmatprep.subr.mxu0 0.0
    %704 = vmatpush1.xpose.msra.mxu0 0.0
    %705 = vmatprep.subr.mxu0 0.0
    %706 = vmatpush1.xpose.msra.mxu0 0.0
    %707 = vmatprep.subr.mxu0 0.0
    %708 = vmatpush1.xpose.msra.mxu0 0.0
    %709 = vmatprep.subr.mxu0 0.0
    %710 = vmatpush1.xpose.msra.mxu0 0.0
    %711 = vmatprep.subr.mxu0 0.0
    %712 = vmatpush1.xpose.msra.mxu0 0.0
    %713 = vmatprep.subr.mxu0 0.0
    %714 = vmatpush1.xpose.msra.mxu0 0.0
    %715 = vmatprep.subr.mxu0 0.0
    %716 = vmatpush1.xpose.msra.mxu0 0.0
    %717 = vmatprep.subr.mxu0 0.0
    %718 = vmatpush1.xpose.msra.mxu0 0.0
    %719 = vmatprep.subr.mxu0 0.0
    %720 = vmatpush1.xpose.msra.mxu0 0.0
    %721 = vmatprep.subr.mxu0 0.0
    %722 = vmatpush1.xpose.msra.mxu0 0.0
    %723 = vmatprep.subr.mxu0 0.0
    %724 = vmatpush1.xpose.msra.mxu0 0.0
    %725 = vmatprep.subr.mxu0 0.0
    %726 = vmatpush1.xpose.msra.mxu0 0.0
    %727 = vmatprep.subr.mxu0 0.0
    %728 = vmatpush1.xpose.msra.mxu0 0.0
    %729 = vmatprep.subr.mxu0 0.0
    %730 = vmatpush1.xpose.msra.mxu0 0.0
    %731 = vmatprep.subr.mxu0 0.0
    %732 = vmatpush1.xpose.msra.mxu0 0.0
    %733 = vmatprep.subr.mxu0 0.0
    %734 = vmatpush1.xpose.msra.mxu0 0.0
    %735 = vmatprep.subr.mxu0 0.0
    %736 = vmatpush1.xpose.msra.mxu0 0.0
    %737 = vmatprep.subr.mxu0 0.0
    %738 = vmatpush1.xpose.msra.mxu0 0.0
    %739 = vmatprep.subr.mxu0 0.0
    %740 = vmatpush1.xpose.msra.mxu0 0.0
    %741 = vmatprep.subr.mxu0 0.0
    %742 = vmatpush1.xpose.msra.mxu0 0.0
    %743 = vmatprep.subr.mxu0 0.0
    %744 = vmatpush1.xpose.msra.mxu0 0.0
    %745 = vmatprep.subr.mxu0 0.0
    %746 = vmatpush1.xpose.msra.mxu0 0.0
    %747 = vmatprep.subr.mxu0 0.0
    %748 = vmatpush1.xpose.msra.mxu0 0.0
    %749 = vmatprep.subr.mxu0 0.0
    %750 = vmatpush1.xpose.msra.mxu0 0.0
    %751 = vmatprep.subr.mxu0 0.0
    %752 = vmatpush1.xpose.msra.mxu0 0.0
    %753 = vmatprep.subr.mxu0 0.0
    %754 = vmatpush1.xpose.msra.mxu0 0.0
    %755 = vmatprep.subr.mxu0 0.0
    %756 = vmatpush1.xpose.msra.mxu0 0.0
    %757 = vmatprep.subr.mxu0 0.0
    %758 = vmatpush1.xpose.msra.mxu0 0.0
    %759 = vmatprep.subr.mxu0 0.0
    %760 = vmatpush1.xpose.msra.mxu0 0.0
    %761 = vmatprep.mubr.f32.mxu0 0.0
    %762 = vmatmul.mubr.f32.gmra.mrb[0].mxu0 %v693
    %v763 = vpop.f32.mrb[0].mxu0
    %v764 = vadd.f32 0.0, %v763
    %v765 = vpop.f32.mrb[0].mxu0
    %766 = vdwg.mxu0
    %767 = vrot.lane.b32.xlu0 %v381, 96
    %v768 = vpop.permute.xlu0 %767
    %v769 = vsel %vm388, %v768, 0
    %v771 = vsel %vm388, %v381, 0
    %773 = vmatprep.subr.mxu0 0.0
    %774 = vmatpush1.xpose.msra.mxu0 %v771
    %775 = vmatprep.subr.mxu0 0.0
    %776 = vmatpush1.xpose.msra.mxu0 0.0
    %777 = vmatprep.subr.mxu0 0.0
    %778 = vmatpush1.xpose.msra.mxu0 0.0
    %779 = vmatprep.subr.mxu0 0.0
    %780 = vmatpush1.xpose.msra.mxu0 0.0
    %781 = vmatprep.subr.mxu0 0.0
    %782 = vmatpush1.xpose.msra.mxu0 0.0
    %783 = vmatprep.subr.mxu0 0.0
    %784 = vmatpush1.xpose.msra.mxu0 0.0
    %785 = vmatprep.subr.mxu0 0.0
    %786 = vmatpush1.xpose.msra.mxu0 0.0
    %787 = vmatprep.subr.mxu0 0.0
    %788 = vmatpush1.xpose.msra.mxu0 0.0
    %789 = vmatprep.subr.mxu0 0.0
    %790 = vmatpush1.xpose.msra.mxu0 0.0
    %791 = vmatprep.subr.mxu0 0.0
    %792 = vmatpush1.xpose.msra.mxu0 0.0
    %793 = vmatprep.subr.mxu0 0.0
    %794 = vmatpush1.xpose.msra.mxu0 0.0
    %795 = vmatprep.subr.mxu0 0.0
    %796 = vmatpush1.xpose.msra.mxu0 0.0
    %797 = vmatprep.subr.mxu0 0.0
    %798 = vmatpush1.xpose.msra.mxu0 0.0
    %799 = vmatprep.subr.mxu0 0.0
    %800 = vmatpush1.xpose.msra.mxu0 0.0
    %801 = vmatprep.subr.mxu0 0.0
    %802 = vmatpush1.xpose.msra.mxu0 0.0
    %803 = vmatprep.subr.mxu0 0.0
    %804 = vmatpush1.xpose.msra.mxu0 0.0
    %805 = vmatprep.subr.mxu0 0.0
    %806 = vmatpush1.xpose.msra.mxu0 0.0
    %807 = vmatprep.subr.mxu0 0.0
    %808 = vmatpush1.xpose.msra.mxu0 0.0
    %809 = vmatprep.subr.mxu0 0.0
    %810 = vmatpush1.xpose.msra.mxu0 0.0
    %811 = vmatprep.subr.mxu0 0.0
    %812 = vmatpush1.xpose.msra.mxu0 0.0
    %813 = vmatprep.subr.mxu0 0.0
    %814 = vmatpush1.xpose.msra.mxu0 0.0
    %815 = vmatprep.subr.mxu0 0.0
    %816 = vmatpush1.xpose.msra.mxu0 0.0
    %817 = vmatprep.subr.mxu0 0.0
    %818 = vmatpush1.xpose.msra.mxu0 0.0
    %819 = vmatprep.subr.mxu0 0.0
    %820 = vmatpush1.xpose.msra.mxu0 0.0
    %821 = vmatprep.subr.mxu0 0.0
    %822 = vmatpush1.xpose.msra.mxu0 0.0
    %823 = vmatprep.subr.mxu0 0.0
    %824 = vmatpush1.xpose.msra.mxu0 0.0
    %825 = vmatprep.subr.mxu0 0.0
    %826 = vmatpush1.xpose.msra.mxu0 0.0
    %827 = vmatprep.subr.mxu0 0.0
    %828 = vmatpush1.xpose.msra.mxu0 0.0
    %829 = vmatprep.subr.mxu0 0.0
    %830 = vmatpush1.xpose.msra.mxu0 0.0
    %831 = vmatprep.subr.mxu0 0.0
    %832 = vmatpush1.xpose.msra.mxu0 0.0
    %833 = vmatprep.subr.mxu0 0.0
    %834 = vmatpush1.xpose.msra.mxu0 0.0
    %835 = vmatprep.subr.mxu0 0.0
    %836 = vmatpush1.xpose.msra.mxu0 0.0
    %837 = vmatprep.mubr.f32.mxu0 0.0
    %838 = vmatmul.mubr.f32.gmra.mrb[0].mxu0 %v769
    %v839 = vpop.f32.mrb[0].mxu0
    %v840 = vadd.f32 0.0, %v839
    %v841 = vpop.f32.mrb[0].mxu0
    %842 = vdwg.mxu0
    %843 = vrot.lane.b32.xlu0 %v383, 96
    %v844 = vpop.permute.xlu0 %843
    %v845 = vsel %vm388, %v844, 0
    %v847 = vsel %vm388, %v383, 0
    %849 = vmatprep.subr.mxu0 0.0
    %850 = vmatpush1.xpose.msra.mxu0 %v847
    %851 = vmatprep.subr.mxu0 0.0
    %852 = vmatpush1.xpose.msra.mxu0 0.0
    %853 = vmatprep.subr.mxu0 0.0
    %854 = vmatpush1.xpose.msra.mxu0 0.0
    %855 = vmatprep.subr.mxu0 0.0
    %856 = vmatpush1.xpose.msra.mxu0 0.0
    %857 = vmatprep.subr.mxu0 0.0
    %858 = vmatpush1.xpose.msra.mxu0 0.0
    %859 = vmatprep.subr.mxu0 0.0
    %860 = vmatpush1.xpose.msra.mxu0 0.0
    %861 = vmatprep.subr.mxu0 0.0
    %862 = vmatpush1.xpose.msra.mxu0 0.0
    %863 = vmatprep.subr.mxu0 0.0
    %864 = vmatpush1.xpose.msra.mxu0 0.0
    %865 = vmatprep.subr.mxu0 0.0
    %866 = vmatpush1.xpose.msra.mxu0 0.0
    %867 = vmatprep.subr.mxu0 0.0
    %868 = vmatpush1.xpose.msra.mxu0 0.0
    %869 = vmatprep.subr.mxu0 0.0
    %870 = vmatpush1.xpose.msra.mxu0 0.0
    %871 = vmatprep.subr.mxu0 0.0
    %872 = vmatpush1.xpose.msra.mxu0 0.0
    %873 = vmatprep.subr.mxu0 0.0
    %874 = vmatpush1.xpose.msra.mxu0 0.0
    %875 = vmatprep.subr.mxu0 0.0
    %876 = vmatpush1.xpose.msra.mxu0 0.0
    %877 = vmatprep.subr.mxu0 0.0
    %878 = vmatpush1.xpose.msra.mxu0 0.0
    %879 = vmatprep.subr.mxu0 0.0
    %880 = vmatpush1.xpose.msra.mxu0 0.0
    %881 = vmatprep.subr.mxu0 0.0
    %882 = vmatpush1.xpose.msra.mxu0 0.0
    %883 = vmatprep.subr.mxu0 0.0
    %884 = vmatpush1.xpose.msra.mxu0 0.0
    %885 = vmatprep.subr.mxu0 0.0
    %886 = vmatpush1.xpose.msra.mxu0 0.0
    %887 = vmatprep.subr.mxu0 0.0
    %888 = vmatpush1.xpose.msra.mxu0 0.0
    %889 = vmatprep.subr.mxu0 0.0
    %890 = vmatpush1.xpose.msra.mxu0 0.0
    %891 = vmatprep.subr.mxu0 0.0
    %892 = vmatpush1.xpose.msra.mxu0 0.0
    %893 = vmatprep.subr.mxu0 0.0
    %894 = vmatpush1.xpose.msra.mxu0 0.0
    %895 = vmatprep.subr.mxu0 0.0
    %896 = vmatpush1.xpose.msra.mxu0 0.0
    %897 = vmatprep.subr.mxu0 0.0
    %898 = vmatpush1.xpose.msra.mxu0 0.0
    %899 = vmatprep.subr.mxu0 0.0
    %900 = vmatpush1.xpose.msra.mxu0 0.0
    %901 = vmatprep.subr.mxu0 0.0
    %902 = vmatpush1.xpose.msra.mxu0 0.0
    %903 = vmatprep.subr.mxu0 0.0
    %904 = vmatpush1.xpose.msra.mxu0 0.0
    %905 = vmatprep.subr.mxu0 0.0
    %906 = vmatpush1.xpose.msra.mxu0 0.0
    %907 = vmatprep.subr.mxu0 0.0
    %908 = vmatpush1.xpose.msra.mxu0 0.0
    %909 = vmatprep.subr.mxu0 0.0
    %910 = vmatpush1.xpose.msra.mxu0 0.0
    %911 = vmatprep.subr.mxu0 0.0
    %912 = vmatpush1.xpose.msra.mxu0 0.0
    %913 = vmatprep.mubr.f32.mxu0 0.0
    %914 = vmatmul.mubr.f32.gmra.mrb[0].mxu0 %v845
    %v915 = vpop.f32.mrb[0].mxu0
    %v916 = vadd.f32 0.0, %v915
    %v917 = vpop.f32.mrb[0].mxu0
    %918 = vdwg.mxu0
    %919 = vrot.lane.b32.xlu0 %v385, 96
    %v920 = vpop.permute.xlu0 %919
    %v921 = vsel %vm388, %v920, 0
    %v923 = vsel %vm388, %v385, 0
    %925 = vmatprep.subr.mxu0 0.0
    %926 = vmatpush1.xpose.msra.mxu0 %v923
    %927 = vmatprep.subr.mxu0 0.0
    %928 = vmatpush1.xpose.msra.mxu0 0.0
    %929 = vmatprep.subr.mxu0 0.0
    %930 = vmatpush1.xpose.msra.mxu0 0.0
    %931 = vmatprep.subr.mxu0 0.0
    %932 = vmatpush1.xpose.msra.mxu0 0.0
    %933 = vmatprep.subr.mxu0 0.0
    %934 = vmatpush1.xpose.msra.mxu0 0.0
    %935 = vmatprep.subr.mxu0 0.0
    %936 = vmatpush1.xpose.msra.mxu0 0.0
    %937 = vmatprep.subr.mxu0 0.0
    %938 = vmatpush1.xpose.msra.mxu0 0.0
    %939 = vmatprep.subr.mxu0 0.0
    %940 = vmatpush1.xpose.msra.mxu0 0.0
    %941 = vmatprep.subr.mxu0 0.0
    %942 = vmatpush1.xpose.msra.mxu0 0.0
    %943 = vmatprep.subr.mxu0 0.0
    %944 = vmatpush1.xpose.msra.mxu0 0.0
    %945 = vmatprep.subr.mxu0 0.0
    %946 = vmatpush1.xpose.msra.mxu0 0.0
    %947 = vmatprep.subr.mxu0 0.0
    %948 = vmatpush1.xpose.msra.mxu0 0.0
    %949 = vmatprep.subr.mxu0 0.0
    %950 = vmatpush1.xpose.msra.mxu0 0.0
    %951 = vmatprep.subr.mxu0 0.0
    %952 = vmatpush1.xpose.msra.mxu0 0.0
    %953 = vmatprep.subr.mxu0 0.0
    %954 = vmatpush1.xpose.msra.mxu0 0.0
    %955 = vmatprep.subr.mxu0 0.0
    %956 = vmatpush1.xpose.msra.mxu0 0.0
    %957 = vmatprep.subr.mxu0 0.0
    %958 = vmatpush1.xpose.msra.mxu0 0.0
    %959 = vmatprep.subr.mxu0 0.0
    %960 = vmatpush1.xpose.msra.mxu0 0.0
    %961 = vmatprep.subr.mxu0 0.0
    %962 = vmatpush1.xpose.msra.mxu0 0.0
    %963 = vmatprep.subr.mxu0 0.0
    %964 = vmatpush1.xpose.msra.mxu0 0.0
    %965 = vmatprep.subr.mxu0 0.0
    %966 = vmatpush1.xpose.msra.mxu0 0.0
    %967 = vmatprep.subr.mxu0 0.0
    %968 = vmatpush1.xpose.msra.mxu0 0.0
    %969 = vmatprep.subr.mxu0 0.0
    %970 = vmatpush1.xpose.msra.mxu0 0.0
    %971 = vmatprep.subr.mxu0 0.0
    %972 = vmatpush1.xpose.msra.mxu0 0.0
    %973 = vmatprep.subr.mxu0 0.0
    %974 = vmatpush1.xpose.msra.mxu0 0.0
    %975 = vmatprep.subr.mxu0 0.0
    %976 = vmatpush1.xpose.msra.mxu0 0.0
    %977 = vmatprep.subr.mxu0 0.0
    %978 = vmatpush1.xpose.msra.mxu0 0.0
    %979 = vmatprep.subr.mxu0 0.0
    %980 = vmatpush1.xpose.msra.mxu0 0.0
    %981 = vmatprep.subr.mxu0 0.0
    %982 = vmatpush1.xpose.msra.mxu0 0.0
    %983 = vmatprep.subr.mxu0 0.0
    %984 = vmatpush1.xpose.msra.mxu0 0.0
    %985 = vmatprep.subr.mxu0 0.0
    %986 = vmatpush1.xpose.msra.mxu0 0.0
    %987 = vmatprep.subr.mxu0 0.0
    %988 = vmatpush1.xpose.msra.mxu0 0.0
    %989 = vmatprep.mubr.f32.mxu0 0.0
    %990 = vmatmul.mubr.f32.gmra.mrb[0].mxu0 %v921
    %v991 = vpop.f32.mrb[0].mxu0
    %v992 = vadd.f32 0.0, %v991
    %v993 = vpop.f32.mrb[0].mxu0
    %994 = vdwg.mxu0
    %v995 = vsel %vm388, %v460, -inf
    %v996 = vrot.slane %v995, 4
    %v997 = vmax.f32 %v995, %v996
    %v998 = vrot.slane %v997, 2
    %v999 = vmax.f32 %v997, %v998
    %v1000 = vrot.slane %v999, 1
    %v1001 = vmax.f32 %v999, %v1000
    %v1002 = vsel %vm388, %v536, -inf
    %v1003 = vrot.slane %v1002, 4
    %v1004 = vmax.f32 %v1002, %v1003
    %v1005 = vrot.slane %v1004, 2
    %v1006 = vmax.f32 %v1004, %v1005
    %v1007 = vrot.slane %v1006, 1
    %v1008 = vmax.f32 %v1006, %v1007
    %v1009 = vsel %vm388, %v612, -inf
    %v1010 = vrot.slane %v1009, 4
    %v1011 = vmax.f32 %v1009, %v1010
    %v1012 = vrot.slane %v1011, 2
    %v1013 = vmax.f32 %v1011, %v1012
    %v1014 = vrot.slane %v1013, 1
    %v1015 = vmax.f32 %v1013, %v1014
    %v1016 = vsel %vm388, %v688, -inf
    %v1017 = vrot.slane %v1016, 4
    %v1018 = vmax.f32 %v1016, %v1017
    %v1019 = vrot.slane %v1018, 2
    %v1020 = vmax.f32 %v1018, %v1019
    %v1021 = vrot.slane %v1020, 1
    %v1022 = vmax.f32 %v1020, %v1021
    %v1023 = vsel %vm388, %v764, -inf
    %v1024 = vrot.slane %v1023, 4
    %v1025 = vmax.f32 %v1023, %v1024
    %v1026 = vrot.slane %v1025, 2
    %v1027 = vmax.f32 %v1025, %v1026
    %v1028 = vrot.slane %v1027, 1
    %v1029 = vmax.f32 %v1027, %v1028
    %v1030 = vsel %vm388, %v840, -inf
    %v1031 = vrot.slane %v1030, 4
    %v1032 = vmax.f32 %v1030, %v1031
    %v1033 = vrot.slane %v1032, 2
    %v1034 = vmax.f32 %v1032, %v1033
    %v1035 = vrot.slane %v1034, 1
    %v1036 = vmax.f32 %v1034, %v1035
    %v1037 = vsel %vm388, %v916, -inf
    %v1038 = vrot.slane %v1037, 4
    %v1039 = vmax.f32 %v1037, %v1038
    %v1040 = vrot.slane %v1039, 2
    %v1041 = vmax.f32 %v1039, %v1040
    %v1042 = vrot.slane %v1041, 1
    %v1043 = vmax.f32 %v1041, %v1042
    %v1044 = vsel %vm388, %v992, -inf
    %v1045 = vrot.slane %v1044, 4
    %v1046 = vmax.f32 %v1044, %v1045
    %v1047 = vrot.slane %v1046, 2
    %v1048 = vmax.f32 %v1046, %v1047
    %v1049 = vrot.slane %v1048, 1
    %v1050 = vmax.f32 %v1048, %v1049
    %v1051 = vsub.f32 %v460, %v1001
    %v1052 = vsub.f32 %v536, %v1008
    %v1053 = vsub.f32 %v612, %v1015
    %v1054 = vsub.f32 %v688, %v1022
    %v1055 = vsub.f32 %v764, %v1029
    %v1056 = vsub.f32 %v840, %v1036
    %v1057 = vsub.f32 %v916, %v1043
    %v1058 = vsub.f32 %v992, %v1050
    %v1059 = vmul.f32 %v1051, 1.442695
    %v1060 = vpow.pop %v1059
    %v1061 = vmul.f32 %v1052, 1.442695
    %v1062 = vpow.pop %v1061
    %v1063 = vmul.f32 %v1053, 1.442695
    %v1064 = vpow.pop %v1063
    %v1065 = vmul.f32 %v1054, 1.442695
    %v1066 = vpow.pop %v1065
    %v1067 = vmul.f32 %v1055, 1.442695
    %v1068 = vpow.pop %v1067
    %v1069 = vmul.f32 %v1056, 1.442695
    %v1070 = vpow.pop %v1069
    %v1071 = vmul.f32 %v1057, 1.442695
    %v1072 = vpow.pop %v1071
    %v1073 = vmul.f32 %v1058, 1.442695
    %v1074 = vpow.pop %v1073
    %v1075 = vsel %vm388, %v1060, 0.0
    %v1076 = vrot.slane %v1075, 4
    %v1077 = vadd.f32 %v1075, %v1076
    %v1078 = vrot.slane %v1077, 2
    %v1079 = vadd.f32 %v1077, %v1078
    %v1080 = vrot.slane %v1079, 1
    %v1081 = vadd.f32 %v1079, %v1080
    %v1082 = vsel %vm388, %v1062, 0.0
    %v1083 = vrot.slane %v1082, 4
    %v1084 = vadd.f32 %v1082, %v1083
    %v1085 = vrot.slane %v1084, 2
    %v1086 = vadd.f32 %v1084, %v1085
    %v1087 = vrot.slane %v1086, 1
    %v1088 = vadd.f32 %v1086, %v1087
    %v1089 = vsel %vm388, %v1064, 0.0
    %v1090 = vrot.slane %v1089, 4
    %v1091 = vadd.f32 %v1089, %v1090
    %v1092 = vrot.slane %v1091, 2
    %v1093 = vadd.f32 %v1091, %v1092
    %v1094 = vrot.slane %v1093, 1
    %v1095 = vadd.f32 %v1093, %v1094
    %v1096 = vsel %vm388, %v1066, 0.0
    %v1097 = vrot.slane %v1096, 4
    %v1098 = vadd.f32 %v1096, %v1097
    %v1099 = vrot.slane %v1098, 2
    %v1100 = vadd.f32 %v1098, %v1099
    %v1101 = vrot.slane %v1100, 1
    %v1102 = vadd.f32 %v1100, %v1101
    %v1103 = vsel %vm388, %v1068, 0.0
    %v1104 = vrot.slane %v1103, 4
    %v1105 = vadd.f32 %v1103, %v1104
    %v1106 = vrot.slane %v1105, 2
    %v1107 = vadd.f32 %v1105, %v1106
    %v1108 = vrot.slane %v1107, 1
    %v1109 = vadd.f32 %v1107, %v1108
    %v1110 = vsel %vm388, %v1070, 0.0
    %v1111 = vrot.slane %v1110, 4
    %v1112 = vadd.f32 %v1110, %v1111
    %v1113 = vrot.slane %v1112, 2
    %v1114 = vadd.f32 %v1112, %v1113
    %v1115 = vrot.slane %v1114, 1
    %v1116 = vadd.f32 %v1114, %v1115
    %v1117 = vsel %vm388, %v1072, 0.0
    %v1118 = vrot.slane %v1117, 4
    %v1119 = vadd.f32 %v1117, %v1118
    %v1120 = vrot.slane %v1119, 2
    %v1121 = vadd.f32 %v1119, %v1120
    %v1122 = vrot.slane %v1121, 1
    %v1123 = vadd.f32 %v1121, %v1122
    %v1124 = vsel %vm388, %v1074, 0.0
    %v1125 = vrot.slane %v1124, 4
    %v1126 = vadd.f32 %v1124, %v1125
    %v1127 = vrot.slane %v1126, 2
    %v1128 = vadd.f32 %v1126, %v1127
    %v1129 = vrot.slane %v1128, 1
    %v1130 = vadd.f32 %v1128, %v1129
    %v1131 = vrcp.pop %v1081
    %v1132 = vrcp.pop %v1088
    %v1133 = vrcp.pop %v1095
    %v1134 = vrcp.pop %v1102
    %v1135 = vrcp.pop %v1109
    %v1136 = vrcp.pop %v1116
    %v1137 = vrcp.pop %v1123
    %v1138 = vrcp.pop %v1130
    %v1139 = vmul.f32 %v1060, %v1131
    %v1140 = vmul.f32 %v1062, %v1132
    %v1141 = vmul.f32 %v1064, %v1133
    %v1142 = vmul.f32 %v1066, %v1134
    %v1143 = vmul.f32 %v1068, %v1135
    %v1144 = vmul.f32 %v1070, %v1136
    %v1145 = vmul.f32 %v1072, %v1137
    %v1146 = vmul.f32 %v1074, %v1138
    %1147 = vrot.lane.b32.xlu0 %v364, 64
    %v1148 = vpop.permute.xlu0 %1147
    %v1151 = vsel %vm388, %v1139, 0
    %1153 = vmatprep.subr.mxu0 0.0
    %1154 = vmatpush1.msra.mxu0 %v1148
    %1155 = vmatprep.subr.mxu0 0.0
    %1156 = vmatpush1.msra.mxu0 0.0
    %1157 = vmatprep.subr.mxu0 0.0
    %1158 = vmatpush1.msra.mxu0 0.0
    %1159 = vmatprep.subr.mxu0 0.0
    %1160 = vmatpush1.msra.mxu0 0.0
    %1161 = vmatprep.subr.mxu0 0.0
    %1162 = vmatpush1.msra.mxu0 0.0
    %1163 = vmatprep.subr.mxu0 0.0
    %1164 = vmatpush1.msra.mxu0 0.0
    %1165 = vmatprep.subr.mxu0 0.0
    %1166 = vmatpush1.msra.mxu0 0.0
    %1167 = vmatprep.subr.mxu0 0.0
    %1168 = vmatpush1.msra.mxu0 0.0
    %1169 = vmatprep.subr.mxu0 0.0
    %1170 = vmatpush1.msra.mxu0 0.0
    %1171 = vmatprep.subr.mxu0 0.0
    %1172 = vmatpush1.msra.mxu0 0.0
    %1173 = vmatprep.subr.mxu0 0.0
    %1174 = vmatpush1.msra.mxu0 0.0
    %1175 = vmatprep.subr.mxu0 0.0
    %1176 = vmatpush1.msra.mxu0 0.0
    %1177 = vmatprep.subr.mxu0 0.0
    %1178 = vmatpush1.msra.mxu0 0.0
    %1179 = vmatprep.subr.mxu0 0.0
    %1180 = vmatpush1.msra.mxu0 0.0
    %1181 = vmatprep.subr.mxu0 0.0
    %1182 = vmatpush1.msra.mxu0 0.0
    %1183 = vmatprep.subr.mxu0 0.0
    %1184 = vmatpush1.msra.mxu0 0.0
    %1185 = vmatprep.subr.mxu0 0.0
    %1186 = vmatpush1.msra.mxu0 0.0
    %1187 = vmatprep.subr.mxu0 0.0
    %1188 = vmatpush1.msra.mxu0 0.0
    %1189 = vmatprep.subr.mxu0 0.0
    %1190 = vmatpush1.msra.mxu0 0.0
    %1191 = vmatprep.subr.mxu0 0.0
    %1192 = vmatpush1.msra.mxu0 0.0
    %1193 = vmatprep.subr.mxu0 0.0
    %1194 = vmatpush1.msra.mxu0 0.0
    %1195 = vmatprep.subr.mxu0 0.0
    %1196 = vmatpush1.msra.mxu0 0.0
    %1197 = vmatprep.subr.mxu0 0.0
    %1198 = vmatpush1.msra.mxu0 0.0
    %1199 = vmatprep.subr.mxu0 0.0
    %1200 = vmatpush1.msra.mxu0 0.0
    %1201 = vmatprep.subr.mxu0 0.0
    %1202 = vmatpush1.msra.mxu0 0.0
    %1203 = vmatprep.subr.mxu0 0.0
    %1204 = vmatpush1.msra.mxu0 0.0
    %1205 = vmatprep.subr.mxu0 0.0
    %1206 = vmatpush1.msra.mxu0 0.0
    %1207 = vmatprep.subr.mxu0 0.0
    %1208 = vmatpush1.msra.mxu0 0.0
    %1209 = vmatprep.subr.mxu0 0.0
    %1210 = vmatpush1.msra.mxu0 0.0
    %1211 = vmatprep.subr.mxu0 0.0
    %1212 = vmatpush1.msra.mxu0 0.0
    %1213 = vmatprep.subr.mxu0 0.0
    %1214 = vmatpush1.msra.mxu0 0.0
    %1215 = vmatprep.subr.mxu0 0.0
    %1216 = vmatpush1.msra.mxu0 0.0
    %1217 = vmatprep.mubr.f32.mxu0 0.0
    %1218 = vmatmul.mubr.f32.gmra.mrb[0].mxu0 %v1151
    %v1219 = vpop.f32.mrb[0].mxu0
    %v1220 = vadd.f32 0.0, %v1219
    %v1221 = vpop.f32.mrb[0].mxu0
    %1222 = vdwg.mxu0
    %1223 = vrot.lane.b32.xlu0 %v369, 64
    %v1224 = vpop.permute.xlu0 %1223
    %v1227 = vsel %vm388, %v1140, 0
    %1229 = vmatprep.subr.mxu0 0.0
    %1230 = vmatpush1.msra.mxu0 %v1224
    %1231 = vmatprep.subr.mxu0 0.0
    %1232 = vmatpush1.msra.mxu0 0.0
    %1233 = vmatprep.subr.mxu0 0.0
    %1234 = vmatpush1.msra.mxu0 0.0
    %1235 = vmatprep.subr.mxu0 0.0
    %1236 = vmatpush1.msra.mxu0 0.0
    %1237 = vmatprep.subr.mxu0 0.0
    %1238 = vmatpush1.msra.mxu0 0.0
    %1239 = vmatprep.subr.mxu0 0.0
    %1240 = vmatpush1.msra.mxu0 0.0
    %1241 = vmatprep.subr.mxu0 0.0
    %1242 = vmatpush1.msra.mxu0 0.0
    %1243 = vmatprep.subr.mxu0 0.0
    %1244 = vmatpush1.msra.mxu0 0.0
    %1245 = vmatprep.subr.mxu0 0.0
    %1246 = vmatpush1.msra.mxu0 0.0
    %1247 = vmatprep.subr.mxu0 0.0
    %1248 = vmatpush1.msra.mxu0 0.0
    %1249 = vmatprep.subr.mxu0 0.0
    %1250 = vmatpush1.msra.mxu0 0.0
    %1251 = vmatprep.subr.mxu0 0.0
    %1252 = vmatpush1.msra.mxu0 0.0
    %1253 = vmatprep.subr.mxu0 0.0
    %1254 = vmatpush1.msra.mxu0 0.0
    %1255 = vmatprep.subr.mxu0 0.0
    %1256 = vmatpush1.msra.mxu0 0.0
    %1257 = vmatprep.subr.mxu0 0.0
    %1258 = vmatpush1.msra.mxu0 0.0
    %1259 = vmatprep.subr.mxu0 0.0
    %1260 = vmatpush1.msra.mxu0 0.0
    %1261 = vmatprep.subr.mxu0 0.0
    %1262 = vmatpush1.msra.mxu0 0.0
    %1263 = vmatprep.subr.mxu0 0.0
    %1264 = vmatpush1.msra.mxu0 0.0
    %1265 = vmatprep.subr.mxu0 0.0
    %1266 = vmatpush1.msra.mxu0 0.0
    %1267 = vmatprep.subr.mxu0 0.0
    %1268 = vmatpush1.msra.mxu0 0.0
    %1269 = vmatprep.subr.mxu0 0.0
    %1270 = vmatpush1.msra.mxu0 0.0
    %1271 = vmatprep.subr.mxu0 0.0
    %1272 = vmatpush1.msra.mxu0 0.0
    %1273 = vmatprep.subr.mxu0 0.0
    %1274 = vmatpush1.msra.mxu0 0.0
    %1275 = vmatprep.subr.mxu0 0.0
    %1276 = vmatpush1.msra.mxu0 0.0
    %1277 = vmatprep.subr.mxu0 0.0
    %1278 = vmatpush1.msra.mxu0 0.0
    %1279 = vmatprep.subr.mxu0 0.0
    %1280 = vmatpush1.msra.mxu0 0.0
    %1281 = vmatprep.subr.mxu0 0.0
    %1282 = vmatpush1.msra.mxu0 0.0
    %1283 = vmatprep.subr.mxu0 0.0
    %1284 = vmatpush1.msra.mxu0 0.0
    %1285 = vmatprep.subr.mxu0 0.0
    %1286 = vmatpush1.msra.mxu0 0.0
    %1287 = vmatprep.subr.mxu0 0.0
    %1288 = vmatpush1.msra.mxu0 0.0
    %1289 = vmatprep.subr.mxu0 0.0
    %1290 = vmatpush1.msra.mxu0 0.0
    %1291 = vmatprep.subr.mxu0 0.0
    %1292 = vmatpush1.msra.mxu0 0.0
    %1293 = vmatprep.mubr.f32.mxu0 0.0
    %1294 = vmatmul.mubr.f32.gmra.mrb[0].mxu0 %v1227
    %v1295 = vpop.f32.mrb[0].mxu0
    %v1296 = vadd.f32 0.0, %v1295
    %v1297 = vpop.f32.mrb[0].mxu0
    %1298 = vdwg.mxu0
    %1299 = vrot.lane.b32.xlu0 %v375, 64
    %v1300 = vpop.permute.xlu0 %1299
    %v1303 = vsel %vm388, %v1141, 0
    %1305 = vmatprep.subr.mxu0 0.0
    %1306 = vmatpush1.msra.mxu0 %v1300
    %1307 = vmatprep.subr.mxu0 0.0
    %1308 = vmatpush1.msra.mxu0 0.0
    %1309 = vmatprep.subr.mxu0 0.0
    %1310 = vmatpush1.msra.mxu0 0.0
    %1311 = vmatprep.subr.mxu0 0.0
    %1312 = vmatpush1.msra.mxu0 0.0
    %1313 = vmatprep.subr.mxu0 0.0
    %1314 = vmatpush1.msra.mxu0 0.0
    %1315 = vmatprep.subr.mxu0 0.0
    %1316 = vmatpush1.msra.mxu0 0.0
    %1317 = vmatprep.subr.mxu0 0.0
    %1318 = vmatpush1.msra.mxu0 0.0
    %1319 = vmatprep.subr.mxu0 0.0
    %1320 = vmatpush1.msra.mxu0 0.0
    %1321 = vmatprep.subr.mxu0 0.0
    %1322 = vmatpush1.msra.mxu0 0.0
    %1323 = vmatprep.subr.mxu0 0.0
    %1324 = vmatpush1.msra.mxu0 0.0
    %1325 = vmatprep.subr.mxu0 0.0
    %1326 = vmatpush1.msra.mxu0 0.0
    %1327 = vmatprep.subr.mxu0 0.0
    %1328 = vmatpush1.msra.mxu0 0.0
    %1329 = vmatprep.subr.mxu0 0.0
    %1330 = vmatpush1.msra.mxu0 0.0
    %1331 = vmatprep.subr.mxu0 0.0
    %1332 = vmatpush1.msra.mxu0 0.0
    %1333 = vmatprep.subr.mxu0 0.0
    %1334 = vmatpush1.msra.mxu0 0.0
    %1335 = vmatprep.subr.mxu0 0.0
    %1336 = vmatpush1.msra.mxu0 0.0
    %1337 = vmatprep.subr.mxu0 0.0
    %1338 = vmatpush1.msra.mxu0 0.0
    %1339 = vmatprep.subr.mxu0 0.0
    %1340 = vmatpush1.msra.mxu0 0.0
    %1341 = vmatprep.subr.mxu0 0.0
    %1342 = vmatpush1.msra.mxu0 0.0
    %1343 = vmatprep.subr.mxu0 0.0
    %1344 = vmatpush1.msra.mxu0 0.0
    %1345 = vmatprep.subr.mxu0 0.0
    %1346 = vmatpush1.msra.mxu0 0.0
    %1347 = vmatprep.subr.mxu0 0.0
    %1348 = vmatpush1.msra.mxu0 0.0
    %1349 = vmatprep.subr.mxu0 0.0
    %1350 = vmatpush1.msra.mxu0 0.0
    %1351 = vmatprep.subr.mxu0 0.0
    %1352 = vmatpush1.msra.mxu0 0.0
    %1353 = vmatprep.subr.mxu0 0.0
    %1354 = vmatpush1.msra.mxu0 0.0
    %1355 = vmatprep.subr.mxu0 0.0
    %1356 = vmatpush1.msra.mxu0 0.0
    %1357 = vmatprep.subr.mxu0 0.0
    %1358 = vmatpush1.msra.mxu0 0.0
    %1359 = vmatprep.subr.mxu0 0.0
    %1360 = vmatpush1.msra.mxu0 0.0
    %1361 = vmatprep.subr.mxu0 0.0
    %1362 = vmatpush1.msra.mxu0 0.0
    %1363 = vmatprep.subr.mxu0 0.0
    %1364 = vmatpush1.msra.mxu0 0.0
    %1365 = vmatprep.subr.mxu0 0.0
    %1366 = vmatpush1.msra.mxu0 0.0
    %1367 = vmatprep.subr.mxu0 0.0
    %1368 = vmatpush1.msra.mxu0 0.0
    %1369 = vmatprep.mubr.f32.mxu0 0.0
    %1370 = vmatmul.mubr.f32.gmra.mrb[0].mxu0 %v1303
    %v1371 = vpop.f32.mrb[0].mxu0
    %v1372 = vadd.f32 0.0, %v1371
    %v1373 = vpop.f32.mrb[0].mxu0
    %1374 = vdwg.mxu0
    %1375 = vrot.lane.b32.xlu0 %v377, 64
    %v1376 = vpop.permute.xlu0 %1375
    %v1379 = vsel %vm388, %v1142, 0
    %1381 = vmatprep.subr.mxu0 0.0
    %1382 = vmatpush1.msra.mxu0 %v1376
    %1383 = vmatprep.subr.mxu0 0.0
    %1384 = vmatpush1.msra.mxu0 0.0
    %1385 = vmatprep.subr.mxu0 0.0
    %1386 = vmatpush1.msra.mxu0 0.0
    %1387 = vmatprep.subr.mxu0 0.0
    %1388 = vmatpush1.msra.mxu0 0.0
    %1389 = vmatprep.subr.mxu0 0.0
    %1390 = vmatpush1.msra.mxu0 0.0
    %1391 = vmatprep.subr.mxu0 0.0
    %1392 = vmatpush1.msra.mxu0 0.0
    %1393 = vmatprep.subr.mxu0 0.0
    %1394 = vmatpush1.msra.mxu0 0.0
    %1395 = vmatprep.subr.mxu0 0.0
    %1396 = vmatpush1.msra.mxu0 0.0
    %1397 = vmatprep.subr.mxu0 0.0
    %1398 = vmatpush1.msra.mxu0 0.0
    %1399 = vmatprep.subr.mxu0 0.0
    %1400 = vmatpush1.msra.mxu0 0.0
    %1401 = vmatprep.subr.mxu0 0.0
    %1402 = vmatpush1.msra.mxu0 0.0
    %1403 = vmatprep.subr.mxu0 0.0
    %1404 = vmatpush1.msra.mxu0 0.0
    %1405 = vmatprep.subr.mxu0 0.0
    %1406 = vmatpush1.msra.mxu0 0.0
    %1407 = vmatprep.subr.mxu0 0.0
    %1408 = vmatpush1.msra.mxu0 0.0
    %1409 = vmatprep.subr.mxu0 0.0
    %1410 = vmatpush1.msra.mxu0 0.0
    %1411 = vmatprep.subr.mxu0 0.0
    %1412 = vmatpush1.msra.mxu0 0.0
    %1413 = vmatprep.subr.mxu0 0.0
    %1414 = vmatpush1.msra.mxu0 0.0
    %1415 = vmatprep.subr.mxu0 0.0
    %1416 = vmatpush1.msra.mxu0 0.0
    %1417 = vmatprep.subr.mxu0 0.0
    %1418 = vmatpush1.msra.mxu0 0.0
    %1419 = vmatprep.subr.mxu0 0.0
    %1420 = vmatpush1.msra.mxu0 0.0
    %1421 = vmatprep.subr.mxu0 0.0
    %1422 = vmatpush1.msra.mxu0 0.0
    %1423 = vmatprep.subr.mxu0 0.0
    %1424 = vmatpush1.msra.mxu0 0.0
    %1425 = vmatprep.subr.mxu0 0.0
    %1426 = vmatpush1.msra.mxu0 0.0
    %1427 = vmatprep.subr.mxu0 0.0
    %1428 = vmatpush1.msra.mxu0 0.0
    %1429 = vmatprep.subr.mxu0 0.0
    %1430 = vmatpush1.msra.mxu0 0.0
    %1431 = vmatprep.subr.mxu0 0.0
    %1432 = vmatpush1.msra.mxu0 0.0
    %1433 = vmatprep.subr.mxu0 0.0
    %1434 = vmatpush1.msra.mxu0 0.0
    %1435 = vmatprep.subr.mxu0 0.0
    %1436 = vmatpush1.msra.mxu0 0.0
    %1437 = vmatprep.subr.mxu0 0.0
    %1438 = vmatpush1.msra.mxu0 0.0
    %1439 = vmatprep.subr.mxu0 0.0
    %1440 = vmatpush1.msra.mxu0 0.0
    %1441 = vmatprep.subr.mxu0 0.0
    %1442 = vmatpush1.msra.mxu0 0.0
    %1443 = vmatprep.subr.mxu0 0.0
    %1444 = vmatpush1.msra.mxu0 0.0
    %1445 = vmatprep.mubr.f32.mxu0 0.0
    %1446 = vmatmul.mubr.f32.gmra.mrb[0].mxu0 %v1379
    %v1447 = vpop.f32.mrb[0].mxu0
    %v1448 = vadd.f32 0.0, %v1447
    %v1449 = vpop.f32.mrb[0].mxu0
    %1450 = vdwg.mxu0
    %1451 = vrot.lane.b32.xlu0 %v379, 64
    %v1452 = vpop.permute.xlu0 %1451
    %v1455 = vsel %vm388, %v1143, 0
    %1457 = vmatprep.subr.mxu0 0.0
    %1458 = vmatpush1.msra.mxu0 %v1452
    %1459 = vmatprep.subr.mxu0 0.0
    %1460 = vmatpush1.msra.mxu0 0.0
    %1461 = vmatprep.subr.mxu0 0.0
    %1462 = vmatpush1.msra.mxu0 0.0
    %1463 = vmatprep.subr.mxu0 0.0
    %1464 = vmatpush1.msra.mxu0 0.0
    %1465 = vmatprep.subr.mxu0 0.0
    %1466 = vmatpush1.msra.mxu0 0.0
    %1467 = vmatprep.subr.mxu0 0.0
    %1468 = vmatpush1.msra.mxu0 0.0
    %1469 = vmatprep.subr.mxu0 0.0
    %1470 = vmatpush1.msra.mxu0 0.0
    %1471 = vmatprep.subr.mxu0 0.0
    %1472 = vmatpush1.msra.mxu0 0.0
    %1473 = vmatprep.subr.mxu0 0.0
    %1474 = vmatpush1.msra.mxu0 0.0
    %1475 = vmatprep.subr.mxu0 0.0
    %1476 = vmatpush1.msra.mxu0 0.0
    %1477 = vmatprep.subr.mxu0 0.0
    %1478 = vmatpush1.msra.mxu0 0.0
    %1479 = vmatprep.subr.mxu0 0.0
    %1480 = vmatpush1.msra.mxu0 0.0
    %1481 = vmatprep.subr.mxu0 0.0
    %1482 = vmatpush1.msra.mxu0 0.0
    %1483 = vmatprep.subr.mxu0 0.0
    %1484 = vmatpush1.msra.mxu0 0.0
    %1485 = vmatprep.subr.mxu0 0.0
    %1486 = vmatpush1.msra.mxu0 0.0
    %1487 = vmatprep.subr.mxu0 0.0
    %1488 = vmatpush1.msra.mxu0 0.0
    %1489 = vmatprep.subr.mxu0 0.0
    %1490 = vmatpush1.msra.mxu0 0.0
    %1491 = vmatprep.subr.mxu0 0.0
    %1492 = vmatpush1.msra.mxu0 0.0
    %1493 = vmatprep.subr.mxu0 0.0
    %1494 = vmatpush1.msra.mxu0 0.0
    %1495 = vmatprep.subr.mxu0 0.0
    %1496 = vmatpush1.msra.mxu0 0.0
    %1497 = vmatprep.subr.mxu0 0.0
    %1498 = vmatpush1.msra.mxu0 0.0
    %1499 = vmatprep.subr.mxu0 0.0
    %1500 = vmatpush1.msra.mxu0 0.0
    %1501 = vmatprep.subr.mxu0 0.0
    %1502 = vmatpush1.msra.mxu0 0.0
    %1503 = vmatprep.subr.mxu0 0.0
    %1504 = vmatpush1.msra.mxu0 0.0
    %1505 = vmatprep.subr.mxu0 0.0
    %1506 = vmatpush1.msra.mxu0 0.0
    %1507 = vmatprep.subr.mxu0 0.0
    %1508 = vmatpush1.msra.mxu0 0.0
    %1509 = vmatprep.subr.mxu0 0.0
    %1510 = vmatpush1.msra.mxu0 0.0
    %1511 = vmatprep.subr.mxu0 0.0
    %1512 = vmatpush1.msra.mxu0 0.0
    %1513 = vmatprep.subr.mxu0 0.0
    %1514 = vmatpush1.msra.mxu0 0.0
    %1515 = vmatprep.subr.mxu0 0.0
    %1516 = vmatpush1.msra.mxu0 0.0
    %1517 = vmatprep.subr.mxu0 0.0
    %1518 = vmatpush1.msra.mxu0 0.0
    %1519 = vmatprep.subr.mxu0 0.0
    %1520 = vmatpush1.msra.mxu0 0.0
    %1521 = vmatprep.mubr.f32.mxu0 0.0
    %1522 = vmatmul.mubr.f32.gmra.mrb[0].mxu0 %v1455
    %v1523 = vpop.f32.mrb[0].mxu0
    %v1524 = vadd.f32 0.0, %v1523
    %v1525 = vpop.f32.mrb[0].mxu0
    %1526 = vdwg.mxu0
    %1527 = vrot.lane.b32.xlu0 %v381, 64
    %v1528 = vpop.permute.xlu0 %1527
    %v1531 = vsel %vm388, %v1144, 0
    %1533 = vmatprep.subr.mxu0 0.0
    %1534 = vmatpush1.msra.mxu0 %v1528
    %1535 = vmatprep.subr.mxu0 0.0
    %1536 = vmatpush1.msra.mxu0 0.0
    %1537 = vmatprep.subr.mxu0 0.0
    %1538 = vmatpush1.msra.mxu0 0.0
    %1539 = vmatprep.subr.mxu0 0.0
    %1540 = vmatpush1.msra.mxu0 0.0
    %1541 = vmatprep.subr.mxu0 0.0
    %1542 = vmatpush1.msra.mxu0 0.0
    %1543 = vmatprep.subr.mxu0 0.0
    %1544 = vmatpush1.msra.mxu0 0.0
    %1545 = vmatprep.subr.mxu0 0.0
    %1546 = vmatpush1.msra.mxu0 0.0
    %1547 = vmatprep.subr.mxu0 0.0
    %1548 = vmatpush1.msra.mxu0 0.0
    %1549 = vmatprep.subr.mxu0 0.0
    %1550 = vmatpush1.msra.mxu0 0.0
    %1551 = vmatprep.subr.mxu0 0.0
    %1552 = vmatpush1.msra.mxu0 0.0
    %1553 = vmatprep.subr.mxu0 0.0
    %1554 = vmatpush1.msra.mxu0 0.0
    %1555 = vmatprep.subr.mxu0 0.0
    %1556 = vmatpush1.msra.mxu0 0.0
    %1557 = vmatprep.subr.mxu0 0.0
    %1558 = vmatpush1.msra.mxu0 0.0
    %1559 = vmatprep.subr.mxu0 0.0
    %1560 = vmatpush1.msra.mxu0 0.0
    %1561 = vmatprep.subr.mxu0 0.0
    %1562 = vmatpush1.msra.mxu0 0.0
    %1563 = vmatprep.subr.mxu0 0.0
    %1564 = vmatpush1.msra.mxu0 0.0
    %1565 = vmatprep.subr.mxu0 0.0
    %1566 = vmatpush1.msra.mxu0 0.0
    %1567 = vmatprep.subr.mxu0 0.0
    %1568 = vmatpush1.msra.mxu0 0.0
    %1569 = vmatprep.subr.mxu0 0.0
    %1570 = vmatpush1.msra.mxu0 0.0
    %1571 = vmatprep.subr.mxu0 0.0
    %1572 = vmatpush1.msra.mxu0 0.0
    %1573 = vmatprep.subr.mxu0 0.0
    %1574 = vmatpush1.msra.mxu0 0.0
    %1575 = vmatprep.subr.mxu0 0.0
    %1576 = vmatpush1.msra.mxu0 0.0
    %1577 = vmatprep.subr.mxu0 0.0
    %1578 = vmatpush1.msra.mxu0 0.0
    %1579 = vmatprep.subr.mxu0 0.0
    %1580 = vmatpush1.msra.mxu0 0.0
    %1581 = vmatprep.subr.mxu0 0.0
    %1582 = vmatpush1.msra.mxu0 0.0
    %1583 = vmatprep.subr.mxu0 0.0
    %1584 = vmatpush1.msra.mxu0 0.0
    %1585 = vmatprep.subr.mxu0 0.0
    %1586 = vmatpush1.msra.mxu0 0.0
    %1587 = vmatprep.subr.mxu0 0.0
    %1588 = vmatpush1.msra.mxu0 0.0
    %1589 = vmatprep.subr.mxu0 0.0
    %1590 = vmatpush1.msra.mxu0 0.0
    %1591 = vmatprep.subr.mxu0 0.0
    %1592 = vmatpush1.msra.mxu0 0.0
    %1593 = vmatprep.subr.mxu0 0.0
    %1594 = vmatpush1.msra.mxu0 0.0
    %1595 = vmatprep.subr.mxu0 0.0
    %1596 = vmatpush1.msra.mxu0 0.0
    %1597 = vmatprep.mubr.f32.mxu0 0.0
    %1598 = vmatmul.mubr.f32.gmra.mrb[0].mxu0 %v1531
    %v1599 = vpop.f32.mrb[0].mxu0
    %v1600 = vadd.f32 0.0, %v1599
    %v1601 = vpop.f32.mrb[0].mxu0
    %1602 = vdwg.mxu0
    %1603 = vrot.lane.b32.xlu0 %v383, 64
    %v1604 = vpop.permute.xlu0 %1603
    %v1607 = vsel %vm388, %v1145, 0
    %1609 = vmatprep.subr.mxu0 0.0
    %1610 = vmatpush1.msra.mxu0 %v1604
    %1611 = vmatprep.subr.mxu0 0.0
    %1612 = vmatpush1.msra.mxu0 0.0
    %1613 = vmatprep.subr.mxu0 0.0
    %1614 = vmatpush1.msra.mxu0 0.0
    %1615 = vmatprep.subr.mxu0 0.0
    %1616 = vmatpush1.msra.mxu0 0.0
    %1617 = vmatprep.subr.mxu0 0.0
    %1618 = vmatpush1.msra.mxu0 0.0
    %1619 = vmatprep.subr.mxu0 0.0
    %1620 = vmatpush1.msra.mxu0 0.0
    %1621 = vmatprep.subr.mxu0 0.0
    %1622 = vmatpush1.msra.mxu0 0.0
    %1623 = vmatprep.subr.mxu0 0.0
    %1624 = vmatpush1.msra.mxu0 0.0
    %1625 = vmatprep.subr.mxu0 0.0
    %1626 = vmatpush1.msra.mxu0 0.0
    %1627 = vmatprep.subr.mxu0 0.0
    %1628 = vmatpush1.msra.mxu0 0.0
    %1629 = vmatprep.subr.mxu0 0.0
    %1630 = vmatpush1.msra.mxu0 0.0
    %1631 = vmatprep.subr.mxu0 0.0
    %1632 = vmatpush1.msra.mxu0 0.0
    %1633 = vmatprep.subr.mxu0 0.0
    %1634 = vmatpush1.msra.mxu0 0.0
    %1635 = vmatprep.subr.mxu0 0.0
    %1636 = vmatpush1.msra.mxu0 0.0
    %1637 = vmatprep.subr.mxu0 0.0
    %1638 = vmatpush1.msra.mxu0 0.0
    %1639 = vmatprep.subr.mxu0 0.0
    %1640 = vmatpush1.msra.mxu0 0.0
    %1641 = vmatprep.subr.mxu0 0.0
    %1642 = vmatpush1.msra.mxu0 0.0
    %1643 = vmatprep.subr.mxu0 0.0
    %1644 = vmatpush1.msra.mxu0 0.0
    %1645 = vmatprep.subr.mxu0 0.0
    %1646 = vmatpush1.msra.mxu0 0.0
    %1647 = vmatprep.subr.mxu0 0.0
    %1648 = vmatpush1.msra.mxu0 0.0
    %1649 = vmatprep.subr.mxu0 0.0
    %1650 = vmatpush1.msra.mxu0 0.0
    %1651 = vmatprep.subr.mxu0 0.0
    %1652 = vmatpush1.msra.mxu0 0.0
    %1653 = vmatprep.subr.mxu0 0.0
    %1654 = vmatpush1.msra.mxu0 0.0
    %1655 = vmatprep.subr.mxu0 0.0
    %1656 = vmatpush1.msra.mxu0 0.0
    %1657 = vmatprep.subr.mxu0 0.0
    %1658 = vmatpush1.msra.mxu0 0.0
    %1659 = vmatprep.subr.mxu0 0.0
    %1660 = vmatpush1.msra.mxu0 0.0
    %1661 = vmatprep.subr.mxu0 0.0
    %1662 = vmatpush1.msra.mxu0 0.0
    %1663 = vmatprep.subr.mxu0 0.0
    %1664 = vmatpush1.msra.mxu0 0.0
    %1665 = vmatprep.subr.mxu0 0.0
    %1666 = vmatpush1.msra.mxu0 0.0
    %1667 = vmatprep.subr.mxu0 0.0
    %1668 = vmatpush1.msra.mxu0 0.0
    %1669 = vmatprep.subr.mxu0 0.0
    %1670 = vmatpush1.msra.mxu0 0.0
    %1671 = vmatprep.subr.mxu0 0.0
    %1672 = vmatpush1.msra.mxu0 0.0
    %1673 = vmatprep.mubr.f32.mxu0 0.0
    %1674 = vmatmul.mubr.f32.gmra.mrb[0].mxu0 %v1607
    %v1675 = vpop.f32.mrb[0].mxu0
    %v1676 = vadd.f32 0.0, %v1675
    %v1677 = vpop.f32.mrb[0].mxu0
    %1678 = vdwg.mxu0
    %1679 = vrot.lane.b32.xlu0 %v385, 64
    %v1680 = vpop.permute.xlu0 %1679
    %v1683 = vsel %vm388, %v1146, 0
    %1685 = vmatprep.subr.mxu0 0.0
    %1686 = vmatpush1.msra.mxu0 %v1680
    %1687 = vmatprep.subr.mxu0 0.0
    %1688 = vmatpush1.msra.mxu0 0.0
    %1689 = vmatprep.subr.mxu0 0.0
    %1690 = vmatpush1.msra.mxu0 0.0
    %1691 = vmatprep.subr.mxu0 0.0
    %1692 = vmatpush1.msra.mxu0 0.0
    %1693 = vmatprep.subr.mxu0 0.0
    %1694 = vmatpush1.msra.mxu0 0.0
    %1695 = vmatprep.subr.mxu0 0.0
    %1696 = vmatpush1.msra.mxu0 0.0
    %1697 = vmatprep.subr.mxu0 0.0
    %1698 = vmatpush1.msra.mxu0 0.0
    %1699 = vmatprep.subr.mxu0 0.0
    %1700 = vmatpush1.msra.mxu0 0.0
    %1701 = vmatprep.subr.mxu0 0.0
    %1702 = vmatpush1.msra.mxu0 0.0
    %1703 = vmatprep.subr.mxu0 0.0
    %1704 = vmatpush1.msra.mxu0 0.0
    %1705 = vmatprep.subr.mxu0 0.0
    %1706 = vmatpush1.msra.mxu0 0.0
    %1707 = vmatprep.subr.mxu0 0.0
    %1708 = vmatpush1.msra.mxu0 0.0
    %1709 = vmatprep.subr.mxu0 0.0
    %1710 = vmatpush1.msra.mxu0 0.0
    %1711 = vmatprep.subr.mxu0 0.0
    %1712 = vmatpush1.msra.mxu0 0.0
    %1713 = vmatprep.subr.mxu0 0.0
    %1714 = vmatpush1.msra.mxu0 0.0
    %1715 = vmatprep.subr.mxu0 0.0
    %1716 = vmatpush1.msra.mxu0 0.0
    %1717 = vmatprep.subr.mxu0 0.0
    %1718 = vmatpush1.msra.mxu0 0.0
    %1719 = vmatprep.subr.mxu0 0.0
    %1720 = vmatpush1.msra.mxu0 0.0
    %1721 = vmatprep.subr.mxu0 0.0
    %1722 = vmatpush1.msra.mxu0 0.0
    %1723 = vmatprep.subr.mxu0 0.0
    %1724 = vmatpush1.msra.mxu0 0.0
    %1725 = vmatprep.subr.mxu0 0.0
    %1726 = vmatpush1.msra.mxu0 0.0
    %1727 = vmatprep.subr.mxu0 0.0
    %1728 = vmatpush1.msra.mxu0 0.0
    %1729 = vmatprep.subr.mxu0 0.0
    %1730 = vmatpush1.msra.mxu0 0.0
    %1731 = vmatprep.subr.mxu0 0.0
    %1732 = vmatpush1.msra.mxu0 0.0
    %1733 = vmatprep.subr.mxu0 0.0
    %1734 = vmatpush1.msra.mxu0 0.0
    %1735 = vmatprep.subr.mxu0 0.0
    %1736 = vmatpush1.msra.mxu0 0.0
    %1737 = vmatprep.subr.mxu0 0.0
    %1738 = vmatpush1.msra.mxu0 0.0
    %1739 = vmatprep.subr.mxu0 0.0
    %1740 = vmatpush1.msra.mxu0 0.0
    %1741 = vmatprep.subr.mxu0 0.0
    %1742 = vmatpush1.msra.mxu0 0.0
    %1743 = vmatprep.subr.mxu0 0.0
    %1744 = vmatpush1.msra.mxu0 0.0
    %1745 = vmatprep.subr.mxu0 0.0
    %1746 = vmatpush1.msra.mxu0 0.0
    %1747 = vmatprep.subr.mxu0 0.0
    %1748 = vmatpush1.msra.mxu0 0.0
    %1749 = vmatprep.mubr.f32.mxu0 0.0
    %1750 = vmatmul.mubr.f32.gmra.mrb[0].mxu0 %v1683
    %v1751 = vpop.f32.mrb[0].mxu0
    %v1752 = vadd.f32 0.0, %v1751
    %v1753 = vpop.f32.mrb[0].mxu0
    %1754 = vdwg.mxu0
    %v1755 = vld [vmem:[#allocation8] sm:$0xff]
    %v1756 = vld [vmem:[#allocation8 + $0x8] sm:$0xff]
    %v1757 = vld [vmem:[#allocation8 + $0x10] sm:$0xff]
    %v1758 = vld [vmem:[#allocation8 + $0x18] sm:$0xff]
    %v1760 = vsel %vm388, %v1372, 0
    %v1763 = vsel %vm388, %v1448, 0
    %1765 = vmatprep.subr.mxu0 0.0
    %1766 = vmatpush1.msra.mxu0 %v1756
    %1767 = vmatprep.subr.mxu0 0.0
    %1768 = vmatpush1.msra.mxu0 0.0
    %1769 = vmatprep.subr.mxu0 0.0
    %1770 = vmatpush1.msra.mxu0 0.0
    %1771 = vmatprep.subr.mxu0 0.0
    %1772 = vmatpush1.msra.mxu0 0.0
    %1773 = vmatprep.subr.mxu0 0.0
    %1774 = vmatpush1.msra.mxu0 0.0
    %1775 = vmatprep.subr.mxu0 0.0
    %1776 = vmatpush1.msra.mxu0 0.0
    %1777 = vmatprep.subr.mxu0 0.0
    %1778 = vmatpush1.msra.mxu0 0.0
    %1779 = vmatprep.subr.mxu0 0.0
    %1780 = vmatpush1.msra.mxu0 0.0
    %1781 = vmatprep.subr.mxu0 0.0
    %1782 = vmatpush1.msra.mxu0 0.0
    %1783 = vmatprep.subr.mxu0 0.0
    %1784 = vmatpush1.msra.mxu0 0.0
    %1785 = vmatprep.subr.mxu0 0.0
    %1786 = vmatpush1.msra.mxu0 0.0
    %1787 = vmatprep.subr.mxu0 0.0
    %1788 = vmatpush1.msra.mxu0 0.0
    %1789 = vmatprep.subr.mxu0 0.0
    %1790 = vmatpush1.msra.mxu0 0.0
    %1791 = vmatprep.subr.mxu0 0.0
    %1792 = vmatpush1.msra.mxu0 0.0
    %1793 = vmatprep.subr.mxu0 0.0
    %1794 = vmatpush1.msra.mxu0 0.0
    %1795 = vmatprep.subr.mxu0 0.0
    %1796 = vmatpush1.msra.mxu0 0.0
    %1797 = vmatprep.subr.mxu0 0.0
    %1798 = vmatpush1.msra.mxu0 0.0
    %1799 = vmatprep.subr.mxu0 0.0
    %1800 = vmatpush1.msra.mxu0 0.0
    %1801 = vmatprep.subr.mxu0 0.0
    %1802 = vmatpush1.msra.mxu0 0.0
    %1803 = vmatprep.subr.mxu0 0.0
    %1804 = vmatpush1.msra.mxu0 0.0
    %1805 = vmatprep.subr.mxu0 0.0
    %1806 = vmatpush1.msra.mxu0 0.0
    %1807 = vmatprep.subr.mxu0 0.0
    %1808 = vmatpush1.msra.mxu0 0.0
    %1809 = vmatprep.subr.mxu0 0.0
    %1810 = vmatpush1.msra.mxu0 0.0
    %1811 = vmatprep.subr.mxu0 0.0
    %1812 = vmatpush1.msra.mxu0 0.0
    %1813 = vmatprep.subr.mxu0 0.0
    %1814 = vmatpush1.msra.mxu0 0.0
    %1815 = vmatprep.subr.mxu0 0.0
    %1816 = vmatpush1.msra.mxu0 0.0
    %1817 = vmatprep.subr.mxu0 0.0
    %1818 = vmatpush1.msra.mxu0 0.0
    %1819 = vmatprep.subr.mxu0 0.0
    %1820 = vmatpush1.msra.mxu0 0.0
    %1821 = vmatprep.subr.mxu0 0.0
    %1822 = vmatpush1.msra.mxu0 0.0
    %1823 = vmatprep.subr.mxu0 0.0
    %1824 = vmatpush1.msra.mxu0 0.0
    %1825 = vmatprep.subr.mxu0 0.0
    %1826 = vmatpush1.msra.mxu0 0.0
    %1827 = vmatprep.subr.mxu0 0.0
    %1828 = vmatpush1.msra.mxu0 0.0
    %1829 = vmatprep.mubr.f32.mxu0 0.0
    %1830 = vmatmul.mubr.f32.gmra.mrb[0].mxu0 %v1760
    %v1831 = vpop.f32.mrb[0].mxu0
    %v1832 = vadd.f32 0.0, %v1831
    %v1833 = vpop.f32.mrb[0].mxu0
    %1834 = vmatprep.mubr.f32.mxu0 0.0
    %1835 = vmatmul.mubr.f32.gmra.mrb[0].mxu0 %v1763
    %v1836 = vpop.f32.mrb[0].mxu0
    %v1837 = vadd.f32 0.0, %v1836
    %v1838 = vpop.f32.mrb[0].mxu0
    %1839 = vdwg.mxu0
    %v1841 = vsel %vm388, %v1220, 0
    %v1844 = vsel %vm388, %v1296, 0
    %1846 = vmatprep.subr.mxu0 0.0
    %1847 = vmatpush1.msra.mxu0 %v1755
    %1848 = vmatprep.subr.mxu0 0.0
    %1849 = vmatpush1.msra.mxu0 0.0
    %1850 = vmatprep.subr.mxu0 0.0
    %1851 = vmatpush1.msra.mxu0 0.0
    %1852 = vmatprep.subr.mxu0 0.0
    %1853 = vmatpush1.msra.mxu0 0.0
    %1854 = vmatprep.subr.mxu0 0.0
    %1855 = vmatpush1.msra.mxu0 0.0
    %1856 = vmatprep.subr.mxu0 0.0
    %1857 = vmatpush1.msra.mxu0 0.0
    %1858 = vmatprep.subr.mxu0 0.0
    %1859 = vmatpush1.msra.mxu0 0.0
    %1860 = vmatprep.subr.mxu0 0.0
    %1861 = vmatpush1.msra.mxu0 0.0
    %1862 = vmatprep.subr.mxu0 0.0
    %1863 = vmatpush1.msra.mxu0 0.0
    %1864 = vmatprep.subr.mxu0 0.0
    %1865 = vmatpush1.msra.mxu0 0.0
    %1866 = vmatprep.subr.mxu0 0.0
    %1867 = vmatpush1.msra.mxu0 0.0
    %1868 = vmatprep.subr.mxu0 0.0
    %1869 = vmatpush1.msra.mxu0 0.0
    %1870 = vmatprep.subr.mxu0 0.0
    %1871 = vmatpush1.msra.mxu0 0.0
    %1872 = vmatprep.subr.mxu0 0.0
    %1873 = vmatpush1.msra.mxu0 0.0
    %1874 = vmatprep.subr.mxu0 0.0
    %1875 = vmatpush1.msra.mxu0 0.0
    %1876 = vmatprep.subr.mxu0 0.0
    %1877 = vmatpush1.msra.mxu0 0.0
    %1878 = vmatprep.subr.mxu0 0.0
    %1879 = vmatpush1.msra.mxu0 0.0
    %1880 = vmatprep.subr.mxu0 0.0
    %1881 = vmatpush1.msra.mxu0 0.0
    %1882 = vmatprep.subr.mxu0 0.0
    %1883 = vmatpush1.msra.mxu0 0.0
    %1884 = vmatprep.subr.mxu0 0.0
    %1885 = vmatpush1.msra.mxu0 0.0
    %1886 = vmatprep.subr.mxu0 0.0
    %1887 = vmatpush1.msra.mxu0 0.0
    %1888 = vmatprep.subr.mxu0 0.0
    %1889 = vmatpush1.msra.mxu0 0.0
    %1890 = vmatprep.subr.mxu0 0.0
    %1891 = vmatpush1.msra.mxu0 0.0
    %1892 = vmatprep.subr.mxu0 0.0
    %1893 = vmatpush1.msra.mxu0 0.0
    %1894 = vmatprep.subr.mxu0 0.0
    %1895 = vmatpush1.msra.mxu0 0.0
    %1896 = vmatprep.subr.mxu0 0.0
    %1897 = vmatpush1.msra.mxu0 0.0
    %1898 = vmatprep.subr.mxu0 0.0
    %1899 = vmatpush1.msra.mxu0 0.0
    %1900 = vmatprep.subr.mxu0 0.0
    %1901 = vmatpush1.msra.mxu0 0.0
    %1902 = vmatprep.subr.mxu0 0.0
    %1903 = vmatpush1.msra.mxu0 0.0
    %1904 = vmatprep.subr.mxu0 0.0
    %1905 = vmatpush1.msra.mxu0 0.0
    %1906 = vmatprep.subr.mxu0 0.0
    %1907 = vmatpush1.msra.mxu0 0.0
    %1908 = vmatprep.subr.mxu0 0.0
    %1909 = vmatpush1.msra.mxu0 0.0
    %1910 = vmatprep.mubr.f32.mxu0 0.0
    %1911 = vmatmul.mubr.f32.gmra.mrb[0].mxu0 %v1841
    %v1912 = vpop.f32.mrb[0].mxu0
    %v1913 = vadd.f32 %v1832, %v1912
    %v1914 = vpop.f32.mrb[0].mxu0
    %1915 = vmatprep.mubr.f32.mxu0 0.0
    %1916 = vmatmul.mubr.f32.gmra.mrb[0].mxu0 %v1844
    %v1917 = vpop.f32.mrb[0].mxu0
    %v1918 = vadd.f32 %v1837, %v1917
    %v1919 = vpop.f32.mrb[0].mxu0
    %1920 = vdwg.mxu0
    %v1922 = vsel %vm388, %v1524, 0
    %v1925 = vsel %vm388, %v1600, 0
    %1927 = vmatprep.subr.mxu0 0.0
    %1928 = vmatpush1.msra.mxu0 %v1757
    %1929 = vmatprep.subr.mxu0 0.0
    %1930 = vmatpush1.msra.mxu0 0.0
    %1931 = vmatprep.subr.mxu0 0.0
    %1932 = vmatpush1.msra.mxu0 0.0
    %1933 = vmatprep.subr.mxu0 0.0
    %1934 = vmatpush1.msra.mxu0 0.0
    %1935 = vmatprep.subr.mxu0 0.0
    %1936 = vmatpush1.msra.mxu0 0.0
    %1937 = vmatprep.subr.mxu0 0.0
    %1938 = vmatpush1.msra.mxu0 0.0
    %1939 = vmatprep.subr.mxu0 0.0
    %1940 = vmatpush1.msra.mxu0 0.0
    %1941 = vmatprep.subr.mxu0 0.0
    %1942 = vmatpush1.msra.mxu0 0.0
    %1943 = vmatprep.subr.mxu0 0.0
    %1944 = vmatpush1.msra.mxu0 0.0
    %1945 = vmatprep.subr.mxu0 0.0
    %1946 = vmatpush1.msra.mxu0 0.0
    %1947 = vmatprep.subr.mxu0 0.0
    %1948 = vmatpush1.msra.mxu0 0.0
    %1949 = vmatprep.subr.mxu0 0.0
    %1950 = vmatpush1.msra.mxu0 0.0
    %1951 = vmatprep.subr.mxu0 0.0
    %1952 = vmatpush1.msra.mxu0 0.0
    %1953 = vmatprep.subr.mxu0 0.0
    %1954 = vmatpush1.msra.mxu0 0.0
    %1955 = vmatprep.subr.mxu0 0.0
    %1956 = vmatpush1.msra.mxu0 0.0
    %1957 = vmatprep.subr.mxu0 0.0
    %1958 = vmatpush1.msra.mxu0 0.0
    %1959 = vmatprep.subr.mxu0 0.0
    %1960 = vmatpush1.msra.mxu0 0.0
    %1961 = vmatprep.subr.mxu0 0.0
    %1962 = vmatpush1.msra.mxu0 0.0
    %1963 = vmatprep.subr.mxu0 0.0
    %1964 = vmatpush1.msra.mxu0 0.0
    %1965 = vmatprep.subr.mxu0 0.0
    %1966 = vmatpush1.msra.mxu0 0.0
    %1967 = vmatprep.subr.mxu0 0.0
    %1968 = vmatpush1.msra.mxu0 0.0
    %1969 = vmatprep.subr.mxu0 0.0
    %1970 = vmatpush1.msra.mxu0 0.0
    %1971 = vmatprep.subr.mxu0 0.0
    %1972 = vmatpush1.msra.mxu0 0.0
    %1973 = vmatprep.subr.mxu0 0.0
    %1974 = vmatpush1.msra.mxu0 0.0
    %1975 = vmatprep.subr.mxu0 0.0
    %1976 = vmatpush1.msra.mxu0 0.0
    %1977 = vmatprep.subr.mxu0 0.0
    %1978 = vmatpush1.msra.mxu0 0.0
    %1979 = vmatprep.subr.mxu0 0.0
    %1980 = vmatpush1.msra.mxu0 0.0
    %1981 = vmatprep.subr.mxu0 0.0
    %1982 = vmatpush1.msra.mxu0 0.0
    %1983 = vmatprep.subr.mxu0 0.0
    %1984 = vmatpush1.msra.mxu0 0.0
    %1985 = vmatprep.subr.mxu0 0.0
    %1986 = vmatpush1.msra.mxu0 0.0
    %1987 = vmatprep.subr.mxu0 0.0
    %1988 = vmatpush1.msra.mxu0 0.0
    %1989 = vmatprep.subr.mxu0 0.0
    %1990 = vmatpush1.msra.mxu0 0.0
    %1991 = vmatprep.mubr.f32.mxu0 0.0
    %1992 = vmatmul.mubr.f32.gmra.mrb[0].mxu0 %v1922
    %v1993 = vpop.f32.mrb[0].mxu0
    %v1994 = vadd.f32 0.0, %v1993
    %v1995 = vpop.f32.mrb[0].mxu0
    %1996 = vmatprep.mubr.f32.mxu0 0.0
    %1997 = vmatmul.mubr.f32.gmra.mrb[0].mxu0 %v1925
    %v1998 = vpop.f32.mrb[0].mxu0
    %v1999 = vadd.f32 0.0, %v1998
    %v2000 = vpop.f32.mrb[0].mxu0
    %2001 = vdwg.mxu0
    %v2002 = vadd.f32 %v1913, %v1994
    %v2003 = vadd.f32 %v1918, %v1999
    %v2005 = vsel %vm388, %v1676, 0
    %v2008 = vsel %vm388, %v1752, 0
    %2010 = vmatprep.subr.mxu0 0.0
    %2011 = vmatpush1.msra.mxu0 %v1758
    %2012 = vmatprep.subr.mxu0 0.0
    %2013 = vmatpush1.msra.mxu0 0.0
    %2014 = vmatprep.subr.mxu0 0.0
    %2015 = vmatpush1.msra.mxu0 0.0
    %2016 = vmatprep.subr.mxu0 0.0
    %2017 = vmatpush1.msra.mxu0 0.0
    %2018 = vmatprep.subr.mxu0 0.0
    %2019 = vmatpush1.msra.mxu0 0.0
    %2020 = vmatprep.subr.mxu0 0.0
    %2021 = vmatpush1.msra.mxu0 0.0
    %2022 = vmatprep.subr.mxu0 0.0
    %2023 = vmatpush1.msra.mxu0 0.0
    %2024 = vmatprep.subr.mxu0 0.0
    %2025 = vmatpush1.msra.mxu0 0.0
    %2026 = vmatprep.subr.mxu0 0.0
    %2027 = vmatpush1.msra.mxu0 0.0
    %2028 = vmatprep.subr.mxu0 0.0
    %2029 = vmatpush1.msra.mxu0 0.0
    %2030 = vmatprep.subr.mxu0 0.0
    %2031 = vmatpush1.msra.mxu0 0.0
    %2032 = vmatprep.subr.mxu0 0.0
    %2033 = vmatpush1.msra.mxu0 0.0
    %2034 = vmatprep.subr.mxu0 0.0
    %2035 = vmatpush1.msra.mxu0 0.0
    %2036 = vmatprep.subr.mxu0 0.0
    %2037 = vmatpush1.msra.mxu0 0.0
    %2038 = vmatprep.subr.mxu0 0.0
    %2039 = vmatpush1.msra.mxu0 0.0
    %2040 = vmatprep.subr.mxu0 0.0
    %2041 = vmatpush1.msra.mxu0 0.0
    %2042 = vmatprep.subr.mxu0 0.0
    %2043 = vmatpush1.msra.mxu0 0.0
    %2044 = vmatprep.subr.mxu0 0.0
    %2045 = vmatpush1.msra.mxu0 0.0
    %2046 = vmatprep.subr.mxu0 0.0
    %2047 = vmatpush1.msra.mxu0 0.0
    %2048 = vmatprep.subr.mxu0 0.0
    %2049 = vmatpush1.msra.mxu0 0.0
    %2050 = vmatprep.subr.mxu0 0.0
    %2051 = vmatpush1.msra.mxu0 0.0
    %2052 = vmatprep.subr.mxu0 0.0
    %2053 = vmatpush1.msra.mxu0 0.0
    %2054 = vmatprep.subr.mxu0 0.0
    %2055 = vmatpush1.msra.mxu0 0.0
    %2056 = vmatprep.subr.mxu0 0.0
    %2057 = vmatpush1.msra.mxu0 0.0
    %2058 = vmatprep.subr.mxu0 0.0
    %2059 = vmatpush1.msra.mxu0 0.0
    %2060 = vmatprep.subr.mxu0 0.0
    %2061 = vmatpush1.msra.mxu0 0.0
    %2062 = vmatprep.subr.mxu0 0.0
    %2063 = vmatpush1.msra.mxu0 0.0
    %2064 = vmatprep.subr.mxu0 0.0
    %2065 = vmatpush1.msra.mxu0 0.0
    %2066 = vmatprep.subr.mxu0 0.0
    %2067 = vmatpush1.msra.mxu0 0.0
    %2068 = vmatprep.subr.mxu0 0.0
    %2069 = vmatpush1.msra.mxu0 0.0
    %2070 = vmatprep.subr.mxu0 0.0
    %2071 = vmatpush1.msra.mxu0 0.0
    %2072 = vmatprep.subr.mxu0 0.0
    %2073 = vmatpush1.msra.mxu0 0.0
    %2074 = vmatprep.mubr.f32.mxu0 0.0
    %2075 = vmatmul.mubr.f32.gmra.mrb[0].mxu0 %v2005
    %v2076 = vpop.f32.mrb[0].mxu0
    %v2077 = vadd.f32 0.0, %v2076
    %v2078 = vpop.f32.mrb[0].mxu0
    %2079 = vmatprep.mubr.f32.mxu0 0.0
    %2080 = vmatmul.mubr.f32.gmra.mrb[0].mxu0 %v2008
    %v2081 = vpop.f32.mrb[0].mxu0
    %v2082 = vadd.f32 0.0, %v2081
    %v2083 = vpop.f32.mrb[0].mxu0
    %2084 = vdwg.mxu0
    %v2085 = vadd.f32 %v2002, %v2077
    %v2086 = vadd.f32 %v2003, %v2082
    %v2087 = vld [vmem:[#allocation10 + $0x3] sm:$0x1]
    %v2088 = vlaneseq
    %v2089 = vshrl.u32 %v2088, 7
    %v2090 = vsub.s32 0, %v2089
    %v2091 = vrot.slane %v2087, %v2090
    %v2092 = vadd.f32 %v2085, %v2091
    %v2093 = vadd.f32 %v2086, %v2091
    %v2094 = vadd.f32 %v280, %v2092
    %v2095 = vadd.f32 %v281, %v2093
    %v2096 = vld [vmem:[#allocation10 + $0x6] sm:$0x1]
    %v2097 = vld [vmem:[#allocation10 + $0x7] sm:$0x1]
    %v2098 = vsel %vm242, %v2094, 0.0
    %2099 = vadd.xlane.f32.xlu0 %v2098
    %v2100 = vpop.xlane.xlu0 %2099
    %v2101 = vsel %vm242, %v2095, 0.0
    %2102 = vadd.xlane.f32.xlu0 %v2101
    %v2103 = vpop.xlane.xlu0 %2102
    %v2104 = vmul.f32 %v2100, %v249
    %v2105 = vmul.f32 %v2103, %v249
    %v2106 = vsub.f32 %v2094, %v2104
    %v2107 = vsub.f32 %v2095, %v2105
    %v2108 = vmul.f32 %v2106, %v2106
    %v2109 = vmul.f32 %v2107, %v2107
    %v2110 = vsel %vm242, %v2108, 0.0
    %2111 = vadd.xlane.f32.xlu0 %v2110
    %v2112 = vpop.xlane.xlu0 %2111
    %v2113 = vsel %vm242, %v2109, 0.0
    %2114 = vadd.xlane.f32.xlu0 %v2113
    %v2115 = vpop.xlane.xlu0 %2114
    %v2116 = vmul.f32 %v2112, %v249
    %v2117 = vmul.f32 %v2115, %v249
    %v2118 = vadd.f32 %v2116, 1e-05
    %v2119 = vadd.f32 %v2117, 1e-05
    %v2120 = vrsqrt.pop %v2118
    %v2121 = vrsqrt.pop %v2119
    %v2122 = vmul.f32 %v2106, %v2120
    %v2123 = vmul.f32 %v2107, %v2121
    %v2124 = vlaneseq
    %v2125 = vshrl.u32 %v2124, 7
    %v2126 = vsub.s32 0, %v2125
    %v2127 = vrot.slane %v2096, %v2126
    %v2128 = vmul.f32 %v2122, %v2127
    %v2129 = vmul.f32 %v2123, %v2127
    %v2130 = vlaneseq
    %v2131 = vshrl.u32 %v2130, 7
    %v2132 = vsub.s32 0, %v2131
    %v2133 = vrot.slane %v2097, %v2132
    %v2134 = vadd.f32 %v2128, %v2133
    %v2135 = vadd.f32 %v2129, %v2133
    %s2136 = scalar_lea.vmem [#allocation8], 32
    %v2137 = vld [vmem:[%s2136] sm:$0xff]
    %v2138 = vld [vmem:[%s2136 + $0x8] sm:$0xff]
    %v2139 = vld [vmem:[%s2136 + $0x10] sm:$0xff]
    %v2140 = vld [vmem:[%s2136 + $0x18] sm:$0xff]
    %v2141 = vld [vmem:[#allocation10 + $0x4] sm:$0x1]
    %v2142 = vlaneseq
    %v2143 = vshrl.u32 %v2142, 7
    %v2144 = vsub.s32 0, %v2143
    %v2145 = vrot.slane %v2141, %v2144
    %v2147 = vsel %vm242, %v2134, 0
    %v2150 = vsel %vm242, %v2135, 0
    %2152 = vmatprep.subr.mxu0 0.0
    %2153 = vmatpush1.msra.mxu0 %v2137
    %2154 = vmatprep.subr.mxu0 0.0
    %2155 = vmatpush1.msra.mxu0 %v2138
    %2156 = vmatprep.subr.mxu0 0.0
    %2157 = vmatpush1.msra.mxu0 %v2139
    %2158 = vmatprep.subr.mxu0 0.0
    %2159 = vmatpush1.msra.mxu0 %v2140
    %2160 = vmatprep.subr.mxu0 0.0
    %2161 = vmatpush1.msra.mxu0 0.0
    %2162 = vmatprep.subr.mxu0 0.0
    %2163 = vmatpush1.msra.mxu0 0.0
    %2164 = vmatprep.subr.mxu0 0.0
    %2165 = vmatpush1.msra.mxu0 0.0
    %2166 = vmatprep.subr.mxu0 0.0
    %2167 = vmatpush1.msra.mxu0 0.0
    %2168 = vmatprep.subr.mxu0 0.0
    %2169 = vmatpush1.msra.mxu0 0.0
    %2170 = vmatprep.subr.mxu0 0.0
    %2171 = vmatpush1.msra.mxu0 0.0
    %2172 = vmatprep.subr.mxu0 0.0
    %2173 = vmatpush1.msra.mxu0 0.0
    %2174 = vmatprep.subr.mxu0 0.0
    %2175 = vmatpush1.msra.mxu0 0.0
    %2176 = vmatprep.subr.mxu0 0.0
    %2177 = vmatpush1.msra.mxu0 0.0
    %2178 = vmatprep.subr.mxu0 0.0
    %2179 = vmatpush1.msra.mxu0 0.0
    %2180 = vmatprep.subr.mxu0 0.0
    %2181 = vmatpush1.msra.mxu0 0.0
    %2182 = vmatprep.subr.mxu0 0.0
    %2183 = vmatpush1.msra.mxu0 0.0
    %2184 = vmatprep.subr.mxu0 0.0
    %2185 = vmatpush1.msra.mxu0 0.0
    %2186 = vmatprep.subr.mxu0 0.0
    %2187 = vmatpush1.msra.mxu0 0.0
    %2188 = vmatprep.subr.mxu0 0.0
    %2189 = vmatpush1.msra.mxu0 0.0
    %2190 = vmatprep.subr.mxu0 0.0
    %2191 = vmatpush1.msra.mxu0 0.0
    %2192 = vmatprep.subr.mxu0 0.0
    %2193 = vmatpush1.msra.mxu0 0.0
    %2194 = vmatprep.subr.mxu0 0.0
    %2195 = vmatpush1.msra.mxu0 0.0
    %2196 = vmatprep.subr.mxu0 0.0
    %2197 = vmatpush1.msra.mxu0 0.0
    %2198 = vmatprep.subr.mxu0 0.0
    %2199 = vmatpush1.msra.mxu0 0.0
    %2200 = vmatprep.subr.mxu0 0.0
    %2201 = vmatpush1.msra.mxu0 0.0
    %2202 = vmatprep.subr.mxu0 0.0
    %2203 = vmatpush1.msra.mxu0 0.0
    %2204 = vmatprep.subr.mxu0 0.0
    %2205 = vmatpush1.msra.mxu0 0.0
    %2206 = vmatprep.subr.mxu0 0.0
    %2207 = vmatpush1.msra.mxu0 0.0
    %2208 = vmatprep.subr.mxu0 0.0
    %2209 = vmatpush1.msra.mxu0 0.0
    %2210 = vmatprep.subr.mxu0 0.0
    %2211 = vmatpush1.msra.mxu0 0.0
    %2212 = vmatprep.subr.mxu0 0.0
    %2213 = vmatpush1.msra.mxu0 0.0
    %2214 = vmatprep.subr.mxu0 0.0
    %2215 = vmatpush1.msra.mxu0 0.0
    %2216 = vmatprep.mubr.f32.mxu0 0.0
    %2217 = vmatmul.mubr.f32.gmra.mrb[0].mxu0 %v2147
    %v2218 = vpop.f32.mrb[0].mxu0
    %v2219 = vadd.f32 %v2145, %v2218
    %v2220 = vpop.f32.mrb[0].mxu0
    %2221 = vmatprep.mubr.f32.mxu0 0.0
    %2222 = vmatmul.mubr.f32.gmra.mrb[0].mxu0 %v2150
    %v2223 = vpop.f32.mrb[0].mxu0
    %v2224 = vadd.f32 %v2145, %v2223
    %v2225 = vpop.f32.mrb[0].mxu0
    %2226 = vdwg.mxu0
    %v2227 = vmul.f32 %v2219, 0.5
    %v2228 = vmul.f32 %v2224, 0.5
    %v2229 = vmul.f32 %v2219, 0.70710677
    %v2230 = vmul.f32 %v2224, 0.70710677
    %v2231 = verf.f32.pop %v2229
    %v2232 = verf.f32.pop %v2230
    %v2233 = vadd.f32 %v2231, 1.0
    %v2234 = vadd.f32 %v2232, 1.0
    %v2235 = vmul.f32 %v2227, %v2233
    %v2236 = vmul.f32 %v2228, %v2234
    %s2237 = scalar_lea.vmem [#allocation8], 64
    %v2238 = vld [vmem:[%s2237] sm:$0xff]
    %v2239 = vld [vmem:[%s2237 + $0x8] sm:$0xff]
    %v2240 = vld [vmem:[%s2237 + $0x10] sm:$0xff]
    %v2241 = vld [vmem:[%s2237 + $0x18] sm:$0xff]
    %v2242 = vld [vmem:[#allocation10 + $0x5] sm:$0x1]
    %v2243 = vlaneseq
    %v2244 = vshrl.u32 %v2243, 7
    %v2245 = vsub.s32 0, %v2244
    %v2246 = vrot.slane %v2242, %v2245
    %v2248 = vsel %vm242, %v2235, 0
    %v2251 = vsel %vm242, %v2236, 0
    %2253 = vmatprep.subr.mxu0 0.0
    %2254 = vmatpush1.msra.mxu0 %v2238
    %2255 = vmatprep.subr.mxu0 0.0
    %2256 = vmatpush1.msra.mxu0 %v2239
    %2257 = vmatprep.subr.mxu0 0.0
    %2258 = vmatpush1.msra.mxu0 %v2240
    %2259 = vmatprep.subr.mxu0 0.0
    %2260 = vmatpush1.msra.mxu0 %v2241
    %2261 = vmatprep.subr.mxu0 0.0
    %2262 = vmatpush1.msra.mxu0 0.0
    %2263 = vmatprep.subr.mxu0 0.0
    %2264 = vmatpush1.msra.mxu0 0.0
    %2265 = vmatprep.subr.mxu0 0.0
    %2266 = vmatpush1.msra.mxu0 0.0
    %2267 = vmatprep.subr.mxu0 0.0
    %2268 = vmatpush1.msra.mxu0 0.0
    %2269 = vmatprep.subr.mxu0 0.0
    %2270 = vmatpush1.msra.mxu0 0.0
    %2271 = vmatprep.subr.mxu0 0.0
    %2272 = vmatpush1.msra.mxu0 0.0
    %2273 = vmatprep.subr.mxu0 0.0
    %2274 = vmatpush1.msra.mxu0 0.0
    %2275 = vmatprep.subr.mxu0 0.0
    %2276 = vmatpush1.msra.mxu0 0.0
    %2277 = vmatprep.subr.mxu0 0.0
    %2278 = vmatpush1.msra.mxu0 0.0
    %2279 = vmatprep.subr.mxu0 0.0
    %2280 = vmatpush1.msra.mxu0 0.0
    %2281 = vmatprep.subr.mxu0 0.0
    %2282 = vmatpush1.msra.mxu0 0.0
    %2283 = vmatprep.subr.mxu0 0.0
    %2284 = vmatpush1.msra.mxu0 0.0
    %2285 = vmatprep.subr.mxu0 0.0
    %2286 = vmatpush1.msra.mxu0 0.0
    %2287 = vmatprep.subr.mxu0 0.0
    %2288 = vmatpush1.msra.mxu0 0.0
    %2289 = vmatprep.subr.mxu0 0.0
    %2290 = vmatpush1.msra.mxu0 0.0
    %2291 = vmatprep.subr.mxu0 0.0
    %2292 = vmatpush1.msra.mxu0 0.0
    %2293 = vmatprep.subr.mxu0 0.0
    %2294 = vmatpush1.msra.mxu0 0.0
    %2295 = vmatprep.subr.mxu0 0.0
    %2296 = vmatpush1.msra.mxu0 0.0
    %2297 = vmatprep.subr.mxu0 0.0
    %2298 = vmatpush1.msra.mxu0 0.0
    %2299 = vmatprep.subr.mxu0 0.0
    %2300 = vmatpush1.msra.mxu0 0.0
    %2301 = vmatprep.subr.mxu0 0.0
    %2302 = vmatpush1.msra.mxu0 0.0
    %2303 = vmatprep.subr.mxu0 0.0
    %2304 = vmatpush1.msra.mxu0 0.0
    %2305 = vmatprep.subr.mxu0 0.0
    %2306 = vmatpush1.msra.mxu0 0.0
    %2307 = vmatprep.subr.mxu0 0.0
    %2308 = vmatpush1.msra.mxu0 0.0
    %2309 = vmatprep.subr.mxu0 0.0
    %2310 = vmatpush1.msra.mxu0 0.0
    %2311 = vmatprep.subr.mxu0 0.0
    %2312 = vmatpush1.msra.mxu0 0.0
    %2313 = vmatprep.subr.mxu0 0.0
    %2314 = vmatpush1.msra.mxu0 0.0
    %2315 = vmatprep.subr.mxu0 0.0
    %2316 = vmatpush1.msra.mxu0 0.0
    %2317 = vmatprep.mubr.f32.mxu0 0.0
    %2318 = vmatmul.mubr.f32.gmra.mrb[0].mxu0 %v2248
    %v2319 = vpop.f32.mrb[0].mxu0
    %v2320 = vadd.f32 %v2246, %v2319
    %v2321 = vpop.f32.mrb[0].mxu0
    %2322 = vmatprep.mubr.f32.mxu0 0.0
    %2323 = vmatmul.mubr.f32.gmra.mrb[0].mxu0 %v2251
    %v2324 = vpop.f32.mrb[0].mxu0
    %v2325 = vadd.f32 %v2246, %v2324
    %v2326 = vpop.f32.mrb[0].mxu0
    %2327 = vdwg.mxu0
    %v2328 = vadd.f32 %v2134, %v2320
    %v2329 = vadd.f32 %v2135, %v2325
    %v2330 = vld [vmem:[#allocation10 + $0x8] sm:$0x1]
    %v2331 = vld [vmem:[#allocation10 + $0x9] sm:$0x1]
    %v2332 = vsel %vm242, %v2328, 0.0
    %2333 = vadd.xlane.f32.xlu0 %v2332
    %v2334 = vpop.xlane.xlu0 %2333
    %v2335 = vsel %vm242, %v2329, 0.0
    %2336 = vadd.xlane.f32.xlu0 %v2335
    %v2337 = vpop.xlane.xlu0 %2336
    %v2338 = vmul.f32 %v2334, %v249
    %v2339 = vmul.f32 %v2337, %v249
    %v2340 = vsub.f32 %v2328, %v2338
    %v2341 = vsub.f32 %v2329, %v2339
    %v2342 = vmul.f32 %v2340, %v2340
    %v2343 = vmul.f32 %v2341, %v2341
    %v2344 = vsel %vm242, %v2342, 0.0
    %2345 = vadd.xlane.f32.xlu0 %v2344
    %v2346 = vpop.xlane.xlu0 %2345
    %v2347 = vsel %vm242, %v2343, 0.0
    %2348 = vadd.xlane.f32.xlu0 %v2347
    %v2349 = vpop.xlane.xlu0 %2348
    %v2350 = vmul.f32 %v2346, %v249
    %v2351 = vmul.f32 %v2349, %v249
    %v2352 = vadd.f32 %v2350, 1e-05
    %v2353 = vadd.f32 %v2351, 1e-05
    %v2354 = vrsqrt.pop %v2352
    %v2355 = vrsqrt.pop %v2353
    %v2356 = vmul.f32 %v2340, %v2354
    %v2357 = vmul.f32 %v2341, %v2355
    %v2358 = vlaneseq
    %v2359 = vshrl.u32 %v2358, 7
    %v2360 = vsub.s32 0, %v2359
    %v2361 = vrot.slane %v2330, %v2360
    %v2362 = vmul.f32 %v2356, %v2361
    %v2363 = vmul.f32 %v2357, %v2361
    %v2364 = vlaneseq
    %v2365 = vshrl.u32 %v2364, 7
    %v2366 = vsub.s32 0, %v2365
    %v2367 = vrot.slane %v2331, %v2366
    %v2368 = vadd.f32 %v2362, %v2367
    %v2369 = vadd.f32 %v2363, %v2367
    %s2370 = scalar_lea.vmem [#allocation7], 32
    %v2371 = vld [vmem:[%s2370] sm:$0xff]
    %v2372 = vld [vmem:[%s2370 + $0x8] sm:$0xff]
    %v2373 = vld [vmem:[%s2370 + $0x10] sm:$0xff]
    %v2374 = vld [vmem:[%s2370 + $0x18] sm:$0xff]
    %v2375 = vld [vmem:[%s4 + $0x1] sm:$0x1]
    %v2376 = vlaneseq
    %v2377 = vshrl.u32 %v2376, 7
    %v2378 = vsub.s32 0, %v2377
    %v2379 = vrot.slane %v2375, %v2378
    %v2381 = vsel %vm242, %v2368, 0
    %v2384 = vsel %vm242, %v2369, 0
    %2386 = vmatprep.subr.mxu0 0.0
    %2387 = vmatpush1.msra.mxu0 %v2371
    %2388 = vmatprep.subr.mxu0 0.0
    %2389 = vmatpush1.msra.mxu0 %v2372
    %2390 = vmatprep.subr.mxu0 0.0
    %2391 = vmatpush1.msra.mxu0 %v2373
    %2392 = vmatprep.subr.mxu0 0.0
    %2393 = vmatpush1.msra.mxu0 %v2374
    %2394 = vmatprep.subr.mxu0 0.0
    %2395 = vmatpush1.msra.mxu0 0.0
    %2396 = vmatprep.subr.mxu0 0.0
    %2397 = vmatpush1.msra.mxu0 0.0
    %2398 = vmatprep.subr.mxu0 0.0
    %2399 = vmatpush1.msra.mxu0 0.0
    %2400 = vmatprep.subr.mxu0 0.0
    %2401 = vmatpush1.msra.mxu0 0.0
    %2402 = vmatprep.subr.mxu0 0.0
    %2403 = vmatpush1.msra.mxu0 0.0
    %2404 = vmatprep.subr.mxu0 0.0
    %2405 = vmatpush1.msra.mxu0 0.0
    %2406 = vmatprep.subr.mxu0 0.0
    %2407 = vmatpush1.msra.mxu0 0.0
    %2408 = vmatprep.subr.mxu0 0.0
    %2409 = vmatpush1.msra.mxu0 0.0
    %2410 = vmatprep.subr.mxu0 0.0
    %2411 = vmatpush1.msra.mxu0 0.0
    %2412 = vmatprep.subr.mxu0 0.0
    %2413 = vmatpush1.msra.mxu0 0.0
    %2414 = vmatprep.subr.mxu0 0.0
    %2415 = vmatpush1.msra.mxu0 0.0
    %2416 = vmatprep.subr.mxu0 0.0
    %2417 = vmatpush1.msra.mxu0 0.0
    %2418 = vmatprep.subr.mxu0 0.0
    %2419 = vmatpush1.msra.mxu0 0.0
    %2420 = vmatprep.subr.mxu0 0.0
    %2421 = vmatpush1.msra.mxu0 0.0
    %2422 = vmatprep.subr.mxu0 0.0
    %2423 = vmatpush1.msra.mxu0 0.0
    %2424 = vmatprep.subr.mxu0 0.0
    %2425 = vmatpush1.msra.mxu0 0.0
    %2426 = vmatprep.subr.mxu0 0.0
    %2427 = vmatpush1.msra.mxu0 0.0
    %2428 = vmatprep.subr.mxu0 0.0
    %2429 = vmatpush1.msra.mxu0 0.0
    %2430 = vmatprep.subr.mxu0 0.0
    %2431 = vmatpush1.msra.mxu0 0.0
    %2432 = vmatprep.subr.mxu0 0.0
    %2433 = vmatpush1.msra.mxu0 0.0
    %2434 = vmatprep.subr.mxu0 0.0
    %2435 = vmatpush1.msra.mxu0 0.0
    %2436 = vmatprep.subr.mxu0 0.0
    %2437 = vmatpush1.msra.mxu0 0.0
    %2438 = vmatprep.subr.mxu0 0.0
    %2439 = vmatpush1.msra.mxu0 0.0
    %2440 = vmatprep.subr.mxu0 0.0
    %2441 = vmatpush1.msra.mxu0 0.0
    %2442 = vmatprep.subr.mxu0 0.0
    %2443 = vmatpush1.msra.mxu0 0.0
    %2444 = vmatprep.subr.mxu0 0.0
    %2445 = vmatpush1.msra.mxu0 0.0
    %2446 = vmatprep.subr.mxu0 0.0
    %2447 = vmatpush1.msra.mxu0 0.0
    %2448 = vmatprep.subr.mxu0 0.0
    %2449 = vmatpush1.msra.mxu0 0.0
    %2450 = vmatprep.mubr.f32.mxu0 0.0
    %2451 = vmatmul.mubr.f32.gmra.mrb[0].mxu0 %v2381
    %v2452 = vpop.f32.mrb[0].mxu0
    %v2453 = vadd.f32 %v2379, %v2452
    %v2454 = vpop.f32.mrb[0].mxu0
    %2455 = vmatprep.mubr.f32.mxu0 0.0
    %2456 = vmatmul.mubr.f32.gmra.mrb[0].mxu0 %v2384
    %v2457 = vpop.f32.mrb[0].mxu0
    %v2458 = vadd.f32 %v2379, %v2457
    %v2459 = vpop.f32.mrb[0].mxu0
    %2460 = vdwg.mxu0
    %2463 = vrot.lane.b32.xlu0 %v2453, 120
    %v2464 = vpop.permute.xlu0 %2463
    %2465 = vrot.lane.b32.xlu0 %v2458, 120
    %v2466 = vpop.permute.xlu0 %2465
    %2467 = vrot.lane.b32.xlu0 %v2453, 112
    %v2468 = vpop.permute.xlu0 %2467
    %2469 = vrot.lane.b32.xlu0 %v2458, 112
    %v2470 = vpop.permute.xlu0 %2469
    %2471 = vrot.lane.b32.xlu0 %v2453, 104
    %v2472 = vpop.permute.xlu0 %2471
    %2473 = vrot.lane.b32.xlu0 %v2458, 104
    %v2474 = vpop.permute.xlu0 %2473
    %2475 = vrot.lane.b32.xlu0 %v2453, 96
    %v2476 = vpop.permute.xlu0 %2475
    %v2477 = vsel %vm388, %v2476, 0
    %v2479 = vsel %vm388, %v2453, 0
    %2481 = vmatprep.subr.mxu0 0.0
    %2482 = vmatpush1.xpose.msra.mxu0 %v2479
    %2483 = vmatprep.subr.mxu0 0.0
    %2484 = vmatpush1.xpose.msra.mxu0 0.0
    %2485 = vmatprep.subr.mxu0 0.0
    %2486 = vmatpush1.xpose.msra.mxu0 0.0
    %2487 = vmatprep.subr.mxu0 0.0
    %2488 = vmatpush1.xpose.msra.mxu0 0.0
    %2489 = vmatprep.subr.mxu0 0.0
    %2490 = vmatpush1.xpose.msra.mxu0 0.0
    %2491 = vmatprep.subr.mxu0 0.0
    %2492 = vmatpush1.xpose.msra.mxu0 0.0
    %2493 = vmatprep.subr.mxu0 0.0
    %2494 = vmatpush1.xpose.msra.mxu0 0.0
    %2495 = vmatprep.subr.mxu0 0.0
    %2496 = vmatpush1.xpose.msra.mxu0 0.0
    %2497 = vmatprep.subr.mxu0 0.0
    %2498 = vmatpush1.xpose.msra.mxu0 0.0
    %2499 = vmatprep.subr.mxu0 0.0
    %2500 = vmatpush1.xpose.msra.mxu0 0.0
    %2501 = vmatprep.subr.mxu0 0.0
    %2502 = vmatpush1.xpose.msra.mxu0 0.0
    %2503 = vmatprep.subr.mxu0 0.0
    %2504 = vmatpush1.xpose.msra.mxu0 0.0
    %2505 = vmatprep.subr.mxu0 0.0
    %2506 = vmatpush1.xpose.msra.mxu0 0.0
    %2507 = vmatprep.subr.mxu0 0.0
    %2508 = vmatpush1.xpose.msra.mxu0 0.0
    %2509 = vmatprep.subr.mxu0 0.0
    %2510 = vmatpush1.xpose.msra.mxu0 0.0
    %2511 = vmatprep.subr.mxu0 0.0
    %2512 = vmatpush1.xpose.msra.mxu0 0.0
    %2513 = vmatprep.subr.mxu0 0.0
    %2514 = vmatpush1.xpose.msra.mxu0 0.0
    %2515 = vmatprep.subr.mxu0 0.0
    %2516 = vmatpush1.xpose.msra.mxu0 0.0
    %2517 = vmatprep.subr.mxu0 0.0
    %2518 = vmatpush1.xpose.msra.mxu0 0.0
    %2519 = vmatprep.subr.mxu0 0.0
    %2520 = vmatpush1.xpose.msra.mxu0 0.0
    %2521 = vmatprep.subr.mxu0 0.0
    %2522 = vmatpush1.xpose.msra.mxu0 0.0
    %2523 = vmatprep.subr.mxu0 0.0
    %2524 = vmatpush1.xpose.msra.mxu0 0.0
    %2525 = vmatprep.subr.mxu0 0.0
    %2526 = vmatpush1.xpose.msra.mxu0 0.0
    %2527 = vmatprep.subr.mxu0 0.0
    %2528 = vmatpush1.xpose.msra.mxu0 0.0
    %2529 = vmatprep.subr.mxu0 0.0
    %2530 = vmatpush1.xpose.msra.mxu0 0.0
    %2531 = vmatprep.subr.mxu0 0.0
    %2532 = vmatpush1.xpose.msra.mxu0 0.0
    %2533 = vmatprep.subr.mxu0 0.0
    %2534 = vmatpush1.xpose.msra.mxu0 0.0
    %2535 = vmatprep.subr.mxu0 0.0
    %2536 = vmatpush1.xpose.msra.mxu0 0.0
    %2537 = vmatprep.subr.mxu0 0.0
    %2538 = vmatpush1.xpose.msra.mxu0 0.0
    %2539 = vmatprep.subr.mxu0 0.0
    %2540 = vmatpush1.xpose.msra.mxu0 0.0
    %2541 = vmatprep.subr.mxu0 0.0
    %2542 = vmatpush1.xpose.msra.mxu0 0.0
    %2543 = vmatprep.subr.mxu0 0.0
    %2544 = vmatpush1.xpose.msra.mxu0 0.0
    %2545 = vmatprep.mubr.f32.mxu0 0.0
    %2546 = vmatmul.mubr.f32.gmra.mrb[0].mxu0 %v2477
    %v2547 = vpop.f32.mrb[0].mxu0
    %v2548 = vadd.f32 0.0, %v2547
    %v2549 = vpop.f32.mrb[0].mxu0
    %2550 = vdwg.mxu0
    %2551 = vrot.lane.b32.xlu0 %v2458, 96
    %v2552 = vpop.permute.xlu0 %2551
    %v2553 = vsel %vm388, %v2552, 0
    %v2555 = vsel %vm388, %v2458, 0
    %2557 = vmatprep.subr.mxu0 0.0
    %2558 = vmatpush1.xpose.msra.mxu0 %v2555
    %2559 = vmatprep.subr.mxu0 0.0
    %2560 = vmatpush1.xpose.msra.mxu0 0.0
    %2561 = vmatprep.subr.mxu0 0.0
    %2562 = vmatpush1.xpose.msra.mxu0 0.0
    %2563 = vmatprep.subr.mxu0 0.0
    %2564 = vmatpush1.xpose.msra.mxu0 0.0
    %2565 = vmatprep.subr.mxu0 0.0
    %2566 = vmatpush1.xpose.msra.mxu0 0.0
    %2567 = vmatprep.subr.mxu0 0.0
    %2568 = vmatpush1.xpose.msra.mxu0 0.0
    %2569 = vmatprep.subr.mxu0 0.0
    %2570 = vmatpush1.xpose.msra.mxu0 0.0
    %2571 = vmatprep.subr.mxu0 0.0
    %2572 = vmatpush1.xpose.msra.mxu0 0.0
    %2573 = vmatprep.subr.mxu0 0.0
    %2574 = vmatpush1.xpose.msra.mxu0 0.0
    %2575 = vmatprep.subr.mxu0 0.0
    %2576 = vmatpush1.xpose.msra.mxu0 0.0
    %2577 = vmatprep.subr.mxu0 0.0
    %2578 = vmatpush1.xpose.msra.mxu0 0.0
    %2579 = vmatprep.subr.mxu0 0.0
    %2580 = vmatpush1.xpose.msra.mxu0 0.0
    %2581 = vmatprep.subr.mxu0 0.0
    %2582 = vmatpush1.xpose.msra.mxu0 0.0
    %2583 = vmatprep.subr.mxu0 0.0
    %2584 = vmatpush1.xpose.msra.mxu0 0.0
    %2585 = vmatprep.subr.mxu0 0.0
    %2586 = vmatpush1.xpose.msra.mxu0 0.0
    %2587 = vmatprep.subr.mxu0 0.0
    %2588 = vmatpush1.xpose.msra.mxu0 0.0
    %2589 = vmatprep.subr.mxu0 0.0
    %2590 = vmatpush1.xpose.msra.mxu0 0.0
    %2591 = vmatprep.subr.mxu0 0.0
    %2592 = vmatpush1.xpose.msra.mxu0 0.0
    %2593 = vmatprep.subr.mxu0 0.0
    %2594 = vmatpush1.xpose.msra.mxu0 0.0
    %2595 = vmatprep.subr.mxu0 0.0
    %2596 = vmatpush1.xpose.msra.mxu0 0.0
    %2597 = vmatprep.subr.mxu0 0.0
    %2598 = vmatpush1.xpose.msra.mxu0 0.0
    %2599 = vmatprep.subr.mxu0 0.0
    %2600 = vmatpush1.xpose.msra.mxu0 0.0
    %2601 = vmatprep.subr.mxu0 0.0
    %2602 = vmatpush1.xpose.msra.mxu0 0.0
    %2603 = vmatprep.subr.mxu0 0.0
    %2604 = vmatpush1.xpose.msra.mxu0 0.0
    %2605 = vmatprep.subr.mxu0 0.0
    %2606 = vmatpush1.xpose.msra.mxu0 0.0
    %2607 = vmatprep.subr.mxu0 0.0
    %2608 = vmatpush1.xpose.msra.mxu0 0.0
    %2609 = vmatprep.subr.mxu0 0.0
    %2610 = vmatpush1.xpose.msra.mxu0 0.0
    %2611 = vmatprep.subr.mxu0 0.0
    %2612 = vmatpush1.xpose.msra.mxu0 0.0
    %2613 = vmatprep.subr.mxu0 0.0
    %2614 = vmatpush1.xpose.msra.mxu0 0.0
    %2615 = vmatprep.subr.mxu0 0.0
    %2616 = vmatpush1.xpose.msra.mxu0 0.0
    %2617 = vmatprep.subr.mxu0 0.0
    %2618 = vmatpush1.xpose.msra.mxu0 0.0
    %2619 = vmatprep.subr.mxu0 0.0
    %2620 = vmatpush1.xpose.msra.mxu0 0.0
    %2621 = vmatprep.mubr.f32.mxu0 0.0
    %2622 = vmatmul.mubr.f32.gmra.mrb[0].mxu0 %v2553
    %v2623 = vpop.f32.mrb[0].mxu0
    %v2624 = vadd.f32 0.0, %v2623
    %v2625 = vpop.f32.mrb[0].mxu0
    %2626 = vdwg.mxu0
    %2627 = vrot.lane.b32.xlu0 %v2464, 96
    %v2628 = vpop.permute.xlu0 %2627
    %v2629 = vsel %vm388, %v2628, 0
    %v2631 = vsel %vm388, %v2464, 0
    %2633 = vmatprep.subr.mxu0 0.0
    %2634 = vmatpush1.xpose.msra.mxu0 %v2631
    %2635 = vmatprep.subr.mxu0 0.0
    %2636 = vmatpush1.xpose.msra.mxu0 0.0
    %2637 = vmatprep.subr.mxu0 0.0
    %2638 = vmatpush1.xpose.msra.mxu0 0.0
    %2639 = vmatprep.subr.mxu0 0.0
    %2640 = vmatpush1.xpose.msra.mxu0 0.0
    %2641 = vmatprep.subr.mxu0 0.0
    %2642 = vmatpush1.xpose.msra.mxu0 0.0
    %2643 = vmatprep.subr.mxu0 0.0
    %2644 = vmatpush1.xpose.msra.mxu0 0.0
    %2645 = vmatprep.subr.mxu0 0.0
    %2646 = vmatpush1.xpose.msra.mxu0 0.0
    %2647 = vmatprep.subr.mxu0 0.0
    %2648 = vmatpush1.xpose.msra.mxu0 0.0
    %2649 = vmatprep.subr.mxu0 0.0
    %2650 = vmatpush1.xpose.msra.mxu0 0.0
    %2651 = vmatprep.subr.mxu0 0.0
    %2652 = vmatpush1.xpose.msra.mxu0 0.0
    %2653 = vmatprep.subr.mxu0 0.0
    %2654 = vmatpush1.xpose.msra.mxu0 0.0
    %2655 = vmatprep.subr.mxu0 0.0
    %2656 = vmatpush1.xpose.msra.mxu0 0.0
    %2657 = vmatprep.subr.mxu0 0.0
    %2658 = vmatpush1.xpose.msra.mxu0 0.0
    %2659 = vmatprep.subr.mxu0 0.0
    %2660 = vmatpush1.xpose.msra.mxu0 0.0
    %2661 = vmatprep.subr.mxu0 0.0
    %2662 = vmatpush1.xpose.msra.mxu0 0.0
    %2663 = vmatprep.subr.mxu0 0.0
    %2664 = vmatpush1.xpose.msra.mxu0 0.0
    %2665 = vmatprep.subr.mxu0 0.0
    %2666 = vmatpush1.xpose.msra.mxu0 0.0
    %2667 = vmatprep.subr.mxu0 0.0
    %2668 = vmatpush1.xpose.msra.mxu0 0.0
    %2669 = vmatprep.subr.mxu0 0.0
    %2670 = vmatpush1.xpose.msra.mxu0 0.0
    %2671 = vmatprep.subr.mxu0 0.0
    %2672 = vmatpush1.xpose.msra.mxu0 0.0
    %2673 = vmatprep.subr.mxu0 0.0
    %2674 = vmatpush1.xpose.msra.mxu0 0.0
    %2675 = vmatprep.subr.mxu0 0.0
    %2676 = vmatpush1.xpose.msra.mxu0 0.0
    %2677 = vmatprep.subr.mxu0 0.0
    %2678 = vmatpush1.xpose.msra.mxu0 0.0
    %2679 = vmatprep.subr.mxu0 0.0
    %2680 = vmatpush1.xpose.msra.mxu0 0.0
    %2681 = vmatprep.subr.mxu0 0.0
    %2682 = vmatpush1.xpose.msra.mxu0 0.0
    %2683 = vmatprep.subr.mxu0 0.0
    %2684 = vmatpush1.xpose.msra.mxu0 0.0
    %2685 = vmatprep.subr.mxu0 0.0
    %2686 = vmatpush1.xpose.msra.mxu0 0.0
    %2687 = vmatprep.subr.mxu0 0.0
    %2688 = vmatpush1.xpose.msra.mxu0 0.0
    %2689 = vmatprep.subr.mxu0 0.0
    %2690 = vmatpush1.xpose.msra.mxu0 0.0
    %2691 = vmatprep.subr.mxu0 0.0
    %2692 = vmatpush1.xpose.msra.mxu0 0.0
    %2693 = vmatprep.subr.mxu0 0.0
    %2694 = vmatpush1.xpose.msra.mxu0 0.0
    %2695 = vmatprep.subr.mxu0 0.0
    %2696 = vmatpush1.xpose.msra.mxu0 0.0
    %2697 = vmatprep.mubr.f32.mxu0 0.0
    %2698 = vmatmul.mubr.f32.gmra.mrb[0].mxu0 %v2629
    %v2699 = vpop.f32.mrb[0].mxu0
    %v2700 = vadd.f32 0.0, %v2699
    %v2701 = vpop.f32.mrb[0].mxu0
    %2702 = vdwg.mxu0
    %2703 = vrot.lane.b32.xlu0 %v2466, 96
    %v2704 = vpop.permute.xlu0 %2703
    %v2705 = vsel %vm388, %v2704, 0
    %v2707 = vsel %vm388, %v2466, 0
    %2709 = vmatprep.subr.mxu0 0.0
    %2710 = vmatpush1.xpose.msra.mxu0 %v2707
    %2711 = vmatprep.subr.mxu0 0.0
    %2712 = vmatpush1.xpose.msra.mxu0 0.0
    %2713 = vmatprep.subr.mxu0 0.0
    %2714 = vmatpush1.xpose.msra.mxu0 0.0
    %2715 = vmatprep.subr.mxu0 0.0
    %2716 = vmatpush1.xpose.msra.mxu0 0.0
    %2717 = vmatprep.subr.mxu0 0.0
    %2718 = vmatpush1.xpose.msra.mxu0 0.0
    %2719 = vmatprep.subr.mxu0 0.0
    %2720 = vmatpush1.xpose.msra.mxu0 0.0
    %2721 = vmatprep.subr.mxu0 0.0
    %2722 = vmatpush1.xpose.msra.mxu0 0.0
    %2723 = vmatprep.subr.mxu0 0.0
    %2724 = vmatpush1.xpose.msra.mxu0 0.0
    %2725 = vmatprep.subr.mxu0 0.0
    %2726 = vmatpush1.xpose.msra.mxu0 0.0
    %2727 = vmatprep.subr.mxu0 0.0
    %2728 = vmatpush1.xpose.msra.mxu0 0.0
    %2729 = vmatprep.subr.mxu0 0.0
    %2730 = vmatpush1.xpose.msra.mxu0 0.0
    %2731 = vmatprep.subr.mxu0 0.0
    %2732 = vmatpush1.xpose.msra.mxu0 0.0
    %2733 = vmatprep.subr.mxu0 0.0
    %2734 = vmatpush1.xpose.msra.mxu0 0.0
    %2735 = vmatprep.subr.mxu0 0.0
    %2736 = vmatpush1.xpose.msra.mxu0 0.0
    %2737 = vmatprep.subr.mxu0 0.0
    %2738 = vmatpush1.xpose.msra.mxu0 0.0
    %2739 = vmatprep.subr.mxu0 0.0
    %2740 = vmatpush1.xpose.msra.mxu0 0.0
    %2741 = vmatprep.subr.mxu0 0.0
    %2742 = vmatpush1.xpose.msra.mxu0 0.0
    %2743 = vmatprep.subr.mxu0 0.0
    %2744 = vmatpush1.xpose.msra.mxu0 0.0
    %2745 = vmatprep.subr.mxu0 0.0
    %2746 = vmatpush1.xpose.msra.mxu0 0.0
    %2747 = vmatprep.subr.mxu0 0.0
    %2748 = vmatpush1.xpose.msra.mxu0 0.0
    %2749 = vmatprep.subr.mxu0 0.0
    %2750 = vmatpush1.xpose.msra.mxu0 0.0
    %2751 = vmatprep.subr.mxu0 0.0
    %2752 = vmatpush1.xpose.msra.mxu0 0.0
    %2753 = vmatprep.subr.mxu0 0.0
    %2754 = vmatpush1.xpose.msra.mxu0 0.0
    %2755 = vmatprep.subr.mxu0 0.0
    %2756 = vmatpush1.xpose.msra.mxu0 0.0
    %2757 = vmatprep.subr.mxu0 0.0
    %2758 = vmatpush1.xpose.msra.mxu0 0.0
    %2759 = vmatprep.subr.mxu0 0.0
    %2760 = vmatpush1.xpose.msra.mxu0 0.0
    %2761 = vmatprep.subr.mxu0 0.0
    %2762 = vmatpush1.xpose.msra.mxu0 0.0
    %2763 = vmatprep.subr.mxu0 0.0
    %2764 = vmatpush1.xpose.msra.mxu0 0.0
    %2765 = vmatprep.subr.mxu0 0.0
    %2766 = vmatpush1.xpose.msra.mxu0 0.0
    %2767 = vmatprep.subr.mxu0 0.0
    %2768 = vmatpush1.xpose.msra.mxu0 0.0
    %2769 = vmatprep.subr.mxu0 0.0
    %2770 = vmatpush1.xpose.msra.mxu0 0.0
    %2771 = vmatprep.subr.mxu0 0.0
    %2772 = vmatpush1.xpose.msra.mxu0 0.0
    %2773 = vmatprep.mubr.f32.mxu0 0.0
    %2774 = vmatmul.mubr.f32.gmra.mrb[0].mxu0 %v2705
    %v2775 = vpop.f32.mrb[0].mxu0
    %v2776 = vadd.f32 0.0, %v2775
    %v2777 = vpop.f32.mrb[0].mxu0
    %2778 = vdwg.mxu0
    %2779 = vrot.lane.b32.xlu0 %v2468, 96
    %v2780 = vpop.permute.xlu0 %2779
    %v2781 = vsel %vm388, %v2780, 0
    %v2783 = vsel %vm388, %v2468, 0
    %2785 = vmatprep.subr.mxu0 0.0
    %2786 = vmatpush1.xpose.msra.mxu0 %v2783
    %2787 = vmatprep.subr.mxu0 0.0
    %2788 = vmatpush1.xpose.msra.mxu0 0.0
    %2789 = vmatprep.subr.mxu0 0.0
    %2790 = vmatpush1.xpose.msra.mxu0 0.0
    %2791 = vmatprep.subr.mxu0 0.0
    %2792 = vmatpush1.xpose.msra.mxu0 0.0
    %2793 = vmatprep.subr.mxu0 0.0
    %2794 = vmatpush1.xpose.msra.mxu0 0.0
    %2795 = vmatprep.subr.mxu0 0.0
    %2796 = vmatpush1.xpose.msra.mxu0 0.0
    %2797 = vmatprep.subr.mxu0 0.0
    %2798 = vmatpush1.xpose.msra.mxu0 0.0
    %2799 = vmatprep.subr.mxu0 0.0
    %2800 = vmatpush1.xpose.msra.mxu0 0.0
    %2801 = vmatprep.subr.mxu0 0.0
    %2802 = vmatpush1.xpose.msra.mxu0 0.0
    %2803 = vmatprep.subr.mxu0 0.0
    %2804 = vmatpush1.xpose.msra.mxu0 0.0
    %2805 = vmatprep.subr.mxu0 0.0
    %2806 = vmatpush1.xpose.msra.mxu0 0.0
    %2807 = vmatprep.subr.mxu0 0.0
    %2808 = vmatpush1.xpose.msra.mxu0 0.0
    %2809 = vmatprep.subr.mxu0 0.0
    %2810 = vmatpush1.xpose.msra.mxu0 0.0
    %2811 = vmatprep.subr.mxu0 0.0
    %2812 = vmatpush1.xpose.msra.mxu0 0.0
    %2813 = vmatprep.subr.mxu0 0.0
    %2814 = vmatpush1.xpose.msra.mxu0 0.0
    %2815 = vmatprep.subr.mxu0 0.0
    %2816 = vmatpush1.xpose.msra.mxu0 0.0
    %2817 = vmatprep.subr.mxu0 0.0
    %2818 = vmatpush1.xpose.msra.mxu0 0.0
    %2819 = vmatprep.subr.mxu0 0.0
    %2820 = vmatpush1.xpose.msra.mxu0 0.0
    %2821 = vmatprep.subr.mxu0 0.0
    %2822 = vmatpush1.xpose.msra.mxu0 0.0
    %2823 = vmatprep.subr.mxu0 0.0
    %2824 = vmatpush1.xpose.msra.mxu0 0.0
    %2825 = vmatprep.subr.mxu0 0.0
    %2826 = vmatpush1.xpose.msra.mxu0 0.0
    %2827 = vmatprep.subr.mxu0 0.0
    %2828 = vmatpush1.xpose.msra.mxu0 0.0
    %2829 = vmatprep.subr.mxu0 0.0
    %2830 = vmatpush1.xpose.msra.mxu0 0.0
    %2831 = vmatprep.subr.mxu0 0.0
    %2832 = vmatpush1.xpose.msra.mxu0 0.0
    %2833 = vmatprep.subr.mxu0 0.0
    %2834 = vmatpush1.xpose.msra.mxu0 0.0
    %2835 = vmatprep.subr.mxu0 0.0
    %2836 = vmatpush1.xpose.msra.mxu0 0.0
    %2837 = vmatprep.subr.mxu0 0.0
    %2838 = vmatpush1.xpose.msra.mxu0 0.0
    %2839 = vmatprep.subr.mxu0 0.0
    %2840 = vmatpush1.xpose.msra.mxu0 0.0
    %2841 = vmatprep.subr.mxu0 0.0
    %2842 = vmatpush1.xpose.msra.mxu0 0.0
    %2843 = vmatprep.subr.mxu0 0.0
    %2844 = vmatpush1.xpose.msra.mxu0 0.0
    %2845 = vmatprep.subr.mxu0 0.0
    %2846 = vmatpush1.xpose.msra.mxu0 0.0
    %2847 = vmatprep.subr.mxu0 0.0
    %2848 = vmatpush1.xpose.msra.mxu0 0.0
    %2849 = vmatprep.mubr.f32.mxu0 0.0
    %2850 = vmatmul.mubr.f32.gmra.mrb[0].mxu0 %v2781
    %v2851 = vpop.f32.mrb[0].mxu0
    %v2852 = vadd.f32 0.0, %v2851
    %v2853 = vpop.f32.mrb[0].mxu0
    %2854 = vdwg.mxu0
    %2855 = vrot.lane.b32.xlu0 %v2470, 96
    %v2856 = vpop.permute.xlu0 %2855
    %v2857 = vsel %vm388, %v2856, 0
    %v2859 = vsel %vm388, %v2470, 0
    %2861 = vmatprep.subr.mxu0 0.0
    %2862 = vmatpush1.xpose.msra.mxu0 %v2859
    %2863 = vmatprep.subr.mxu0 0.0
    %2864 = vmatpush1.xpose.msra.mxu0 0.0
    %2865 = vmatprep.subr.mxu0 0.0
    %2866 = vmatpush1.xpose.msra.mxu0 0.0
    %2867 = vmatprep.subr.mxu0 0.0
    %2868 = vmatpush1.xpose.msra.mxu0 0.0
    %2869 = vmatprep.subr.mxu0 0.0
    %2870 = vmatpush1.xpose.msra.mxu0 0.0
    %2871 = vmatprep.subr.mxu0 0.0
    %2872 = vmatpush1.xpose.msra.mxu0 0.0
    %2873 = vmatprep.subr.mxu0 0.0
    %2874 = vmatpush1.xpose.msra.mxu0 0.0
    %2875 = vmatprep.subr.mxu0 0.0
    %2876 = vmatpush1.xpose.msra.mxu0 0.0
    %2877 = vmatprep.subr.mxu0 0.0
    %2878 = vmatpush1.xpose.msra.mxu0 0.0
    %2879 = vmatprep.subr.mxu0 0.0
    %2880 = vmatpush1.xpose.msra.mxu0 0.0
    %2881 = vmatprep.subr.mxu0 0.0
    %2882 = vmatpush1.xpose.msra.mxu0 0.0
    %2883 = vmatprep.subr.mxu0 0.0
    %2884 = vmatpush1.xpose.msra.mxu0 0.0
    %2885 = vmatprep.subr.mxu0 0.0
    %2886 = vmatpush1.xpose.msra.mxu0 0.0
    %2887 = vmatprep.subr.mxu0 0.0
    %2888 = vmatpush1.xpose.msra.mxu0 0.0
    %2889 = vmatprep.subr.mxu0 0.0
    %2890 = vmatpush1.xpose.msra.mxu0 0.0
    %2891 = vmatprep.subr.mxu0 0.0
    %2892 = vmatpush1.xpose.msra.mxu0 0.0
    %2893 = vmatprep.subr.mxu0 0.0
    %2894 = vmatpush1.xpose.msra.mxu0 0.0
    %2895 = vmatprep.subr.mxu0 0.0
    %2896 = vmatpush1.xpose.msra.mxu0 0.0
    %2897 = vmatprep.subr.mxu0 0.0
    %2898 = vmatpush1.xpose.msra.mxu0 0.0
    %2899 = vmatprep.subr.mxu0 0.0
    %2900 = vmatpush1.xpose.msra.mxu0 0.0
    %2901 = vmatprep.subr.mxu0 0.0
    %2902 = vmatpush1.xpose.msra.mxu0 0.0
    %2903 = vmatprep.subr.mxu0 0.0
    %2904 = vmatpush1.xpose.msra.mxu0 0.0
    %2905 = vmatprep.subr.mxu0 0.0
    %2906 = vmatpush1.xpose.msra.mxu0 0.0
    %2907 = vmatprep.subr.mxu0 0.0
    %2908 = vmatpush1.xpose.msra.mxu0 0.0
    %2909 = vmatprep.subr.mxu0 0.0
    %2910 = vmatpush1.xpose.msra.mxu0 0.0
    %2911 = vmatprep.subr.mxu0 0.0
    %2912 = vmatpush1.xpose.msra.mxu0 0.0
    %2913 = vmatprep.subr.mxu0 0.0
    %2914 = vmatpush1.xpose.msra.mxu0 0.0
    %2915 = vmatprep.subr.mxu0 0.0
    %2916 = vmatpush1.xpose.msra.mxu0 0.0
    %2917 = vmatprep.subr.mxu0 0.0
    %2918 = vmatpush1.xpose.msra.mxu0 0.0
    %2919 = vmatprep.subr.mxu0 0.0
    %2920 = vmatpush1.xpose.msra.mxu0 0.0
    %2921 = vmatprep.subr.mxu0 0.0
    %2922 = vmatpush1.xpose.msra.mxu0 0.0
    %2923 = vmatprep.subr.mxu0 0.0
    %2924 = vmatpush1.xpose.msra.mxu0 0.0
    %2925 = vmatprep.mubr.f32.mxu0 0.0
    %2926 = vmatmul.mubr.f32.gmra.mrb[0].mxu0 %v2857
    %v2927 = vpop.f32.mrb[0].mxu0
    %v2928 = vadd.f32 0.0, %v2927
    %v2929 = vpop.f32.mrb[0].mxu0
    %2930 = vdwg.mxu0
    %2931 = vrot.lane.b32.xlu0 %v2472, 96
    %v2932 = vpop.permute.xlu0 %2931
    %v2933 = vsel %vm388, %v2932, 0
    %v2935 = vsel %vm388, %v2472, 0
    %2937 = vmatprep.subr.mxu0 0.0
    %2938 = vmatpush1.xpose.msra.mxu0 %v2935
    %2939 = vmatprep.subr.mxu0 0.0
    %2940 = vmatpush1.xpose.msra.mxu0 0.0
    %2941 = vmatprep.subr.mxu0 0.0
    %2942 = vmatpush1.xpose.msra.mxu0 0.0
    %2943 = vmatprep.subr.mxu0 0.0
    %2944 = vmatpush1.xpose.msra.mxu0 0.0
    %2945 = vmatprep.subr.mxu0 0.0
    %2946 = vmatpush1.xpose.msra.mxu0 0.0
    %2947 = vmatprep.subr.mxu0 0.0
    %2948 = vmatpush1.xpose.msra.mxu0 0.0
    %2949 = vmatprep.subr.mxu0 0.0
    %2950 = vmatpush1.xpose.msra.mxu0 0.0
    %2951 = vmatprep.subr.mxu0 0.0
    %2952 = vmatpush1.xpose.msra.mxu0 0.0
    %2953 = vmatprep.subr.mxu0 0.0
    %2954 = vmatpush1.xpose.msra.mxu0 0.0
    %2955 = vmatprep.subr.mxu0 0.0
    %2956 = vmatpush1.xpose.msra.mxu0 0.0
    %2957 = vmatprep.subr.mxu0 0.0
    %2958 = vmatpush1.xpose.msra.mxu0 0.0
    %2959 = vmatprep.subr.mxu0 0.0
    %2960 = vmatpush1.xpose.msra.mxu0 0.0
    %2961 = vmatprep.subr.mxu0 0.0
    %2962 = vmatpush1.xpose.msra.mxu0 0.0
    %2963 = vmatprep.subr.mxu0 0.0
    %2964 = vmatpush1.xpose.msra.mxu0 0.0
    %2965 = vmatprep.subr.mxu0 0.0
    %2966 = vmatpush1.xpose.msra.mxu0 0.0
    %2967 = vmatprep.subr.mxu0 0.0
    %2968 = vmatpush1.xpose.msra.mxu0 0.0
    %2969 = vmatprep.subr.mxu0 0.0
    %2970 = vmatpush1.xpose.msra.mxu0 0.0
    %2971 = vmatprep.subr.mxu0 0.0
    %2972 = vmatpush1.xpose.msra.mxu0 0.0
    %2973 = vmatprep.subr.mxu0 0.0
    %2974 = vmatpush1.xpose.msra.mxu0 0.0
    %2975 = vmatprep.subr.mxu0 0.0
    %2976 = vmatpush1.xpose.msra.mxu0 0.0
    %2977 = vmatprep.subr.mxu0 0.0
    %2978 = vmatpush1.xpose.msra.mxu0 0.0
    %2979 = vmatprep.subr.mxu0 0.0
    %2980 = vmatpush1.xpose.msra.mxu0 0.0
    %2981 = vmatprep.subr.mxu0 0.0
    %2982 = vmatpush1.xpose.msra.mxu0 0.0
    %2983 = vmatprep.subr.mxu0 0.0
    %2984 = vmatpush1.xpose.msra.mxu0 0.0
    %2985 = vmatprep.subr.mxu0 0.0
    %2986 = vmatpush1.xpose.msra.mxu0 0.0
    %2987 = vmatprep.subr.mxu0 0.0
    %2988 = vmatpush1.xpose.msra.mxu0 0.0
    %2989 = vmatprep.subr.mxu0 0.0
    %2990 = vmatpush1.xpose.msra.mxu0 0.0
    %2991 = vmatprep.subr.mxu0 0.0
    %2992 = vmatpush1.xpose.msra.mxu0 0.0
    %2993 = vmatprep.subr.mxu0 0.0
    %2994 = vmatpush1.xpose.msra.mxu0 0.0
    %2995 = vmatprep.subr.mxu0 0.0
    %2996 = vmatpush1.xpose.msra.mxu0 0.0
    %2997 = vmatprep.subr.mxu0 0.0
    %2998 = vmatpush1.xpose.msra.mxu0 0.0
    %2999 = vmatprep.subr.mxu0 0.0
    %3000 = vmatpush1.xpose.msra.mxu0 0.0
    %3001 = vmatprep.mubr.f32.mxu0 0.0
    %3002 = vmatmul.mubr.f32.gmra.mrb[0].mxu0 %v2933
    %v3003 = vpop.f32.mrb[0].mxu0
    %v3004 = vadd.f32 0.0, %v3003
    %v3005 = vpop.f32.mrb[0].mxu0
    %3006 = vdwg.mxu0
    %3007 = vrot.lane.b32.xlu0 %v2474, 96
    %v3008 = vpop.permute.xlu0 %3007
    %v3009 = vsel %vm388, %v3008, 0
    %v3011 = vsel %vm388, %v2474, 0
    %3013 = vmatprep.subr.mxu0 0.0
    %3014 = vmatpush1.xpose.msra.mxu0 %v3011
    %3015 = vmatprep.subr.mxu0 0.0
    %3016 = vmatpush1.xpose.msra.mxu0 0.0
    %3017 = vmatprep.subr.mxu0 0.0
    %3018 = vmatpush1.xpose.msra.mxu0 0.0
    %3019 = vmatprep.subr.mxu0 0.0
    %3020 = vmatpush1.xpose.msra.mxu0 0.0
    %3021 = vmatprep.subr.mxu0 0.0
    %3022 = vmatpush1.xpose.msra.mxu0 0.0
    %3023 = vmatprep.subr.mxu0 0.0
    %3024 = vmatpush1.xpose.msra.mxu0 0.0
    %3025 = vmatprep.subr.mxu0 0.0
    %3026 = vmatpush1.xpose.msra.mxu0 0.0
    %3027 = vmatprep.subr.mxu0 0.0
    %3028 = vmatpush1.xpose.msra.mxu0 0.0
    %3029 = vmatprep.subr.mxu0 0.0
    %3030 = vmatpush1.xpose.msra.mxu0 0.0
    %3031 = vmatprep.subr.mxu0 0.0
    %3032 = vmatpush1.xpose.msra.mxu0 0.0
    %3033 = vmatprep.subr.mxu0 0.0
    %3034 = vmatpush1.xpose.msra.mxu0 0.0
    %3035 = vmatprep.subr.mxu0 0.0
    %3036 = vmatpush1.xpose.msra.mxu0 0.0
    %3037 = vmatprep.subr.mxu0 0.0
    %3038 = vmatpush1.xpose.msra.mxu0 0.0
    %3039 = vmatprep.subr.mxu0 0.0
    %3040 = vmatpush1.xpose.msra.mxu0 0.0
    %3041 = vmatprep.subr.mxu0 0.0
    %3042 = vmatpush1.xpose.msra.mxu0 0.0
    %3043 = vmatprep.subr.mxu0 0.0
    %3044 = vmatpush1.xpose.msra.mxu0 0.0
    %3045 = vmatprep.subr.mxu0 0.0
    %3046 = vmatpush1.xpose.msra.mxu0 0.0
    %3047 = vmatprep.subr.mxu0 0.0
    %3048 = vmatpush1.xpose.msra.mxu0 0.0
    %3049 = vmatprep.subr.mxu0 0.0
    %3050 = vmatpush1.xpose.msra.mxu0 0.0
    %3051 = vmatprep.subr.mxu0 0.0
    %3052 = vmatpush1.xpose.msra.mxu0 0.0
    %3053 = vmatprep.subr.mxu0 0.0
    %3054 = vmatpush1.xpose.msra.mxu0 0.0
    %3055 = vmatprep.subr.mxu0 0.0
    %3056 = vmatpush1.xpose.msra.mxu0 0.0
    %3057 = vmatprep.subr.mxu0 0.0
    %3058 = vmatpush1.xpose.msra.mxu0 0.0
    %3059 = vmatprep.subr.mxu0 0.0
    %3060 = vmatpush1.xpose.msra.mxu0 0.0
    %3061 = vmatprep.subr.mxu0 0.0
    %3062 = vmatpush1.xpose.msra.mxu0 0.0
    %3063 = vmatprep.subr.mxu0 0.0
    %3064 = vmatpush1.xpose.msra.mxu0 0.0
    %3065 = vmatprep.subr.mxu0 0.0
    %3066 = vmatpush1.xpose.msra.mxu0 0.0
    %3067 = vmatprep.subr.mxu0 0.0
    %3068 = vmatpush1.xpose.msra.mxu0 0.0
    %3069 = vmatprep.subr.mxu0 0.0
    %3070 = vmatpush1.xpose.msra.mxu0 0.0
    %3071 = vmatprep.subr.mxu0 0.0
    %3072 = vmatpush1.xpose.msra.mxu0 0.0
    %3073 = vmatprep.subr.mxu0 0.0
    %3074 = vmatpush1.xpose.msra.mxu0 0.0
    %3075 = vmatprep.subr.mxu0 0.0
    %3076 = vmatpush1.xpose.msra.mxu0 0.0
    %3077 = vmatprep.mubr.f32.mxu0 0.0
    %3078 = vmatmul.mubr.f32.gmra.mrb[0].mxu0 %v3009
    %v3079 = vpop.f32.mrb[0].mxu0
    %v3080 = vadd.f32 0.0, %v3079
    %v3081 = vpop.f32.mrb[0].mxu0
    %3082 = vdwg.mxu0
    %v3083 = vsel %vm388, %v2548, -inf
    %v3084 = vrot.slane %v3083, 4
    %v3085 = vmax.f32 %v3083, %v3084
    %v3086 = vrot.slane %v3085, 2
    %v3087 = vmax.f32 %v3085, %v3086
    %v3088 = vrot.slane %v3087, 1
    %v3089 = vmax.f32 %v3087, %v3088
    %v3090 = vsel %vm388, %v2624, -inf
    %v3091 = vrot.slane %v3090, 4
    %v3092 = vmax.f32 %v3090, %v3091
    %v3093 = vrot.slane %v3092, 2
    %v3094 = vmax.f32 %v3092, %v3093
    %v3095 = vrot.slane %v3094, 1
    %v3096 = vmax.f32 %v3094, %v3095
    %v3097 = vsel %vm388, %v2700, -inf
    %v3098 = vrot.slane %v3097, 4
    %v3099 = vmax.f32 %v3097, %v3098
    %v3100 = vrot.slane %v3099, 2
    %v3101 = vmax.f32 %v3099, %v3100
    %v3102 = vrot.slane %v3101, 1
    %v3103 = vmax.f32 %v3101, %v3102
    %v3104 = vsel %vm388, %v2776, -inf
    %v3105 = vrot.slane %v3104, 4
    %v3106 = vmax.f32 %v3104, %v3105
    %v3107 = vrot.slane %v3106, 2
    %v3108 = vmax.f32 %v3106, %v3107
    %v3109 = vrot.slane %v3108, 1
    %v3110 = vmax.f32 %v3108, %v3109
    %v3111 = vsel %vm388, %v2852, -inf
    %v3112 = vrot.slane %v3111, 4
    %v3113 = vmax.f32 %v3111, %v3112
    %v3114 = vrot.slane %v3113, 2
    %v3115 = vmax.f32 %v3113, %v3114
    %v3116 = vrot.slane %v3115, 1
    %v3117 = vmax.f32 %v3115, %v3116
    %v3118 = vsel %vm388, %v2928, -inf
    %v3119 = vrot.slane %v3118, 4
    %v3120 = vmax.f32 %v3118, %v3119
    %v3121 = vrot.slane %v3120, 2
    %v3122 = vmax.f32 %v3120, %v3121
    %v3123 = vrot.slane %v3122, 1
    %v3124 = vmax.f32 %v3122, %v3123
    %v3125 = vsel %vm388, %v3004, -inf
    %v3126 = vrot.slane %v3125, 4
    %v3127 = vmax.f32 %v3125, %v3126
    %v3128 = vrot.slane %v3127, 2
    %v3129 = vmax.f32 %v3127, %v3128
    %v3130 = vrot.slane %v3129, 1
    %v3131 = vmax.f32 %v3129, %v3130
    %v3132 = vsel %vm388, %v3080, -inf
    %v3133 = vrot.slane %v3132, 4
    %v3134 = vmax.f32 %v3132, %v3133
    %v3135 = vrot.slane %v3134, 2
    %v3136 = vmax.f32 %v3134, %v3135
    %v3137 = vrot.slane %v3136, 1
    %v3138 = vmax.f32 %v3136, %v3137
    %v3139 = vsub.f32 %v2548, %v3089
    %v3140 = vsub.f32 %v2624, %v3096
    %v3141 = vsub.f32 %v2700, %v3103
    %v3142 = vsub.f32 %v2776, %v3110
    %v3143 = vsub.f32 %v2852, %v3117
    %v3144 = vsub.f32 %v2928, %v3124
    %v3145 = vsub.f32 %v3004, %v3131
    %v3146 = vsub.f32 %v3080, %v3138
    %v3147 = vmul.f32 %v3139, 1.442695
    %v3148 = vpow.pop %v3147
    %v3149 = vmul.f32 %v3140, 1.442695
    %v3150 = vpow.pop %v3149
    %v3151 = vmul.f32 %v3141, 1.442695
    %v3152 = vpow.pop %v3151
    %v3153 = vmul.f32 %v3142, 1.442695
    %v3154 = vpow.pop %v3153
    %v3155 = vmul.f32 %v3143, 1.442695
    %v3156 = vpow.pop %v3155
    %v3157 = vmul.f32 %v3144, 1.442695
    %v3158 = vpow.pop %v3157
    %v3159 = vmul.f32 %v3145, 1.442695
    %v3160 = vpow.pop %v3159
    %v3161 = vmul.f32 %v3146, 1.442695
    %v3162 = vpow.pop %v3161
    %v3163 = vsel %vm388, %v3148, 0.0
    %v3164 = vrot.slane %v3163, 4
    %v3165 = vadd.f32 %v3163, %v3164
    %v3166 = vrot.slane %v3165, 2
    %v3167 = vadd.f32 %v3165, %v3166
    %v3168 = vrot.slane %v3167, 1
    %v3169 = vadd.f32 %v3167, %v3168
    %v3170 = vsel %vm388, %v3150, 0.0
    %v3171 = vrot.slane %v3170, 4
    %v3172 = vadd.f32 %v3170, %v3171
    %v3173 = vrot.slane %v3172, 2
    %v3174 = vadd.f32 %v3172, %v3173
    %v3175 = vrot.slane %v3174, 1
    %v3176 = vadd.f32 %v3174, %v3175
    %v3177 = vsel %vm388, %v3152, 0.0
    %v3178 = vrot.slane %v3177, 4
    %v3179 = vadd.f32 %v3177, %v3178
    %v3180 = vrot.slane %v3179, 2
    %v3181 = vadd.f32 %v3179, %v3180
    %v3182 = vrot.slane %v3181, 1
    %v3183 = vadd.f32 %v3181, %v3182
    %v3184 = vsel %vm388, %v3154, 0.0
    %v3185 = vrot.slane %v3184, 4
    %v3186 = vadd.f32 %v3184, %v3185
    %v3187 = vrot.slane %v3186, 2
    %v3188 = vadd.f32 %v3186, %v3187
    %v3189 = vrot.slane %v3188, 1
    %v3190 = vadd.f32 %v3188, %v3189
    %v3191 = vsel %vm388, %v3156, 0.0
    %v3192 = vrot.slane %v3191, 4
    %v3193 = vadd.f32 %v3191, %v3192
    %v3194 = vrot.slane %v3193, 2
    %v3195 = vadd.f32 %v3193, %v3194
    %v3196 = vrot.slane %v3195, 1
    %v3197 = vadd.f32 %v3195, %v3196
    %v3198 = vsel %vm388, %v3158, 0.0
    %v3199 = vrot.slane %v3198, 4
    %v3200 = vadd.f32 %v3198, %v3199
    %v3201 = vrot.slane %v3200, 2
    %v3202 = vadd.f32 %v3200, %v3201
    %v3203 = vrot.slane %v3202, 1
    %v3204 = vadd.f32 %v3202, %v3203
    %v3205 = vsel %vm388, %v3160, 0.0
    %v3206 = vrot.slane %v3205, 4
    %v3207 = vadd.f32 %v3205, %v3206
    %v3208 = vrot.slane %v3207, 2
    %v3209 = vadd.f32 %v3207, %v3208
    %v3210 = vrot.slane %v3209, 1
    %v3211 = vadd.f32 %v3209, %v3210
    %v3212 = vsel %vm388, %v3162, 0.0
    %v3213 = vrot.slane %v3212, 4
    %v3214 = vadd.f32 %v3212, %v3213
    %v3215 = vrot.slane %v3214, 2
    %v3216 = vadd.f32 %v3214, %v3215
    %v3217 = vrot.slane %v3216, 1
    %v3218 = vadd.f32 %v3216, %v3217
    %v3219 = vrcp.pop %v3169
    %v3220 = vrcp.pop %v3176
    %v3221 = vrcp.pop %v3183
    %v3222 = vrcp.pop %v3190
    %v3223 = vrcp.pop %v3197
    %v3224 = vrcp.pop %v3204
    %v3225 = vrcp.pop %v3211
    %v3226 = vrcp.pop %v3218
    %v3227 = vmul.f32 %v3148, %v3219
    %v3228 = vmul.f32 %v3150, %v3220
    %v3229 = vmul.f32 %v3152, %v3221
    %v3230 = vmul.f32 %v3154, %v3222
    %v3231 = vmul.f32 %v3156, %v3223
    %v3232 = vmul.f32 %v3158, %v3224
    %v3233 = vmul.f32 %v3160, %v3225
    %v3234 = vmul.f32 %v3162, %v3226
    %3235 = vrot.lane.b32.xlu0 %v2453, 64
    %v3236 = vpop.permute.xlu0 %3235
    %v3239 = vsel %vm388, %v3227, 0
    %3241 = vmatprep.subr.mxu0 0.0
    %3242 = vmatpush1.msra.mxu0 %v3236
    %3243 = vmatprep.subr.mxu0 0.0
    %3244 = vmatpush1.msra.mxu0 0.0
    %3245 = vmatprep.subr.mxu0 0.0
    %3246 = vmatpush1.msra.mxu0 0.0
    %3247 = vmatprep.subr.mxu0 0.0
    %3248 = vmatpush1.msra.mxu0 0.0
    %3249 = vmatprep.subr.mxu0 0.0
    %3250 = vmatpush1.msra.mxu0 0.0
    %3251 = vmatprep.subr.mxu0 0.0
    %3252 = vmatpush1.msra.mxu0 0.0
    %3253 = vmatprep.subr.mxu0 0.0
    %3254 = vmatpush1.msra.mxu0 0.0
    %3255 = vmatprep.subr.mxu0 0.0
    %3256 = vmatpush1.msra.mxu0 0.0
    %3257 = vmatprep.subr.mxu0 0.0
    %3258 = vmatpush1.msra.mxu0 0.0
    %3259 = vmatprep.subr.mxu0 0.0
    %3260 = vmatpush1.msra.mxu0 0.0
    %3261 = vmatprep.subr.mxu0 0.0
    %3262 = vmatpush1.msra.mxu0 0.0
    %3263 = vmatprep.subr.mxu0 0.0
    %3264 = vmatpush1.msra.mxu0 0.0
    %3265 = vmatprep.subr.mxu0 0.0
    %3266 = vmatpush1.msra.mxu0 0.0
    %3267 = vmatprep.subr.mxu0 0.0
    %3268 = vmatpush1.msra.mxu0 0.0
    %3269 = vmatprep.subr.mxu0 0.0
    %3270 = vmatpush1.msra.mxu0 0.0
    %3271 = vmatprep.subr.mxu0 0.0
    %3272 = vmatpush1.msra.mxu0 0.0
    %3273 = vmatprep.subr.mxu0 0.0
    %3274 = vmatpush1.msra.mxu0 0.0
    %3275 = vmatprep.subr.mxu0 0.0
    %3276 = vmatpush1.msra.mxu0 0.0
    %3277 = vmatprep.subr.mxu0 0.0
    %3278 = vmatpush1.msra.mxu0 0.0
    %3279 = vmatprep.subr.mxu0 0.0
    %3280 = vmatpush1.msra.mxu0 0.0
    %3281 = vmatprep.subr.mxu0 0.0
    %3282 = vmatpush1.msra.mxu0 0.0
    %3283 = vmatprep.subr.mxu0 0.0
    %3284 = vmatpush1.msra.mxu0 0.0
    %3285 = vmatprep.subr.mxu0 0.0
    %3286 = vmatpush1.msra.mxu0 0.0
    %3287 = vmatprep.subr.mxu0 0.0
    %3288 = vmatpush1.msra.mxu0 0.0
    %3289 = vmatprep.subr.mxu0 0.0
    %3290 = vmatpush1.msra.mxu0 0.0
    %3291 = vmatprep.subr.mxu0 0.0
    %3292 = vmatpush1.msra.mxu0 0.0
    %3293 = vmatprep.subr.mxu0 0.0
    %3294 = vmatpush1.msra.mxu0 0.0
    %3295 = vmatprep.subr.mxu0 0.0
    %3296 = vmatpush1.msra.mxu0 0.0
    %3297 = vmatprep.subr.mxu0 0.0
    %3298 = vmatpush1.msra.mxu0 0.0
    %3299 = vmatprep.subr.mxu0 0.0
    %3300 = vmatpush1.msra.mxu0 0.0
    %3301 = vmatprep.subr.mxu0 0.0
    %3302 = vmatpush1.msra.mxu0 0.0
    %3303 = vmatprep.subr.mxu0 0.0
    %3304 = vmatpush1.msra.mxu0 0.0
    %3305 = vmatprep.mubr.f32.mxu0 0.0
    %3306 = vmatmul.mubr.f32.gmra.mrb[0].mxu0 %v3239
    %v3307 = vpop.f32.mrb[0].mxu0
    %v3308 = vadd.f32 0.0, %v3307
    %v3309 = vpop.f32.mrb[0].mxu0
    %3310 = vdwg.mxu0
    %3311 = vrot.lane.b32.xlu0 %v2458, 64
    %v3312 = vpop.permute.xlu0 %3311
    %v3315 = vsel %vm388, %v3228, 0
    %3317 = vmatprep.subr.mxu0 0.0
    %3318 = vmatpush1.msra.mxu0 %v3312
    %3319 = vmatprep.subr.mxu0 0.0
    %3320 = vmatpush1.msra.mxu0 0.0
    %3321 = vmatprep.subr.mxu0 0.0
    %3322 = vmatpush1.msra.mxu0 0.0
    %3323 = vmatprep.subr.mxu0 0.0
    %3324 = vmatpush1.msra.mxu0 0.0
    %3325 = vmatprep.subr.mxu0 0.0
    %3326 = vmatpush1.msra.mxu0 0.0
    %3327 = vmatprep.subr.mxu0 0.0
    %3328 = vmatpush1.msra.mxu0 0.0
    %3329 = vmatprep.subr.mxu0 0.0
    %3330 = vmatpush1.msra.mxu0 0.0
    %3331 = vmatprep.subr.mxu0 0.0
    %3332 = vmatpush1.msra.mxu0 0.0
    %3333 = vmatprep.subr.mxu0 0.0
    %3334 = vmatpush1.msra.mxu0 0.0
    %3335 = vmatprep.subr.mxu0 0.0
    %3336 = vmatpush1.msra.mxu0 0.0
    %3337 = vmatprep.subr.mxu0 0.0
    %3338 = vmatpush1.msra.mxu0 0.0
    %3339 = vmatprep.subr.mxu0 0.0
    %3340 = vmatpush1.msra.mxu0 0.0
    %3341 = vmatprep.subr.mxu0 0.0
    %3342 = vmatpush1.msra.mxu0 0.0
    %3343 = vmatprep.subr.mxu0 0.0
    %3344 = vmatpush1.msra.mxu0 0.0
    %3345 = vmatprep.subr.mxu0 0.0
    %3346 = vmatpush1.msra.mxu0 0.0
    %3347 = vmatprep.subr.mxu0 0.0
    %3348 = vmatpush1.msra.mxu0 0.0
    %3349 = vmatprep.subr.mxu0 0.0
    %3350 = vmatpush1.msra.mxu0 0.0
    %3351 = vmatprep.subr.mxu0 0.0
    %3352 = vmatpush1.msra.mxu0 0.0
    %3353 = vmatprep.subr.mxu0 0.0
    %3354 = vmatpush1.msra.mxu0 0.0
    %3355 = vmatprep.subr.mxu0 0.0
    %3356 = vmatpush1.msra.mxu0 0.0
    %3357 = vmatprep.subr.mxu0 0.0
    %3358 = vmatpush1.msra.mxu0 0.0
    %3359 = vmatprep.subr.mxu0 0.0
    %3360 = vmatpush1.msra.mxu0 0.0
    %3361 = vmatprep.subr.mxu0 0.0
    %3362 = vmatpush1.msra.mxu0 0.0
    %3363 = vmatprep.subr.mxu0 0.0
    %3364 = vmatpush1.msra.mxu0 0.0
    %3365 = vmatprep.subr.mxu0 0.0
    %3366 = vmatpush1.msra.mxu0 0.0
    %3367 = vmatprep.subr.mxu0 0.0
    %3368 = vmatpush1.msra.mxu0 0.0
    %3369 = vmatprep.subr.mxu0 0.0
    %3370 = vmatpush1.msra.mxu0 0.0
    %3371 = vmatprep.subr.mxu0 0.0
    %3372 = vmatpush1.msra.mxu0 0.0
    %3373 = vmatprep.subr.mxu0 0.0
    %3374 = vmatpush1.msra.mxu0 0.0
    %3375 = vmatprep.subr.mxu0 0.0
    %3376 = vmatpush1.msra.mxu0 0.0
    %3377 = vmatprep.subr.mxu0 0.0
    %3378 = vmatpush1.msra.mxu0 0.0
    %3379 = vmatprep.subr.mxu0 0.0
    %3380 = vmatpush1.msra.mxu0 0.0
    %3381 = vmatprep.mubr.f32.mxu0 0.0
    %3382 = vmatmul.mubr.f32.gmra.mrb[0].mxu0 %v3315
    %v3383 = vpop.f32.mrb[0].mxu0
    %v3384 = vadd.f32 0.0, %v3383
    %v3385 = vpop.f32.mrb[0].mxu0
    %3386 = vdwg.mxu0
    %3387 = vrot.lane.b32.xlu0 %v2464, 64
    %v3388 = vpop.permute.xlu0 %3387
    %v3391 = vsel %vm388, %v3229, 0
    %3393 = vmatprep.subr.mxu0 0.0
    %3394 = vmatpush1.msra.mxu0 %v3388
    %3395 = vmatprep.subr.mxu0 0.0
    %3396 = vmatpush1.msra.mxu0 0.0
    %3397 = vmatprep.subr.mxu0 0.0
    %3398 = vmatpush1.msra.mxu0 0.0
    %3399 = vmatprep.subr.mxu0 0.0
    %3400 = vmatpush1.msra.mxu0 0.0
    %3401 = vmatprep.subr.mxu0 0.0
    %3402 = vmatpush1.msra.mxu0 0.0
    %3403 = vmatprep.subr.mxu0 0.0
    %3404 = vmatpush1.msra.mxu0 0.0
    %3405 = vmatprep.subr.mxu0 0.0
    %3406 = vmatpush1.msra.mxu0 0.0
    %3407 = vmatprep.subr.mxu0 0.0
    %3408 = vmatpush1.msra.mxu0 0.0
    %3409 = vmatprep.subr.mxu0 0.0
    %3410 = vmatpush1.msra.mxu0 0.0
    %3411 = vmatprep.subr.mxu0 0.0
    %3412 = vmatpush1.msra.mxu0 0.0
    %3413 = vmatprep.subr.mxu0 0.0
    %3414 = vmatpush1.msra.mxu0 0.0
    %3415 = vmatprep.subr.mxu0 0.0
    %3416 = vmatpush1.msra.mxu0 0.0
    %3417 = vmatprep.subr.mxu0 0.0
    %3418 = vmatpush1.msra.mxu0 0.0
    %3419 = vmatprep.subr.mxu0 0.0
    %3420 = vmatpush1.msra.mxu0 0.0
    %3421 = vmatprep.subr.mxu0 0.0
    %3422 = vmatpush1.msra.mxu0 0.0
    %3423 = vmatprep.subr.mxu0 0.0
    %3424 = vmatpush1.msra.mxu0 0.0
    %3425 = vmatprep.subr.mxu0 0.0
    %3426 = vmatpush1.msra.mxu0 0.0
    %3427 = vmatprep.subr.mxu0 0.0
    %3428 = vmatpush1.msra.mxu0 0.0
    %3429 = vmatprep.subr.mxu0 0.0
    %3430 = vmatpush1.msra.mxu0 0.0
    %3431 = vmatprep.subr.mxu0 0.0
    %3432 = vmatpush1.msra.mxu0 0.0
    %3433 = vmatprep.subr.mxu0 0.0
    %3434 = vmatpush1.msra.mxu0 0.0
    %3435 = vmatprep.subr.mxu0 0.0
    %3436 = vmatpush1.msra.mxu0 0.0
    %3437 = vmatprep.subr.mxu0 0.0
    %3438 = vmatpush1.msra.mxu0 0.0
    %3439 = vmatprep.subr.mxu0 0.0
    %3440 = vmatpush1.msra.mxu0 0.0
    %3441 = vmatprep.subr.mxu0 0.0
    %3442 = vmatpush1.msra.mxu0 0.0
    %3443 = vmatprep.subr.mxu0 0.0
    %3444 = vmatpush1.msra.mxu0 0.0
    %3445 = vmatprep.subr.mxu0 0.0
    %3446 = vmatpush1.msra.mxu0 0.0
    %3447 = vmatprep.subr.mxu0 0.0
    %3448 = vmatpush1.msra.mxu0 0.0
    %3449 = vmatprep.subr.mxu0 0.0
    %3450 = vmatpush1.msra.mxu0 0.0
    %3451 = vmatprep.subr.mxu0 0.0
    %3452 = vmatpush1.msra.mxu0 0.0
    %3453 = vmatprep.subr.mxu0 0.0
    %3454 = vmatpush1.msra.mxu0 0.0
    %3455 = vmatprep.subr.mxu0 0.0
    %3456 = vmatpush1.msra.mxu0 0.0
    %3457 = vmatprep.mubr.f32.mxu0 0.0
    %3458 = vmatmul.mubr.f32.gmra.mrb[0].mxu0 %v3391
    %v3459 = vpop.f32.mrb[0].mxu0
    %v3460 = vadd.f32 0.0, %v3459
    %v3461 = vpop.f32.mrb[0].mxu0
    %3462 = vdwg.mxu0
    %3463 = vrot.lane.b32.xlu0 %v2466, 64
    %v3464 = vpop.permute.xlu0 %3463
    %v3467 = vsel %vm388, %v3230, 0
    %3469 = vmatprep.subr.mxu0 0.0
    %3470 = vmatpush1.msra.mxu0 %v3464
    %3471 = vmatprep.subr.mxu0 0.0
    %3472 = vmatpush1.msra.mxu0 0.0
    %3473 = vmatprep.subr.mxu0 0.0
    %3474 = vmatpush1.msra.mxu0 0.0
    %3475 = vmatprep.subr.mxu0 0.0
    %3476 = vmatpush1.msra.mxu0 0.0
    %3477 = vmatprep.subr.mxu0 0.0
    %3478 = vmatpush1.msra.mxu0 0.0
    %3479 = vmatprep.subr.mxu0 0.0
    %3480 = vmatpush1.msra.mxu0 0.0
    %3481 = vmatprep.subr.mxu0 0.0
    %3482 = vmatpush1.msra.mxu0 0.0
    %3483 = vmatprep.subr.mxu0 0.0
    %3484 = vmatpush1.msra.mxu0 0.0
    %3485 = vmatprep.subr.mxu0 0.0
    %3486 = vmatpush1.msra.mxu0 0.0
    %3487 = vmatprep.subr.mxu0 0.0
    %3488 = vmatpush1.msra.mxu0 0.0
    %3489 = vmatprep.subr.mxu0 0.0
    %3490 = vmatpush1.msra.mxu0 0.0
    %3491 = vmatprep.subr.mxu0 0.0
    %3492 = vmatpush1.msra.mxu0 0.0
    %3493 = vmatprep.subr.mxu0 0.0
    %3494 = vmatpush1.msra.mxu0 0.0
    %3495 = vmatprep.subr.mxu0 0.0
    %3496 = vmatpush1.msra.mxu0 0.0
    %3497 = vmatprep.subr.mxu0 0.0
    %3498 = vmatpush1.msra.mxu0 0.0
    %3499 = vmatprep.subr.mxu0 0.0
    %3500 = vmatpush1.msra.mxu0 0.0
    %3501 = vmatprep.subr.mxu0 0.0
    %3502 = vmatpush1.msra.mxu0 0.0
    %3503 = vmatprep.subr.mxu0 0.0
    %3504 = vmatpush1.msra.mxu0 0.0
    %3505 = vmatprep.subr.mxu0 0.0
    %3506 = vmatpush1.msra.mxu0 0.0
    %3507 = vmatprep.subr.mxu0 0.0
    %3508 = vmatpush1.msra.mxu0 0.0
    %3509 = vmatprep.subr.mxu0 0.0
    %3510 = vmatpush1.msra.mxu0 0.0
    %3511 = vmatprep.subr.mxu0 0.0
    %3512 = vmatpush1.msra.mxu0 0.0
    %3513 = vmatprep.subr.mxu0 0.0
    %3514 = vmatpush1.msra.mxu0 0.0
    %3515 = vmatprep.subr.mxu0 0.0
    %3516 = vmatpush1.msra.mxu0 0.0
    %3517 = vmatprep.subr.mxu0 0.0
    %3518 = vmatpush1.msra.mxu0 0.0
    %3519 = vmatprep.subr.mxu0 0.0
    %3520 = vmatpush1.msra.mxu0 0.0
    %3521 = vmatprep.subr.mxu0 0.0
    %3522 = vmatpush1.msra.mxu0 0.0
    %3523 = vmatprep.subr.mxu0 0.0
    %3524 = vmatpush1.msra.mxu0 0.0
    %3525 = vmatprep.subr.mxu0 0.0
    %3526 = vmatpush1.msra.mxu0 0.0
    %3527 = vmatprep.subr.mxu0 0.0
    %3528 = vmatpush1.msra.mxu0 0.0
    %3529 = vmatprep.subr.mxu0 0.0
    %3530 = vmatpush1.msra.mxu0 0.0
    %3531 = vmatprep.subr.mxu0 0.0
    %3532 = vmatpush1.msra.mxu0 0.0
    %3533 = vmatprep.mubr.f32.mxu0 0.0
    %3534 = vmatmul.mubr.f32.gmra.mrb[0].mxu0 %v3467
    %v3535 = vpop.f32.mrb[0].mxu0
    %v3536 = vadd.f32 0.0, %v3535
    %v3537 = vpop.f32.mrb[0].mxu0
    %3538 = vdwg.mxu0
    %3539 = vrot.lane.b32.xlu0 %v2468, 64
    %v3540 = vpop.permute.xlu0 %3539
    %v3543 = vsel %vm388, %v3231, 0
    %3545 = vmatprep.subr.mxu0 0.0
    %3546 = vmatpush1.msra.mxu0 %v3540
    %3547 = vmatprep.subr.mxu0 0.0
    %3548 = vmatpush1.msra.mxu0 0.0
    %3549 = vmatprep.subr.mxu0 0.0
    %3550 = vmatpush1.msra.mxu0 0.0
    %3551 = vmatprep.subr.mxu0 0.0
    %3552 = vmatpush1.msra.mxu0 0.0
    %3553 = vmatprep.subr.mxu0 0.0
    %3554 = vmatpush1.msra.mxu0 0.0
    %3555 = vmatprep.subr.mxu0 0.0
    %3556 = vmatpush1.msra.mxu0 0.0
    %3557 = vmatprep.subr.mxu0 0.0
    %3558 = vmatpush1.msra.mxu0 0.0
    %3559 = vmatprep.subr.mxu0 0.0
    %3560 = vmatpush1.msra.mxu0 0.0
    %3561 = vmatprep.subr.mxu0 0.0
    %3562 = vmatpush1.msra.mxu0 0.0
    %3563 = vmatprep.subr.mxu0 0.0
    %3564 = vmatpush1.msra.mxu0 0.0
    %3565 = vmatprep.subr.mxu0 0.0
    %3566 = vmatpush1.msra.mxu0 0.0
    %3567 = vmatprep.subr.mxu0 0.0
    %3568 = vmatpush1.msra.mxu0 0.0
    %3569 = vmatprep.subr.mxu0 0.0
    %3570 = vmatpush1.msra.mxu0 0.0
    %3571 = vmatprep.subr.mxu0 0.0
    %3572 = vmatpush1.msra.mxu0 0.0
    %3573 = vmatprep.subr.mxu0 0.0
    %3574 = vmatpush1.msra.mxu0 0.0
    %3575 = vmatprep.subr.mxu0 0.0
    %3576 = vmatpush1.msra.mxu0 0.0
    %3577 = vmatprep.subr.mxu0 0.0
    %3578 = vmatpush1.msra.mxu0 0.0
    %3579 = vmatprep.subr.mxu0 0.0
    %3580 = vmatpush1.msra.mxu0 0.0
    %3581 = vmatprep.subr.mxu0 0.0
    %3582 = vmatpush1.msra.mxu0 0.0
    %3583 = vmatprep.subr.mxu0 0.0
    %3584 = vmatpush1.msra.mxu0 0.0
    %3585 = vmatprep.subr.mxu0 0.0
    %3586 = vmatpush1.msra.mxu0 0.0
    %3587 = vmatprep.subr.mxu0 0.0
    %3588 = vmatpush1.msra.mxu0 0.0
    %3589 = vmatprep.subr.mxu0 0.0
    %3590 = vmatpush1.msra.mxu0 0.0
    %3591 = vmatprep.subr.mxu0 0.0
    %3592 = vmatpush1.msra.mxu0 0.0
    %3593 = vmatprep.subr.mxu0 0.0
    %3594 = vmatpush1.msra.mxu0 0.0
    %3595 = vmatprep.subr.mxu0 0.0
    %3596 = vmatpush1.msra.mxu0 0.0
    %3597 = vmatprep.subr.mxu0 0.0
    %3598 = vmatpush1.msra.mxu0 0.0
    %3599 = vmatprep.subr.mxu0 0.0
    %3600 = vmatpush1.msra.mxu0 0.0
    %3601 = vmatprep.subr.mxu0 0.0
    %3602 = vmatpush1.msra.mxu0 0.0
    %3603 = vmatprep.subr.mxu0 0.0
    %3604 = vmatpush1.msra.mxu0 0.0
    %3605 = vmatprep.subr.mxu0 0.0
    %3606 = vmatpush1.msra.mxu0 0.0
    %3607 = vmatprep.subr.mxu0 0.0
    %3608 = vmatpush1.msra.mxu0 0.0
    %3609 = vmatprep.mubr.f32.mxu0 0.0
    %3610 = vmatmul.mubr.f32.gmra.mrb[0].mxu0 %v3543
    %v3611 = vpop.f32.mrb[0].mxu0
    %v3612 = vadd.f32 0.0, %v3611
    %v3613 = vpop.f32.mrb[0].mxu0
    %3614 = vdwg.mxu0
    %3615 = vrot.lane.b32.xlu0 %v2470, 64
    %v3616 = vpop.permute.xlu0 %3615
    %v3619 = vsel %vm388, %v3232, 0
    %3621 = vmatprep.subr.mxu0 0.0
    %3622 = vmatpush1.msra.mxu0 %v3616
    %3623 = vmatprep.subr.mxu0 0.0
    %3624 = vmatpush1.msra.mxu0 0.0
    %3625 = vmatprep.subr.mxu0 0.0
    %3626 = vmatpush1.msra.mxu0 0.0
    %3627 = vmatprep.subr.mxu0 0.0
    %3628 = vmatpush1.msra.mxu0 0.0
    %3629 = vmatprep.subr.mxu0 0.0
    %3630 = vmatpush1.msra.mxu0 0.0
    %3631 = vmatprep.subr.mxu0 0.0
    %3632 = vmatpush1.msra.mxu0 0.0
    %3633 = vmatprep.subr.mxu0 0.0
    %3634 = vmatpush1.msra.mxu0 0.0
    %3635 = vmatprep.subr.mxu0 0.0
    %3636 = vmatpush1.msra.mxu0 0.0
    %3637 = vmatprep.subr.mxu0 0.0
    %3638 = vmatpush1.msra.mxu0 0.0
    %3639 = vmatprep.subr.mxu0 0.0
    %3640 = vmatpush1.msra.mxu0 0.0
    %3641 = vmatprep.subr.mxu0 0.0
    %3642 = vmatpush1.msra.mxu0 0.0
    %3643 = vmatprep.subr.mxu0 0.0
    %3644 = vmatpush1.msra.mxu0 0.0
    %3645 = vmatprep.subr.mxu0 0.0
    %3646 = vmatpush1.msra.mxu0 0.0
    %3647 = vmatprep.subr.mxu0 0.0
    %3648 = vmatpush1.msra.mxu0 0.0
    %3649 = vmatprep.subr.mxu0 0.0
    %3650 = vmatpush1.msra.mxu0 0.0
    %3651 = vmatprep.subr.mxu0 0.0
    %3652 = vmatpush1.msra.mxu0 0.0
    %3653 = vmatprep.subr.mxu0 0.0
    %3654 = vmatpush1.msra.mxu0 0.0
    %3655 = vmatprep.subr.mxu0 0.0
    %3656 = vmatpush1.msra.mxu0 0.0
    %3657 = vmatprep.subr.mxu0 0.0
    %3658 = vmatpush1.msra.mxu0 0.0
    %3659 = vmatprep.subr.mxu0 0.0
    %3660 = vmatpush1.msra.mxu0 0.0
    %3661 = vmatprep.subr.mxu0 0.0
    %3662 = vmatpush1.msra.mxu0 0.0
    %3663 = vmatprep.subr.mxu0 0.0
    %3664 = vmatpush1.msra.mxu0 0.0
    %3665 = vmatprep.subr.mxu0 0.0
    %3666 = vmatpush1.msra.mxu0 0.0
    %3667 = vmatprep.subr.mxu0 0.0
    %3668 = vmatpush1.msra.mxu0 0.0
    %3669 = vmatprep.subr.mxu0 0.0
    %3670 = vmatpush1.msra.mxu0 0.0
    %3671 = vmatprep.subr.mxu0 0.0
    %3672 = vmatpush1.msra.mxu0 0.0
    %3673 = vmatprep.subr.mxu0 0.0
    %3674 = vmatpush1.msra.mxu0 0.0
    %3675 = vmatprep.subr.mxu0 0.0
    %3676 = vmatpush1.msra.mxu0 0.0
    %3677 = vmatprep.subr.mxu0 0.0
    %3678 = vmatpush1.msra.mxu0 0.0
    %3679 = vmatprep.subr.mxu0 0.0
    %3680 = vmatpush1.msra.mxu0 0.0
    %3681 = vmatprep.subr.mxu0 0.0
    %3682 = vmatpush1.msra.mxu0 0.0
    %3683 = vmatprep.subr.mxu0 0.0
    %3684 = vmatpush1.msra.mxu0 0.0
    %3685 = vmatprep.mubr.f32.mxu0 0.0
    %3686 = vmatmul.mubr.f32.gmra.mrb[0].mxu0 %v3619
    %v3687 = vpop.f32.mrb[0].mxu0
    %v3688 = vadd.f32 0.0, %v3687
    %v3689 = vpop.f32.mrb[0].mxu0
    %3690 = vdwg.mxu0
    %3691 = vrot.lane.b32.xlu0 %v2472, 64
    %v3692 = vpop.permute.xlu0 %3691
    %v3695 = vsel %vm388, %v3233, 0
    %3697 = vmatprep.subr.mxu0 0.0
    %3698 = vmatpush1.msra.mxu0 %v3692
    %3699 = vmatprep.subr.mxu0 0.0
    %3700 = vmatpush1.msra.mxu0 0.0
    %3701 = vmatprep.subr.mxu0 0.0
    %3702 = vmatpush1.msra.mxu0 0.0
    %3703 = vmatprep.subr.mxu0 0.0
    %3704 = vmatpush1.msra.mxu0 0.0
    %3705 = vmatprep.subr.mxu0 0.0
    %3706 = vmatpush1.msra.mxu0 0.0
    %3707 = vmatprep.subr.mxu0 0.0
    %3708 = vmatpush1.msra.mxu0 0.0
    %3709 = vmatprep.subr.mxu0 0.0
    %3710 = vmatpush1.msra.mxu0 0.0
    %3711 = vmatprep.subr.mxu0 0.0
    %3712 = vmatpush1.msra.mxu0 0.0
    %3713 = vmatprep.subr.mxu0 0.0
    %3714 = vmatpush1.msra.mxu0 0.0
    %3715 = vmatprep.subr.mxu0 0.0
    %3716 = vmatpush1.msra.mxu0 0.0
    %3717 = vmatprep.subr.mxu0 0.0
    %3718 = vmatpush1.msra.mxu0 0.0
    %3719 = vmatprep.subr.mxu0 0.0
    %3720 = vmatpush1.msra.mxu0 0.0
    %3721 = vmatprep.subr.mxu0 0.0
    %3722 = vmatpush1.msra.mxu0 0.0
    %3723 = vmatprep.subr.mxu0 0.0
    %3724 = vmatpush1.msra.mxu0 0.0
    %3725 = vmatprep.subr.mxu0 0.0
    %3726 = vmatpush1.msra.mxu0 0.0
    %3727 = vmatprep.subr.mxu0 0.0
    %3728 = vmatpush1.msra.mxu0 0.0
    %3729 = vmatprep.subr.mxu0 0.0
    %3730 = vmatpush1.msra.mxu0 0.0
    %3731 = vmatprep.subr.mxu0 0.0
    %3732 = vmatpush1.msra.mxu0 0.0
    %3733 = vmatprep.subr.mxu0 0.0
    %3734 = vmatpush1.msra.mxu0 0.0
    %3735 = vmatprep.subr.mxu0 0.0
    %3736 = vmatpush1.msra.mxu0 0.0
    %3737 = vmatprep.subr.mxu0 0.0
    %3738 = vmatpush1.msra.mxu0 0.0
    %3739 = vmatprep.subr.mxu0 0.0
    %3740 = vmatpush1.msra.mxu0 0.0
    %3741 = vmatprep.subr.mxu0 0.0
    %3742 = vmatpush1.msra.mxu0 0.0
    %3743 = vmatprep.subr.mxu0 0.0
    %3744 = vmatpush1.msra.mxu0 0.0
    %3745 = vmatprep.subr.mxu0 0.0
    %3746 = vmatpush1.msra.mxu0 0.0
    %3747 = vmatprep.subr.mxu0 0.0
    %3748 = vmatpush1.msra.mxu0 0.0
    %3749 = vmatprep.subr.mxu0 0.0
    %3750 = vmatpush1.msra.mxu0 0.0
    %3751 = vmatprep.subr.mxu0 0.0
    %3752 = vmatpush1.msra.mxu0 0.0
    %3753 = vmatprep.subr.mxu0 0.0
    %3754 = vmatpush1.msra.mxu0 0.0
    %3755 = vmatprep.subr.mxu0 0.0
    %3756 = vmatpush1.msra.mxu0 0.0
    %3757 = vmatprep.subr.mxu0 0.0
    %3758 = vmatpush1.msra.mxu0 0.0
    %3759 = vmatprep.subr.mxu0 0.0
    %3760 = vmatpush1.msra.mxu0 0.0
    %3761 = vmatprep.mubr.f32.mxu0 0.0
    %3762 = vmatmul.mubr.f32.gmra.mrb[0].mxu0 %v3695
    %v3763 = vpop.f32.mrb[0].mxu0
    %v3764 = vadd.f32 0.0, %v3763
    %v3765 = vpop.f32.mrb[0].mxu0
    %3766 = vdwg.mxu0
    %3767 = vrot.lane.b32.xlu0 %v2474, 64
    %v3768 = vpop.permute.xlu0 %3767
    %v3771 = vsel %vm388, %v3234, 0
    %3773 = vmatprep.subr.mxu0 0.0
    %3774 = vmatpush1.msra.mxu0 %v3768
    %3775 = vmatprep.subr.mxu0 0.0
    %3776 = vmatpush1.msra.mxu0 0.0
    %3777 = vmatprep.subr.mxu0 0.0
    %3778 = vmatpush1.msra.mxu0 0.0
    %3779 = vmatprep.subr.mxu0 0.0
    %3780 = vmatpush1.msra.mxu0 0.0
    %3781 = vmatprep.subr.mxu0 0.0
    %3782 = vmatpush1.msra.mxu0 0.0
    %3783 = vmatprep.subr.mxu0 0.0
    %3784 = vmatpush1.msra.mxu0 0.0
    %3785 = vmatprep.subr.mxu0 0.0
    %3786 = vmatpush1.msra.mxu0 0.0
    %3787 = vmatprep.subr.mxu0 0.0
    %3788 = vmatpush1.msra.mxu0 0.0
    %3789 = vmatprep.subr.mxu0 0.0
    %3790 = vmatpush1.msra.mxu0 0.0
    %3791 = vmatprep.subr.mxu0 0.0
    %3792 = vmatpush1.msra.mxu0 0.0
    %3793 = vmatprep.subr.mxu0 0.0
    %3794 = vmatpush1.msra.mxu0 0.0
    %3795 = vmatprep.subr.mxu0 0.0
    %3796 = vmatpush1.msra.mxu0 0.0
    %3797 = vmatprep.subr.mxu0 0.0
    %3798 = vmatpush1.msra.mxu0 0.0
    %3799 = vmatprep.subr.mxu0 0.0
    %3800 = vmatpush1.msra.mxu0 0.0
    %3801 = vmatprep.subr.mxu0 0.0
    %3802 = vmatpush1.msra.mxu0 0.0
    %3803 = vmatprep.subr.mxu0 0.0
    %3804 = vmatpush1.msra.mxu0 0.0
    %3805 = vmatprep.subr.mxu0 0.0
    %3806 = vmatpush1.msra.mxu0 0.0
    %3807 = vmatprep.subr.mxu0 0.0
    %3808 = vmatpush1.msra.mxu0 0.0
    %3809 = vmatprep.subr.mxu0 0.0
    %3810 = vmatpush1.msra.mxu0 0.0
    %3811 = vmatprep.subr.mxu0 0.0
    %3812 = vmatpush1.msra.mxu0 0.0
    %3813 = vmatprep.subr.mxu0 0.0
    %3814 = vmatpush1.msra.mxu0 0.0
    %3815 = vmatprep.subr.mxu0 0.0
    %3816 = vmatpush1.msra.mxu0 0.0
    %3817 = vmatprep.subr.mxu0 0.0
    %3818 = vmatpush1.msra.mxu0 0.0
    %3819 = vmatprep.subr.mxu0 0.0
    %3820 = vmatpush1.msra.mxu0 0.0
    %3821 = vmatprep.subr.mxu0 0.0
    %3822 = vmatpush1.msra.mxu0 0.0
    %3823 = vmatprep.subr.mxu0 0.0
    %3824 = vmatpush1.msra.mxu0 0.0
    %3825 = vmatprep.subr.mxu0 0.0
    %3826 = vmatpush1.msra.mxu0 0.0
    %3827 = vmatprep.subr.mxu0 0.0
    %3828 = vmatpush1.msra.mxu0 0.0
    %3829 = vmatprep.subr.mxu0 0.0
    %3830 = vmatpush1.msra.mxu0 0.0
    %3831 = vmatprep.subr.mxu0 0.0
    %3832 = vmatpush1.msra.mxu0 0.0
    %3833 = vmatprep.subr.mxu0 0.0
    %3834 = vmatpush1.msra.mxu0 0.0
    %3835 = vmatprep.subr.mxu0 0.0
    %3836 = vmatpush1.msra.mxu0 0.0
    %3837 = vmatprep.mubr.f32.mxu0 0.0
    %3838 = vmatmul.mubr.f32.gmra.mrb[0].mxu0 %v3771
    %v3839 = vpop.f32.mrb[0].mxu0
    %v3840 = vadd.f32 0.0, %v3839
    %v3841 = vpop.f32.mrb[0].mxu0
    %3842 = vdwg.mxu0
    %s3843 = scalar_lea.vmem [#allocation8], 96
    %v3844 = vld [vmem:[%s3843] sm:$0xff]
    %v3845 = vld [vmem:[%s3843 + $0x8] sm:$0xff]
    %v3846 = vld [vmem:[%s3843 + $0x10] sm:$0xff]
    %v3847 = vld [vmem:[%s3843 + $0x18] sm:$0xff]
    %v3849 = vsel %vm388, %v3460, 0
    %v3852 = vsel %vm388, %v3536, 0
    %3854 = vmatprep.subr.mxu0 0.0
    %3855 = vmatpush1.msra.mxu0 %v3845
    %3856 = vmatprep.subr.mxu0 0.0
    %3857 = vmatpush1.msra.mxu0 0.0
    %3858 = vmatprep.subr.mxu0 0.0
    %3859 = vmatpush1.msra.mxu0 0.0
    %3860 = vmatprep.subr.mxu0 0.0
    %3861 = vmatpush1.msra.mxu0 0.0
    %3862 = vmatprep.subr.mxu0 0.0
    %3863 = vmatpush1.msra.mxu0 0.0
    %3864 = vmatprep.subr.mxu0 0.0
    %3865 = vmatpush1.msra.mxu0 0.0
    %3866 = vmatprep.subr.mxu0 0.0
    %3867 = vmatpush1.msra.mxu0 0.0
    %3868 = vmatprep.subr.mxu0 0.0
    %3869 = vmatpush1.msra.mxu0 0.0
    %3870 = vmatprep.subr.mxu0 0.0
    %3871 = vmatpush1.msra.mxu0 0.0
    %3872 = vmatprep.subr.mxu0 0.0
    %3873 = vmatpush1.msra.mxu0 0.0
    %3874 = vmatprep.subr.mxu0 0.0
    %3875 = vmatpush1.msra.mxu0 0.0
    %3876 = vmatprep.subr.mxu0 0.0
    %3877 = vmatpush1.msra.mxu0 0.0
    %3878 = vmatprep.subr.mxu0 0.0
    %3879 = vmatpush1.msra.mxu0 0.0
    %3880 = vmatprep.subr.mxu0 0.0
    %3881 = vmatpush1.msra.mxu0 0.0
    %3882 = vmatprep.subr.mxu0 0.0
    %3883 = vmatpush1.msra.mxu0 0.0
    %3884 = vmatprep.subr.mxu0 0.0
    %3885 = vmatpush1.msra.mxu0 0.0
    %3886 = vmatprep.subr.mxu0 0.0
    %3887 = vmatpush1.msra.mxu0 0.0
    %3888 = vmatprep.subr.mxu0 0.0
    %3889 = vmatpush1.msra.mxu0 0.0
    %3890 = vmatprep.subr.mxu0 0.0
    %3891 = vmatpush1.msra.mxu0 0.0
    %3892 = vmatprep.subr.mxu0 0.0
    %3893 = vmatpush1.msra.mxu0 0.0
    %3894 = vmatprep.subr.mxu0 0.0
    %3895 = vmatpush1.msra.mxu0 0.0
    %3896 = vmatprep.subr.mxu0 0.0
    %3897 = vmatpush1.msra.mxu0 0.0
    %3898 = vmatprep.subr.mxu0 0.0
    %3899 = vmatpush1.msra.mxu0 0.0
    %3900 = vmatprep.subr.mxu0 0.0
    %3901 = vmatpush1.msra.mxu0 0.0
    %3902 = vmatprep.subr.mxu0 0.0
    %3903 = vmatpush1.msra.mxu0 0.0
    %3904 = vmatprep.subr.mxu0 0.0
    %3905 = vmatpush1.msra.mxu0 0.0
    %3906 = vmatprep.subr.mxu0 0.0
    %3907 = vmatpush1.msra.mxu0 0.0
    %3908 = vmatprep.subr.mxu0 0.0
    %3909 = vmatpush1.msra.mxu0 0.0
    %3910 = vmatprep.subr.mxu0 0.0
    %3911 = vmatpush1.msra.mxu0 0.0
    %3912 = vmatprep.subr.mxu0 0.0
    %3913 = vmatpush1.msra.mxu0 0.0
    %3914 = vmatprep.subr.mxu0 0.0
    %3915 = vmatpush1.msra.mxu0 0.0
    %3916 = vmatprep.subr.mxu0 0.0
    %3917 = vmatpush1.msra.mxu0 0.0
    %3918 = vmatprep.mubr.f32.mxu0 0.0
    %3919 = vmatmul.mubr.f32.gmra.mrb[0].mxu0 %v3849
    %v3920 = vpop.f32.mrb[0].mxu0
    %v3921 = vadd.f32 0.0, %v3920
    %v3922 = vpop.f32.mrb[0].mxu0
    %3923 = vmatprep.mubr.f32.mxu0 0.0
    %3924 = vmatmul.mubr.f32.gmra.mrb[0].mxu0 %v3852
    %v3925 = vpop.f32.mrb[0].mxu0
    %v3926 = vadd.f32 0.0, %v3925
    %v3927 = vpop.f32.mrb[0].mxu0
    %3928 = vdwg.mxu0
    %v3930 = vsel %vm388, %v3308, 0
    %v3933 = vsel %vm388, %v3384, 0
    %3935 = vmatprep.subr.mxu0 0.0
    %3936 = vmatpush1.msra.mxu0 %v3844
    %3937 = vmatprep.subr.mxu0 0.0
    %3938 = vmatpush1.msra.mxu0 0.0
    %3939 = vmatprep.subr.mxu0 0.0
    %3940 = vmatpush1.msra.mxu0 0.0
    %3941 = vmatprep.subr.mxu0 0.0
    %3942 = vmatpush1.msra.mxu0 0.0
    %3943 = vmatprep.subr.mxu0 0.0
    %3944 = vmatpush1.msra.mxu0 0.0
    %3945 = vmatprep.subr.mxu0 0.0
    %3946 = vmatpush1.msra.mxu0 0.0
    %3947 = vmatprep.subr.mxu0 0.0
    %3948 = vmatpush1.msra.mxu0 0.0
    %3949 = vmatprep.subr.mxu0 0.0
    %3950 = vmatpush1.msra.mxu0 0.0
    %3951 = vmatprep.subr.mxu0 0.0
    %3952 = vmatpush1.msra.mxu0 0.0
    %3953 = vmatprep.subr.mxu0 0.0
    %3954 = vmatpush1.msra.mxu0 0.0
    %3955 = vmatprep.subr.mxu0 0.0
    %3956 = vmatpush1.msra.mxu0 0.0
    %3957 = vmatprep.subr.mxu0 0.0
    %3958 = vmatpush1.msra.mxu0 0.0
    %3959 = vmatprep.subr.mxu0 0.0
    %3960 = vmatpush1.msra.mxu0 0.0
    %3961 = vmatprep.subr.mxu0 0.0
    %3962 = vmatpush1.msra.mxu0 0.0
    %3963 = vmatprep.subr.mxu0 0.0
    %3964 = vmatpush1.msra.mxu0 0.0
    %3965 = vmatprep.subr.mxu0 0.0
    %3966 = vmatpush1.msra.mxu0 0.0
    %3967 = vmatprep.subr.mxu0 0.0
    %3968 = vmatpush1.msra.mxu0 0.0
    %3969 = vmatprep.subr.mxu0 0.0
    %3970 = vmatpush1.msra.mxu0 0.0
    %3971 = vmatprep.subr.mxu0 0.0
    %3972 = vmatpush1.msra.mxu0 0.0
    %3973 = vmatprep.subr.mxu0 0.0
    %3974 = vmatpush1.msra.mxu0 0.0
    %3975 = vmatprep.subr.mxu0 0.0
    %3976 = vmatpush1.msra.mxu0 0.0
    %3977 = vmatprep.subr.mxu0 0.0
    %3978 = vmatpush1.msra.mxu0 0.0
    %3979 = vmatprep.subr.mxu0 0.0
    %3980 = vmatpush1.msra.mxu0 0.0
    %3981 = vmatprep.subr.mxu0 0.0
    %3982 = vmatpush1.msra.mxu0 0.0
    %3983 = vmatprep.subr.mxu0 0.0
    %3984 = vmatpush1.msra.mxu0 0.0
    %3985 = vmatprep.subr.mxu0 0.0
    %3986 = vmatpush1.msra.mxu0 0.0
    %3987 = vmatprep.subr.mxu0 0.0
    %3988 = vmatpush1.msra.mxu0 0.0
    %3989 = vmatprep.subr.mxu0 0.0
    %3990 = vmatpush1.msra.mxu0 0.0
    %3991 = vmatprep.subr.mxu0 0.0
    %3992 = vmatpush1.msra.mxu0 0.0
    %3993 = vmatprep.subr.mxu0 0.0
    %3994 = vmatpush1.msra.mxu0 0.0
    %3995 = vmatprep.subr.mxu0 0.0
    %3996 = vmatpush1.msra.mxu0 0.0
    %3997 = vmatprep.subr.mxu0 0.0
    %3998 = vmatpush1.msra.mxu0 0.0
    %3999 = vmatprep.mubr.f32.mxu0 0.0
    %4000 = vmatmul.mubr.f32.gmra.mrb[0].mxu0 %v3930
    %v4001 = vpop.f32.mrb[0].mxu0
    %v4002 = vadd.f32 %v3921, %v4001
    %v4003 = vpop.f32.mrb[0].mxu0
    %4004 = vmatprep.mubr.f32.mxu0 0.0
    %4005 = vmatmul.mubr.f32.gmra.mrb[0].mxu0 %v3933
    %v4006 = vpop.f32.mrb[0].mxu0
    %v4007 = vadd.f32 %v3926, %v4006
    %v4008 = vpop.f32.mrb[0].mxu0
    %4009 = vdwg.mxu0
    %v4011 = vsel %vm388, %v3612, 0
    %v4014 = vsel %vm388, %v3688, 0
    %4016 = vmatprep.subr.mxu0 0.0
    %4017 = vmatpush1.msra.mxu0 %v3846
    %4018 = vmatprep.subr.mxu0 0.0
    %4019 = vmatpush1.msra.mxu0 0.0
    %4020 = vmatprep.subr.mxu0 0.0
    %4021 = vmatpush1.msra.mxu0 0.0
    %4022 = vmatprep.subr.mxu0 0.0
    %4023 = vmatpush1.msra.mxu0 0.0
    %4024 = vmatprep.subr.mxu0 0.0
    %4025 = vmatpush1.msra.mxu0 0.0
    %4026 = vmatprep.subr.mxu0 0.0
    %4027 = vmatpush1.msra.mxu0 0.0
    %4028 = vmatprep.subr.mxu0 0.0
    %4029 = vmatpush1.msra.mxu0 0.0
    %4030 = vmatprep.subr.mxu0 0.0
    %4031 = vmatpush1.msra.mxu0 0.0
    %4032 = vmatprep.subr.mxu0 0.0
    %4033 = vmatpush1.msra.mxu0 0.0
    %4034 = vmatprep.subr.mxu0 0.0
    %4035 = vmatpush1.msra.mxu0 0.0
    %4036 = vmatprep.subr.mxu0 0.0
    %4037 = vmatpush1.msra.mxu0 0.0
    %4038 = vmatprep.subr.mxu0 0.0
    %4039 = vmatpush1.msra.mxu0 0.0
    %4040 = vmatprep.subr.mxu0 0.0
    %4041 = vmatpush1.msra.mxu0 0.0
    %4042 = vmatprep.subr.mxu0 0.0
    %4043 = vmatpush1.msra.mxu0 0.0
    %4044 = vmatprep.subr.mxu0 0.0
    %4045 = vmatpush1.msra.mxu0 0.0
    %4046 = vmatprep.subr.mxu0 0.0
    %4047 = vmatpush1.msra.mxu0 0.0
    %4048 = vmatprep.subr.mxu0 0.0
    %4049 = vmatpush1.msra.mxu0 0.0
    %4050 = vmatprep.subr.mxu0 0.0
    %4051 = vmatpush1.msra.mxu0 0.0
    %4052 = vmatprep.subr.mxu0 0.0
    %4053 = vmatpush1.msra.mxu0 0.0
    %4054 = vmatprep.subr.mxu0 0.0
    %4055 = vmatpush1.msra.mxu0 0.0
    %4056 = vmatprep.subr.mxu0 0.0
    %4057 = vmatpush1.msra.mxu0 0.0
    %4058 = vmatprep.subr.mxu0 0.0
    %4059 = vmatpush1.msra.mxu0 0.0
    %4060 = vmatprep.subr.mxu0 0.0
    %4061 = vmatpush1.msra.mxu0 0.0
    %4062 = vmatprep.subr.mxu0 0.0
    %4063 = vmatpush1.msra.mxu0 0.0
    %4064 = vmatprep.subr.mxu0 0.0
    %4065 = vmatpush1.msra.mxu0 0.0
    %4066 = vmatprep.subr.mxu0 0.0
    %4067 = vmatpush1.msra.mxu0 0.0
    %4068 = vmatprep.subr.mxu0 0.0
    %4069 = vmatpush1.msra.mxu0 0.0
    %4070 = vmatprep.subr.mxu0 0.0
    %4071 = vmatpush1.msra.mxu0 0.0
    %4072 = vmatprep.subr.mxu0 0.0
    %4073 = vmatpush1.msra.mxu0 0.0
    %4074 = vmatprep.subr.mxu0 0.0
    %4075 = vmatpush1.msra.mxu0 0.0
    %4076 = vmatprep.subr.mxu0 0.0
    %4077 = vmatpush1.msra.mxu0 0.0
    %4078 = vmatprep.subr.mxu0 0.0
    %4079 = vmatpush1.msra.mxu0 0.0
    %4080 = vmatprep.mubr.f32.mxu0 0.0
    %4081 = vmatmul.mubr.f32.gmra.mrb[0].mxu0 %v4011
    %v4082 = vpop.f32.mrb[0].mxu0
    %v4083 = vadd.f32 0.0, %v4082
    %v4084 = vpop.f32.mrb[0].mxu0
    %4085 = vmatprep.mubr.f32.mxu0 0.0
    %4086 = vmatmul.mubr.f32.gmra.mrb[0].mxu0 %v4014
    %v4087 = vpop.f32.mrb[0].mxu0
    %v4088 = vadd.f32 0.0, %v4087
    %v4089 = vpop.f32.mrb[0].mxu0
    %4090 = vdwg.mxu0
    %v4091 = vadd.f32 %v4002, %v4083
    %v4092 = vadd.f32 %v4007, %v4088
    %v4094 = vsel %vm388, %v3764, 0
    %v4097 = vsel %vm388, %v3840, 0
    %4099 = vmatprep.subr.mxu0 0.0
    %4100 = vmatpush1.msra.mxu0 %v3847
    %4101 = vmatprep.subr.mxu0 0.0
    %4102 = vmatpush1.msra.mxu0 0.0
    %4103 = vmatprep.subr.mxu0 0.0
    %4104 = vmatpush1.msra.mxu0 0.0
    %4105 = vmatprep.subr.mxu0 0.0
    %4106 = vmatpush1.msra.mxu0 0.0
    %4107 = vmatprep.subr.mxu0 0.0
    %4108 = vmatpush1.msra.mxu0 0.0
    %4109 = vmatprep.subr.mxu0 0.0
    %4110 = vmatpush1.msra.mxu0 0.0
    %4111 = vmatprep.subr.mxu0 0.0
    %4112 = vmatpush1.msra.mxu0 0.0
    %4113 = vmatprep.subr.mxu0 0.0
    %4114 = vmatpush1.msra.mxu0 0.0
    %4115 = vmatprep.subr.mxu0 0.0
    %4116 = vmatpush1.msra.mxu0 0.0
    %4117 = vmatprep.subr.mxu0 0.0
    %4118 = vmatpush1.msra.mxu0 0.0
    %4119 = vmatprep.subr.mxu0 0.0
    %4120 = vmatpush1.msra.mxu0 0.0
    %4121 = vmatprep.subr.mxu0 0.0
    %4122 = vmatpush1.msra.mxu0 0.0
    %4123 = vmatprep.subr.mxu0 0.0
    %4124 = vmatpush1.msra.mxu0 0.0
    %4125 = vmatprep.subr.mxu0 0.0
    %4126 = vmatpush1.msra.mxu0 0.0
    %4127 = vmatprep.subr.mxu0 0.0
    %4128 = vmatpush1.msra.mxu0 0.0
    %4129 = vmatprep.subr.mxu0 0.0
    %4130 = vmatpush1.msra.mxu0 0.0
    %4131 = vmatprep.subr.mxu0 0.0
    %4132 = vmatpush1.msra.mxu0 0.0
    %4133 = vmatprep.subr.mxu0 0.0
    %4134 = vmatpush1.msra.mxu0 0.0
    %4135 = vmatprep.subr.mxu0 0.0
    %4136 = vmatpush1.msra.mxu0 0.0
    %4137 = vmatprep.subr.mxu0 0.0
    %4138 = vmatpush1.msra.mxu0 0.0
    %4139 = vmatprep.subr.mxu0 0.0
    %4140 = vmatpush1.msra.mxu0 0.0
    %4141 = vmatprep.subr.mxu0 0.0
    %4142 = vmatpush1.msra.mxu0 0.0
    %4143 = vmatprep.subr.mxu0 0.0
    %4144 = vmatpush1.msra.mxu0 0.0
    %4145 = vmatprep.subr.mxu0 0.0
    %4146 = vmatpush1.msra.mxu0 0.0
    %4147 = vmatprep.subr.mxu0 0.0
    %4148 = vmatpush1.msra.mxu0 0.0
    %4149 = vmatprep.subr.mxu0 0.0
    %4150 = vmatpush1.msra.mxu0 0.0
    %4151 = vmatprep.subr.mxu0 0.0
    %4152 = vmatpush1.msra.mxu0 0.0
    %4153 = vmatprep.subr.mxu0 0.0
    %4154 = vmatpush1.msra.mxu0 0.0
    %4155 = vmatprep.subr.mxu0 0.0
    %4156 = vmatpush1.msra.mxu0 0.0
    %4157 = vmatprep.subr.mxu0 0.0
    %4158 = vmatpush1.msra.mxu0 0.0
    %4159 = vmatprep.subr.mxu0 0.0
    %4160 = vmatpush1.msra.mxu0 0.0
    %4161 = vmatprep.subr.mxu0 0.0
    %4162 = vmatpush1.msra.mxu0 0.0
    %4163 = vmatprep.mubr.f32.mxu0 0.0
    %4164 = vmatmul.mubr.f32.gmra.mrb[0].mxu0 %v4094
    %v4165 = vpop.f32.mrb[0].mxu0
    %v4166 = vadd.f32 0.0, %v4165
    %v4167 = vpop.f32.mrb[0].mxu0
    %4168 = vmatprep.mubr.f32.mxu0 0.0
    %4169 = vmatmul.mubr.f32.gmra.mrb[0].mxu0 %v4097
    %v4170 = vpop.f32.mrb[0].mxu0
    %v4171 = vadd.f32 0.0, %v4170
    %v4172 = vpop.f32.mrb[0].mxu0
    %4173 = vdwg.mxu0
    %v4174 = vadd.f32 %v4091, %v4166
    %v4175 = vadd.f32 %v4092, %v4171
    %v4176 = vld [vmem:[#allocation10 + $0xa] sm:$0x1]
    %v4177 = vlaneseq
    %v4178 = vshrl.u32 %v4177, 7
    %v4179 = vsub.s32 0, %v4178
    %v4180 = vrot.slane %v4176, %v4179
    %v4181 = vadd.f32 %v4174, %v4180
    %v4182 = vadd.f32 %v4175, %v4180
    %v4183 = vadd.f32 %v2368, %v4181
    %v4184 = vadd.f32 %v2369, %v4182
    %v4185 = vld [vmem:[#allocation10 + $0xd] sm:$0x1]
    %v4186 = vld [vmem:[#allocation10 + $0xe] sm:$0x1]
    %v4187 = vsel %vm242, %v4183, 0.0
    %4188 = vadd.xlane.f32.xlu0 %v4187
    %v4189 = vpop.xlane.xlu0 %4188
    %v4190 = vsel %vm242, %v4184, 0.0
    %4191 = vadd.xlane.f32.xlu0 %v4190
    %v4192 = vpop.xlane.xlu0 %4191
    %v4193 = vmul.f32 %v4189, %v249
    %v4194 = vmul.f32 %v4192, %v249
    %v4195 = vsub.f32 %v4183, %v4193
    %v4196 = vsub.f32 %v4184, %v4194
    %v4197 = vmul.f32 %v4195, %v4195
    %v4198 = vmul.f32 %v4196, %v4196
    %v4199 = vsel %vm242, %v4197, 0.0
    %4200 = vadd.xlane.f32.xlu0 %v4199
    %v4201 = vpop.xlane.xlu0 %4200
    %v4202 = vsel %vm242, %v4198, 0.0
    %4203 = vadd.xlane.f32.xlu0 %v4202
    %v4204 = vpop.xlane.xlu0 %4203
    %v4205 = vmul.f32 %v4201, %v249
    %v4206 = vmul.f32 %v4204, %v249
    %v4207 = vadd.f32 %v4205, 1e-05
    %v4208 = vadd.f32 %v4206, 1e-05
    %v4209 = vrsqrt.pop %v4207
    %v4210 = vrsqrt.pop %v4208
    %v4211 = vmul.f32 %v4195, %v4209
    %v4212 = vmul.f32 %v4196, %v4210
    %v4213 = vlaneseq
    %v4214 = vshrl.u32 %v4213, 7
    %v4215 = vsub.s32 0, %v4214
    %v4216 = vrot.slane %v4185, %v4215
    %v4217 = vmul.f32 %v4211, %v4216
    %v4218 = vmul.f32 %v4212, %v4216
    %v4219 = vlaneseq
    %v4220 = vshrl.u32 %v4219, 7
    %v4221 = vsub.s32 0, %v4220
    %v4222 = vrot.slane %v4186, %v4221
    %v4223 = vadd.f32 %v4217, %v4222
    %v4224 = vadd.f32 %v4218, %v4222
    %s4225 = scalar_lea.vmem [#allocation8], 128
    %v4226 = vld [vmem:[%s4225] sm:$0xff]
    %v4227 = vld [vmem:[%s4225 + $0x8] sm:$0xff]
    %v4228 = vld [vmem:[%s4225 + $0x10] sm:$0xff]
    %v4229 = vld [vmem:[%s4225 + $0x18] sm:$0xff]
    %v4230 = vld [vmem:[#allocation10 + $0xb] sm:$0x1]
    %v4231 = vlaneseq
    %v4232 = vshrl.u32 %v4231, 7
    %v4233 = vsub.s32 0, %v4232
    %v4234 = vrot.slane %v4230, %v4233
    %v4236 = vsel %vm242, %v4223, 0
    %v4239 = vsel %vm242, %v4224, 0
    %4241 = vmatprep.subr.mxu0 0.0
    %4242 = vmatpush1.msra.mxu0 %v4226
    %4243 = vmatprep.subr.mxu0 0.0
    %4244 = vmatpush1.msra.mxu0 %v4227
    %4245 = vmatprep.subr.mxu0 0.0
    %4246 = vmatpush1.msra.mxu0 %v4228
    %4247 = vmatprep.subr.mxu0 0.0
    %4248 = vmatpush1.msra.mxu0 %v4229
    %4249 = vmatprep.subr.mxu0 0.0
    %4250 = vmatpush1.msra.mxu0 0.0
    %4251 = vmatprep.subr.mxu0 0.0
    %4252 = vmatpush1.msra.mxu0 0.0
    %4253 = vmatprep.subr.mxu0 0.0
    %4254 = vmatpush1.msra.mxu0 0.0
    %4255 = vmatprep.subr.mxu0 0.0
    %4256 = vmatpush1.msra.mxu0 0.0
    %4257 = vmatprep.subr.mxu0 0.0
    %4258 = vmatpush1.msra.mxu0 0.0
    %4259 = vmatprep.subr.mxu0 0.0
    %4260 = vmatpush1.msra.mxu0 0.0
    %4261 = vmatprep.subr.mxu0 0.0
    %4262 = vmatpush1.msra.mxu0 0.0
    %4263 = vmatprep.subr.mxu0 0.0
    %4264 = vmatpush1.msra.mxu0 0.0
    %4265 = vmatprep.subr.mxu0 0.0
    %4266 = vmatpush1.msra.mxu0 0.0
    %4267 = vmatprep.subr.mxu0 0.0
    %4268 = vmatpush1.msra.mxu0 0.0
    %4269 = vmatprep.subr.mxu0 0.0
    %4270 = vmatpush1.msra.mxu0 0.0
    %4271 = vmatprep.subr.mxu0 0.0
    %4272 = vmatpush1.msra.mxu0 0.0
    %4273 = vmatprep.subr.mxu0 0.0
    %4274 = vmatpush1.msra.mxu0 0.0
    %4275 = vmatprep.subr.mxu0 0.0
    %4276 = vmatpush1.msra.mxu0 0.0
    %4277 = vmatprep.subr.mxu0 0.0
    %4278 = vmatpush1.msra.mxu0 0.0
    %4279 = vmatprep.subr.mxu0 0.0
    %4280 = vmatpush1.msra.mxu0 0.0
    %4281 = vmatprep.subr.mxu0 0.0
    %4282 = vmatpush1.msra.mxu0 0.0
    %4283 = vmatprep.subr.mxu0 0.0
    %4284 = vmatpush1.msra.mxu0 0.0
    %4285 = vmatprep.subr.mxu0 0.0
    %4286 = vmatpush1.msra.mxu0 0.0
    %4287 = vmatprep.subr.mxu0 0.0
    %4288 = vmatpush1.msra.mxu0 0.0
    %4289 = vmatprep.subr.mxu0 0.0
    %4290 = vmatpush1.msra.mxu0 0.0
    %4291 = vmatprep.subr.mxu0 0.0
    %4292 = vmatpush1.msra.mxu0 0.0
    %4293 = vmatprep.subr.mxu0 0.0
    %4294 = vmatpush1.msra.mxu0 0.0
    %4295 = vmatprep.subr.mxu0 0.0
    %4296 = vmatpush1.msra.mxu0 0.0
    %4297 = vmatprep.subr.mxu0 0.0
    %4298 = vmatpush1.msra.mxu0 0.0
    %4299 = vmatprep.subr.mxu0 0.0
    %4300 = vmatpush1.msra.mxu0 0.0
    %4301 = vmatprep.subr.mxu0 0.0
    %4302 = vmatpush1.msra.mxu0 0.0
    %4303 = vmatprep.subr.mxu0 0.0
    %4304 = vmatpush1.msra.mxu0 0.0
    %4305 = vmatprep.mubr.f32.mxu0 0.0
    %4306 = vmatmul.mubr.f32.gmra.mrb[0].mxu0 %v4236
    %v4307 = vpop.f32.mrb[0].mxu0
    %v4308 = vadd.f32 %v4234, %v4307
    %v4309 = vpop.f32.mrb[0].mxu0
    %4310 = vmatprep.mubr.f32.mxu0 0.0
    %4311 = vmatmul.mubr.f32.gmra.mrb[0].mxu0 %v4239
    %v4312 = vpop.f32.mrb[0].mxu0
    %v4313 = vadd.f32 %v4234, %v4312
    %v4314 = vpop.f32.mrb[0].mxu0
    %4315 = vdwg.mxu0
    %v4316 = vmul.f32 %v4308, 0.5
    %v4317 = vmul.f32 %v4313, 0.5
    %v4318 = vmul.f32 %v4308, 0.70710677
    %v4319 = vmul.f32 %v4313, 0.70710677
    %v4320 = verf.f32.pop %v4318
    %v4321 = verf.f32.pop %v4319
    %v4322 = vadd.f32 %v4320, 1.0
    %v4323 = vadd.f32 %v4321, 1.0
    %v4324 = vmul.f32 %v4316, %v4322
    %v4325 = vmul.f32 %v4317, %v4323
    %s4326 = scalar_lea.vmem [#allocation8], 160
    %v4327 = vld [vmem:[%s4326] sm:$0xff]
    %v4328 = vld [vmem:[%s4326 + $0x8] sm:$0xff]
    %v4329 = vld [vmem:[%s4326 + $0x10] sm:$0xff]
    %v4330 = vld [vmem:[%s4326 + $0x18] sm:$0xff]
    %v4331 = vld [vmem:[#allocation10 + $0xc] sm:$0x1]
    %v4332 = vlaneseq
    %v4333 = vshrl.u32 %v4332, 7
    %v4334 = vsub.s32 0, %v4333
    %v4335 = vrot.slane %v4331, %v4334
    %v4337 = vsel %vm242, %v4324, 0
    %v4340 = vsel %vm242, %v4325, 0
    %4342 = vmatprep.subr.mxu0 0.0
    %4343 = vmatpush1.msra.mxu0 %v4327
    %4344 = vmatprep.subr.mxu0 0.0
    %4345 = vmatpush1.msra.mxu0 %v4328
    %4346 = vmatprep.subr.mxu0 0.0
    %4347 = vmatpush1.msra.mxu0 %v4329
    %4348 = vmatprep.subr.mxu0 0.0
    %4349 = vmatpush1.msra.mxu0 %v4330
    %4350 = vmatprep.subr.mxu0 0.0
    %4351 = vmatpush1.msra.mxu0 0.0
    %4352 = vmatprep.subr.mxu0 0.0
    %4353 = vmatpush1.msra.mxu0 0.0
    %4354 = vmatprep.subr.mxu0 0.0
    %4355 = vmatpush1.msra.mxu0 0.0
    %4356 = vmatprep.subr.mxu0 0.0
    %4357 = vmatpush1.msra.mxu0 0.0
    %4358 = vmatprep.subr.mxu0 0.0
    %4359 = vmatpush1.msra.mxu0 0.0
    %4360 = vmatprep.subr.mxu0 0.0
    %4361 = vmatpush1.msra.mxu0 0.0
    %4362 = vmatprep.subr.mxu0 0.0
    %4363 = vmatpush1.msra.mxu0 0.0
    %4364 = vmatprep.subr.mxu0 0.0
    %4365 = vmatpush1.msra.mxu0 0.0
    %4366 = vmatprep.subr.mxu0 0.0
    %4367 = vmatpush1.msra.mxu0 0.0
    %4368 = vmatprep.subr.mxu0 0.0
    %4369 = vmatpush1.msra.mxu0 0.0
    %4370 = vmatprep.subr.mxu0 0.0
    %4371 = vmatpush1.msra.mxu0 0.0
    %4372 = vmatprep.subr.mxu0 0.0
    %4373 = vmatpush1.msra.mxu0 0.0
    %4374 = vmatprep.subr.mxu0 0.0
    %4375 = vmatpush1.msra.mxu0 0.0
    %4376 = vmatprep.subr.mxu0 0.0
    %4377 = vmatpush1.msra.mxu0 0.0
    %4378 = vmatprep.subr.mxu0 0.0
    %4379 = vmatpush1.msra.mxu0 0.0
    %4380 = vmatprep.subr.mxu0 0.0
    %4381 = vmatpush1.msra.mxu0 0.0
    %4382 = vmatprep.subr.mxu0 0.0
    %4383 = vmatpush1.msra.mxu0 0.0
    %4384 = vmatprep.subr.mxu0 0.0
    %4385 = vmatpush1.msra.mxu0 0.0
    %4386 = vmatprep.subr.mxu0 0.0
    %4387 = vmatpush1.msra.mxu0 0.0
    %4388 = vmatprep.subr.mxu0 0.0
    %4389 = vmatpush1.msra.mxu0 0.0
    %4390 = vmatprep.subr.mxu0 0.0
    %4391 = vmatpush1.msra.mxu0 0.0
    %4392 = vmatprep.subr.mxu0 0.0
    %4393 = vmatpush1.msra.mxu0 0.0
    %4394 = vmatprep.subr.mxu0 0.0
    %4395 = vmatpush1.msra.mxu0 0.0
    %4396 = vmatprep.subr.mxu0 0.0
    %4397 = vmatpush1.msra.mxu0 0.0
    %4398 = vmatprep.subr.mxu0 0.0
    %4399 = vmatpush1.msra.mxu0 0.0
    %4400 = vmatprep.subr.mxu0 0.0
    %4401 = vmatpush1.msra.mxu0 0.0
    %4402 = vmatprep.subr.mxu0 0.0
    %4403 = vmatpush1.msra.mxu0 0.0
    %4404 = vmatprep.subr.mxu0 0.0
    %4405 = vmatpush1.msra.mxu0 0.0
    %4406 = vmatprep.mubr.f32.mxu0 0.0
    %4407 = vmatmul.mubr.f32.gmra.mrb[0].mxu0 %v4337
    %v4408 = vpop.f32.mrb[0].mxu0
    %v4409 = vadd.f32 %v4335, %v4408
    %v4410 = vpop.f32.mrb[0].mxu0
    %4411 = vmatprep.mubr.f32.mxu0 0.0
    %4412 = vmatmul.mubr.f32.gmra.mrb[0].mxu0 %v4340
    %v4413 = vpop.f32.mrb[0].mxu0
    %v4414 = vadd.f32 %v4335, %v4413
    %v4415 = vpop.f32.mrb[0].mxu0
    %4416 = vdwg.mxu0
    %v4417 = vadd.f32 %v4223, %v4409
    %v4418 = vadd.f32 %v4224, %v4414
    %v4419 = vld [vmem:[#allocation10 + $0xf] sm:$0x1]
    %v4420 = vld [vmem:[#allocation10 + $0x10] sm:$0x1]
    %v4421 = vsel %vm242, %v4417, 0.0
    %4422 = vadd.xlane.f32.xlu0 %v4421
    %v4423 = vpop.xlane.xlu0 %4422
    %v4424 = vsel %vm242, %v4418, 0.0
    %4425 = vadd.xlane.f32.xlu0 %v4424
    %v4426 = vpop.xlane.xlu0 %4425
    %v4427 = vmul.f32 %v4423, %v249
    %v4428 = vmul.f32 %v4426, %v249
    %v4429 = vsub.f32 %v4417, %v4427
    %v4430 = vsub.f32 %v4418, %v4428
    %v4431 = vmul.f32 %v4429, %v4429
    %v4432 = vmul.f32 %v4430, %v4430
    %v4433 = vsel %vm242, %v4431, 0.0
    %4434 = vadd.xlane.f32.xlu0 %v4433
    %v4435 = vpop.xlane.xlu0 %4434
    %v4436 = vsel %vm242, %v4432, 0.0
    %4437 = vadd.xlane.f32.xlu0 %v4436
    %v4438 = vpop.xlane.xlu0 %4437
    %v4439 = vmul.f32 %v4435, %v249
    %v4440 = vmul.f32 %v4438, %v249
    %v4441 = vadd.f32 %v4439, 1e-05
    %v4442 = vadd.f32 %v4440, 1e-05
    %v4443 = vrsqrt.pop %v4441
    %v4444 = vrsqrt.pop %v4442
    %v4445 = vmul.f32 %v4429, %v4443
    %v4446 = vmul.f32 %v4430, %v4444
    %v4447 = vlaneseq
    %v4448 = vshrl.u32 %v4447, 7
    %v4449 = vsub.s32 0, %v4448
    %v4450 = vrot.slane %v4419, %v4449
    %v4451 = vmul.f32 %v4445, %v4450
    %v4452 = vmul.f32 %v4446, %v4450
    %v4453 = vlaneseq
    %v4454 = vshrl.u32 %v4453, 7
    %v4455 = vsub.s32 0, %v4454
    %v4456 = vrot.slane %v4420, %v4455
    %v4457 = vadd.f32 %v4451, %v4456
    %v4458 = vadd.f32 %v4452, %v4456
    %4459 = vst.msk [vmem:[#allocation12] sm:$0xff] %vm242, %v4457
    %4460 = vst.msk [vmem:[#allocation12 + $0x8] sm:$0xff] %vm242, %v4458
    %s4461 = scalar_lea.vmem [#allocation8], 192
    %v4462 = vld [vmem:[%s4461] sm:$0xff]
    %v4463 = vld [vmem:[%s4461 + $0x8] sm:$0xff]
    %v4464 = vld [vmem:[%s4461 + $0x10] sm:$0xff]
    %v4465 = vld [vmem:[%s4461 + $0x18] sm:$0xff]
    %v4466 = vld [vmem:[#allocation10 + $0x11] sm:$0x1]
    %v4467 = vlaneseq
    %v4468 = vshrl.u32 %v4467, 7
    %v4469 = vsub.s32 0, %v4468
    %v4470 = vrot.slane %v4466, %v4469
    %v4472 = vsel %vm242, %v4457, 0
    %v4475 = vsel %vm242, %v4458, 0
    %4477 = vmatprep.subr.mxu0 0.0
    %4478 = vmatpush1.msra.mxu0 %v4462
    %4479 = vmatprep.subr.mxu0 0.0
    %4480 = vmatpush1.msra.mxu0 %v4463
    %4481 = vmatprep.subr.mxu0 0.0
    %4482 = vmatpush1.msra.mxu0 %v4464
    %4483 = vmatprep.subr.mxu0 0.0
    %4484 = vmatpush1.msra.mxu0 %v4465
    %4485 = vmatprep.subr.mxu0 0.0
    %4486 = vmatpush1.msra.mxu0 0.0
    %4487 = vmatprep.subr.mxu0 0.0
    %4488 = vmatpush1.msra.mxu0 0.0
    %4489 = vmatprep.subr.mxu0 0.0
    %4490 = vmatpush1.msra.mxu0 0.0
    %4491 = vmatprep.subr.mxu0 0.0
    %4492 = vmatpush1.msra.mxu0 0.0
    %4493 = vmatprep.subr.mxu0 0.0
    %4494 = vmatpush1.msra.mxu0 0.0
    %4495 = vmatprep.subr.mxu0 0.0
    %4496 = vmatpush1.msra.mxu0 0.0
    %4497 = vmatprep.subr.mxu0 0.0
    %4498 = vmatpush1.msra.mxu0 0.0
    %4499 = vmatprep.subr.mxu0 0.0
    %4500 = vmatpush1.msra.mxu0 0.0
    %4501 = vmatprep.subr.mxu0 0.0
    %4502 = vmatpush1.msra.mxu0 0.0
    %4503 = vmatprep.subr.mxu0 0.0
    %4504 = vmatpush1.msra.mxu0 0.0
    %4505 = vmatprep.subr.mxu0 0.0
    %4506 = vmatpush1.msra.mxu0 0.0
    %4507 = vmatprep.subr.mxu0 0.0
    %4508 = vmatpush1.msra.mxu0 0.0
    %4509 = vmatprep.subr.mxu0 0.0
    %4510 = vmatpush1.msra.mxu0 0.0
    %4511 = vmatprep.subr.mxu0 0.0
    %4512 = vmatpush1.msra.mxu0 0.0
    %4513 = vmatprep.subr.mxu0 0.0
    %4514 = vmatpush1.msra.mxu0 0.0
    %4515 = vmatprep.subr.mxu0 0.0
    %4516 = vmatpush1.msra.mxu0 0.0
    %4517 = vmatprep.subr.mxu0 0.0
    %4518 = vmatpush1.msra.mxu0 0.0
    %4519 = vmatprep.subr.mxu0 0.0
    %4520 = vmatpush1.msra.mxu0 0.0
    %4521 = vmatprep.subr.mxu0 0.0
    %4522 = vmatpush1.msra.mxu0 0.0
    %4523 = vmatprep.subr.mxu0 0.0
    %4524 = vmatpush1.msra.mxu0 0.0
    %4525 = vmatprep.subr.mxu0 0.0
    %4526 = vmatpush1.msra.mxu0 0.0
    %4527 = vmatprep.subr.mxu0 0.0
    %4528 = vmatpush1.msra.mxu0 0.0
    %4529 = vmatprep.subr.mxu0 0.0
    %4530 = vmatpush1.msra.mxu0 0.0
    %4531 = vmatprep.subr.mxu0 0.0
    %4532 = vmatpush1.msra.mxu0 0.0
    %4533 = vmatprep.subr.mxu0 0.0
    %4534 = vmatpush1.msra.mxu0 0.0
    %4535 = vmatprep.subr.mxu0 0.0
    %4536 = vmatpush1.msra.mxu0 0.0
    %4537 = vmatprep.subr.mxu0 0.0
    %4538 = vmatpush1.msra.mxu0 0.0
    %4539 = vmatprep.subr.mxu0 0.0
    %4540 = vmatpush1.msra.mxu0 0.0
    %4541 = vmatprep.mubr.f32.mxu0 0.0
    %4542 = vmatmul.mubr.f32.gmra.mrb[0].mxu0 %v4472
    %v4543 = vpop.f32.mrb[0].mxu0
    %v4544 = vadd.f32 %v4470, %v4543
    %v4545 = vpop.f32.mrb[0].mxu0
    %4546 = vmatprep.mubr.f32.mxu0 0.0
    %4547 = vmatmul.mubr.f32.gmra.mrb[0].mxu0 %v4475
    %v4548 = vpop.f32.mrb[0].mxu0
    %v4549 = vadd.f32 %v4470, %v4548
    %v4550 = vpop.f32.mrb[0].mxu0
    %4551 = vdwg.mxu0
    %v4552 = vmul.f32 %v4544, 0.5
    %v4553 = vmul.f32 %v4549, 0.5
    %v4554 = vmul.f32 %v4544, 0.70710677
    %v4555 = vmul.f32 %v4549, 0.70710677
    %v4556 = verf.f32.pop %v4554
    %v4557 = verf.f32.pop %v4555
    %v4558 = vadd.f32 %v4556, 1.0
    %v4559 = vadd.f32 %v4557, 1.0
    %v4560 = vmul.f32 %v4552, %v4558
    %v4561 = vmul.f32 %v4553, %v4559
    %v4562 = vld [vmem:[#allocation10 + $0x12] sm:$0x1]
    %v4563 = vld [vmem:[#allocation10 + $0x13] sm:$0x1]
    %v4564 = vsel %vm242, %v4560, 0.0
    %4565 = vadd.xlane.f32.xlu0 %v4564
    %v4566 = vpop.xlane.xlu0 %4565
    %v4567 = vsel %vm242, %v4561, 0.0
    %4568 = vadd.xlane.f32.xlu0 %v4567
    %v4569 = vpop.xlane.xlu0 %4568
    %v4570 = vmul.f32 %v4566, %v249
    %v4571 = vmul.f32 %v4569, %v249
    %v4572 = vsub.f32 %v4560, %v4570
    %v4573 = vsub.f32 %v4561, %v4571
    %v4574 = vmul.f32 %v4572, %v4572
    %v4575 = vmul.f32 %v4573, %v4573
    %v4576 = vsel %vm242, %v4574, 0.0
    %4577 = vadd.xlane.f32.xlu0 %v4576
    %v4578 = vpop.xlane.xlu0 %4577
    %v4579 = vsel %vm242, %v4575, 0.0
    %4580 = vadd.xlane.f32.xlu0 %v4579
    %v4581 = vpop.xlane.xlu0 %4580
    %v4582 = vmul.f32 %v4578, %v249
    %v4583 = vmul.f32 %v4581, %v249
    %v4584 = vadd.f32 %v4582, 1e-05
    %v4585 = vadd.f32 %v4583, 1e-05
    %v4586 = vrsqrt.pop %v4584
    %v4587 = vrsqrt.pop %v4585
    %v4588 = vmul.f32 %v4572, %v4586
    %v4589 = vmul.f32 %v4573, %v4587
    %v4590 = vlaneseq
    %v4591 = vshrl.u32 %v4590, 7
    %v4592 = vsub.s32 0, %v4591
    %v4593 = vrot.slane %v4562, %v4592
    %v4594 = vmul.f32 %v4588, %v4593
    %v4595 = vmul.f32 %v4589, %v4593
    %v4596 = vlaneseq
    %v4597 = vshrl.u32 %v4596, 7
    %v4598 = vsub.s32 0, %v4597
    %v4599 = vrot.slane %v4563, %v4598
    %v4600 = vadd.f32 %v4594, %v4599
    %v4601 = vadd.f32 %v4595, %v4599
    %v4602 = vld [vmem:[#allocation10 + $0x14] sm:$0x1]
    %v4603 = vld [vmem:[#allocation10 + $0x15] sm:$0x1]
    %v4604 = vlaneseq
    %v4605 = vshrl.u32 %v4604, 7
    %v4606 = vsub.s32 0, %v4605
    %v4607 = vrot.slane %v4602, %v4606
    %v4608 = vmul.f32 %v4600, %v4607
    %v4609 = vmul.f32 %v4601, %v4607
    %v4610 = vsel %vm242, %v4608, 0.0
    %4611 = vadd.xlane.f32.xlu0 %v4610
    %v4612 = vpop.xlane.xlu0 %4611
    %v4613 = vsel %vm242, %v4609, 0.0
    %4614 = vadd.xlane.f32.xlu0 %v4613
    %v4615 = vpop.xlane.xlu0 %4614
    %s4617 = vtos %v4603
    %v4618 = vstv %s4617
    %v4620 = vadd.f32 %v4612, %v4618
    %v4621 = vadd.f32 %v4615, %v4618
    %v4624 = vlaneseq
    %v4625 = vand.u32 %v4624, 127
    %v4626 = vlaneseq
    %v4627 = vshrl.u32 %v4626, 7
    %v4628 = vsub.s32 %v4625, %v4627
    %v4629 = vrot.slane %v4620, %v4628
    %v4630 = vlaneseq
    %v4631 = vshrl.u32 %v4630, 7
    %v4632 = vsub.s32 %v4625, %v4631
    %v4633 = vrot.slane %v4621, %v4632
    %vm4634 = vcmask 1041409
    %v4635 = vsel %vm4634, %v4633, %v4629
    %vm4637 = vcmask 58368
    %4638 = vst.msk [vmem:[#allocation11] sm:$0x3] %vm4637, %v4635
    // Predicated region
    $region50: #{tpu_custom_call.1} parent=1 // pred_check
      _
    $region51: #{tpu_custom_call.1} parent=1 // pred_check_branch
      %4640 = sbr.rel (0) target = $region53
    $region52: #{tpu_custom_call.1} parent=1 // pred_region
      %s4642 = ssub.s32 32, 32
      %4643 = vsyncadd [#allocation4], %s4642
      %s4645 = sshll.u32 [#allocation11], 4
      %s4646 = int_to_ptr.vmem [resolvable:$true] %s4645
      %4648 = dma.vmem_to_hbm [thread:$0]  %s4646, 32, %s7, [#allocation4]
    $region53: #{tpu_custom_call.1} parent=1 // pred_fallthru
      _
    // Predicated region
    $region54: #{tpu_custom_call.1} parent=1 // pred_check
      _
    $region55: #{tpu_custom_call.1} parent=1 // pred_check_branch
      %4650 = sbr.rel (0) target = $region57
    $region56: #{tpu_custom_call.1} parent=1 // pred_region
      %s4652 = ssub.s32 256, 256
      %4653 = vsyncadd [#allocation13], %s4652
      %s4654 = sshll.u32 [#allocation12], 4
      %s4655 = int_to_ptr.vmem [resolvable:$true] %s4654
      %4660 = dma.vmem_to_hbm [thread:$0]  %s4655, 256, %s8, [#allocation13], 128, 128, 8
    $region57: #{tpu_custom_call.1} parent=1 // pred_fallthru
      _
    // Predicated region
    $region58: #{tpu_custom_call.1} parent=1 // pred_check
      _
    $region59: #{tpu_custom_call.1} parent=1 // pred_check_branch
      %4662 = sbr.rel (0) target = $region61
    $region60: #{tpu_custom_call.1} parent=1 // pred_region
      %4663 = dma.done [#allocation4], 32
    $region61: #{tpu_custom_call.1} parent=1 // pred_fallthru
      _
    // Predicated region
    $region62: #{tpu_custom_call.1} parent=1 // pred_check
      _
    $region63: #{tpu_custom_call.1} parent=1 // pred_check_branch
      %4665 = sbr.rel (0) target = $region65
    $region64: #{tpu_custom_call.1} parent=1 // pred_region
      %4666 = dma.done [#allocation13], 256
    $region65: #{tpu_custom_call.1} parent=1 // pred_fallthru
      _
    %4667 = vsyncpa [#allocation3], 1
    %4668 = vsyncpa [#allocation6], 1
    %4669 = vsyncpa [#allocation9], 1
    %4670 = vsyncpa [#allocation4], 1
    %4671 = vsyncpa [#allocation13], 1

</llo_original>
